<compile_context>
chip_gen: v7x
topology: tpu7x:2x2x1
jax: 0.10.0
libtpu: 0.0.40
codegen_flags: <defaults>
</compile_context>

<pallas_src>
import jax
import jax.numpy as jnp
from jax.experimental import pallas as pl
from jax.experimental.pallas import tpu as pltpu


def discriminator_kernel(x_ref, w1_ref, b1_ref, w2_ref, b2_ref, w3_ref, b3_ref,
                         out_ref):
    """Fused MLP forward for one (TILE_B, D_in) batch tile.

    x_ref : (TILE_B, D_in) f32      (cast to bf16 in-kernel for the MXU)
    w1_ref: (D_in, H) bf16          b1_ref: (1, H) f32
    w2_ref: (H, H)    bf16          b2_ref: (1, H) f32
    w3_ref: (1, H)    f32           b3_ref: (1,)   f32  (SMEM scalar)
    out_ref: (1, 1, TILE_B) f32     (lane-dense row per grid step)
    """
    x = x_ref[...].astype(jnp.bfloat16)

    # Layer 1: bf16 MXU matmul, f32 accumulate; bias + LeakyReLU(0.2) in f32.
    # max(h, 0.2*h) == LeakyReLU for slope < 1.
    h1 = jnp.dot(x, w1_ref[...], preferred_element_type=jnp.float32) + b1_ref[...]
    h1 = jnp.maximum(h1, 0.2 * h1)

    # Layer 2: same recipe.
    h2 = jnp.dot(h1.astype(jnp.bfloat16), w2_ref[...],
                 preferred_element_type=jnp.float32) + b2_ref[...]
    h2 = jnp.maximum(h2, 0.2 * h2)

    # Layer 3 (out_features=1): an N=1 MXU push would waste all but one output
    # lane, so do VPU mul + XLU lane reduction with w3 kept lane-dense (1, H).
    logits = jnp.sum(h2 * w3_ref[...], axis=-1, keepdims=True) + b3_ref[0]

    # Numerically stable sigmoid (exp rides the EUP slot; exact reciprocal).
    z = jnp.exp(-jnp.abs(logits))                 # in (0, 1], never overflows
    inv = pl.reciprocal(1.0 + z)
    sig = jnp.where(logits >= 0, inv, z * inv)    # (TILE_B, 1)

    # Lane-dense store: transpose the thin column to a (1, TILE_B) row (XLU has
    # slack here) so the writeback DMA is unmasked full-width stores.
    out_ref[0] = jnp.transpose(sig)


def _pick_tile_b(batch8):
    """batch8 is the batch rounded up to a multiple of 8.

    Large tiles amortize the ~0.35us/grid-step overhead; keep >=2 grid steps
    and prefer an even step count so v7x's two TensorCores stay balanced
    (harmless on single-TC v5e/v6e).
    """
    fallback = None
    for tile in (2048, 1024, 512, 256, 128, 64, 32, 16, 8):
        if batch8 % tile != 0:
            continue
        steps = batch8 // tile
        if steps < 2:
            continue
        if steps % 2 == 0:
            return tile
        if fallback is None:
            fallback = tile
    return fallback if fallback is not None else batch8   # single block


def discriminator_forward(x, params, *, tile_b=None):
    """x: (B, input_dim) float32 -> (B, 1) float32."""
    w1, b1, w2, b2, w3, b3 = params
    batch, d_in = x.shape
    hidden = w1.shape[1]

    # Pad batch to a sublane multiple, then to a tile multiple; padded rows are
    # sliced off after the call, so arbitrary batch sizes work.
    batch8 = -(-batch // 8) * 8
    if tile_b is None:
        tile_b = _pick_tile_b(batch8)
    padded = -(-batch8 // tile_b) * tile_b
    if padded != batch:
        x = jnp.pad(x, ((0, padded - batch), (0, 0)))
    steps = padded // tile_b

    # Weights/biases: full-array blocks with constant index_maps -> loaded once
    # and VMEM-resident across the whole grid.
    def resident(a):
        nd = a.ndim
        return pl.BlockSpec(a.shape, lambda i, _nd=nd: (0,) * _nd)

    flops = 2 * padded * (d_in * hidden + hidden * hidden + hidden)
    bytes_accessed = (padded * d_in * 4            # x (f32)
                      + d_in * hidden * 2          # w1 (bf16)
                      + hidden * hidden * 2        # w2 (bf16)
                      + 2 * hidden * 4             # b1, b2
                      + hidden * 4 + 4             # w3, b3
                      + padded * 4)                # out
    cost = pl.CostEstimate(flops=flops, transcendentals=padded,
                           bytes_accessed=bytes_accessed)

    out3 = pl.pallas_call(
        discriminator_kernel,
        out_shape=jax.ShapeDtypeStruct((steps, 1, tile_b), jnp.float32),
        grid=(steps,),
        in_specs=[
            pl.BlockSpec((tile_b, d_in), lambda i: (i, 0)),   # x: batch-tiled
            resident(w1), resident(b1),
            resident(w2), resident(b2),
            resident(w3),
            # b3 is a single scalar -> SMEM, not a padded (8,128) VMEM tile.
            pl.BlockSpec(memory_space=pltpu.MemorySpace.SMEM),
        ],
        # Lane-dense output: one (1, tile_b) row per grid step.
        out_specs=pl.BlockSpec((1, 1, tile_b), lambda i: (i, 0, 0)),
        compiler_params=pltpu.CompilerParams(
            # Batch tiles are independent -> megacore-shard on v7x (2 TCs),
            # no-op on single-TC v5e/v6e.
            dimension_semantics=("parallel",),
            vmem_limit_bytes=32 * 1024 * 1024,
        ),
        cost_estimate=cost,
    )(x, w1, b1, w2, b2, w3, b3)

    return out3.reshape(padded, 1)[:batch]


def init_discriminator_params(key, input_dim, hidden_dim):
    """Deterministic init mimicking nn.Linear's uniform(+/- 1/sqrt(fan_in)).

    w1/w2 are stored transposed to (in_features, out_features) and in bf16 (the
    MXU-native dtype); biases stay f32.  w3 keeps PyTorch's (1, hidden_dim)
    layout because the kernel consumes it lane-dense; b3 is a (1,) f32 scalar.
    """
    keys = jax.random.split(key, 6)

    def linear(kw, kb, fan_in, fan_out, w_shape, w_dtype):
        bound = 1.0 / jnp.sqrt(jnp.float32(fan_in))
        w = jax.random.uniform(kw, w_shape, jnp.float32, -bound, bound)
        b = jax.random.uniform(kb, (fan_out,), jnp.float32, -bound, bound)
        return w.astype(w_dtype), b

    w1, b1 = linear(keys[0], keys[1], input_dim, hidden_dim,
                    (input_dim, hidden_dim), jnp.bfloat16)
    w2, b2 = linear(keys[2], keys[3], hidden_dim, hidden_dim,
                    (hidden_dim, hidden_dim), jnp.bfloat16)
    w3, b3 = linear(keys[4], keys[5], hidden_dim, 1,
                    (1, hidden_dim), jnp.float32)
    return (w1, b1.reshape(1, hidden_dim), w2, b2.reshape(1, hidden_dim),
            w3, b3.reshape(1))


def reference_forward_matched(x, params):
    """Plain-JAX reference matching the kernel's dtypes (bf16 matmul inputs,
    f32 accumulation/epilogue) -- tight-tolerance check."""
    w1, b1, w2, b2, w3, b3 = params

    def bdot(a, w):
        return jnp.dot(a.astype(jnp.bfloat16), w,
                       preferred_element_type=jnp.float32)

    h = jax.nn.leaky_relu(bdot(x, w1) + b1, 0.2)
    h = jax.nn.leaky_relu(bdot(h, w2) + b2, 0.2)
    logits = jnp.sum(h * w3, axis=-1, keepdims=True) + b3
    return jax.nn.sigmoid(logits)


def reference_forward_f32(x, params):
    """Full-f32 reference (module semantics; bf16 weights upcast) -- loose
    check bounding the bf16-activation error."""
    w1, b1, w2, b2, w3, b3 = params
    h = jax.nn.leaky_relu(x @ w1.astype(jnp.float32) + b1, 0.2)
    h = jax.nn.leaky_relu(h @ w2.astype(jnp.float32) + b2, 0.2)
    return jax.nn.sigmoid(h @ w3.T + b3)


if __name__ == "__main__":
    # Small shapes consistent with the MLP discriminator: hidden_dim=256 per the
    # module; input_dim kept at 256 for the demo (MNIST's 784 also works since
    # the input block spans the full feature dim).  batch=1024 -> 2 grid steps
    # of 512 rows (even step count keeps both v7x TCs busy).
    batch = 1024
    input_dim = 256
    hidden_dim = 256

    key = jax.random.PRNGKey(0)
    k_x, k_p = jax.random.split(key)

    x = jax.random.normal(k_x, (batch, input_dim), dtype=jnp.float32)
    params = init_discriminator_params(k_p, input_dim, hidden_dim)

    out = jax.block_until_ready(discriminator_forward(x, params))
    assert out.shape == (batch, 1)

    ref_tight = reference_forward_matched(x, params)
    ref_f32 = reference_forward_f32(x, params)
    err_tight = float(jnp.max(jnp.abs(out - ref_tight)))
    err_f32 = float(jnp.max(jnp.abs(out - ref_f32)))
    assert err_tight < 1e-4, err_tight   # same-dtype math should match closely
    assert err_f32 < 5e-2, err_f32       # bf16-activation error bound on sigmoid

    print("KERNEL_OK")
</pallas_src>

<mosaic_0001>
module attributes {stable_mosaic.version = 11 : i64} {
  func.func @discriminator_kernel(%arg0: i32, %arg1: memref<512x256xf32, #tpu.memory_space<vmem>>, %arg2: memref<256x256xbf16, #tpu.memory_space<vmem>>, %arg3: memref<1x256xf32, #tpu.memory_space<vmem>>, %arg4: memref<256x256xbf16, #tpu.memory_space<vmem>>, %arg5: memref<1x256xf32, #tpu.memory_space<vmem>>, %arg6: memref<1x256xf32, #tpu.memory_space<vmem>>, %arg7: memref<1xf32, #tpu.memory_space<smem>>, %arg8: memref<1x1x512xf32, #tpu.memory_space<vmem>>) attributes {dimension_semantics = [#tpu.dimension_semantics<parallel>], iteration_bounds = array<i64: 2>, scalar_prefetch = 0 : i64, scratch_operands = 0 : i64, tpu.core_type = #tpu.core_type<tc>, window_params = [{transform_indices = @transform_0, window_bounds = array<i64: 512, 256>}, {pipeline_mode = #tpu.pipeline_mode<synchronous>, transform_indices = @transform_1, window_bounds = array<i64: 256, 256>}, {pipeline_mode = #tpu.pipeline_mode<synchronous>, transform_indices = @transform_2, window_bounds = array<i64: 1, 256>}, {pipeline_mode = #tpu.pipeline_mode<synchronous>, transform_indices = @transform_3, window_bounds = array<i64: 256, 256>}, {pipeline_mode = #tpu.pipeline_mode<synchronous>, transform_indices = @transform_4, window_bounds = array<i64: 1, 256>}, {pipeline_mode = #tpu.pipeline_mode<synchronous>, transform_indices = @transform_5, window_bounds = array<i64: 1, 256>}, {transform_indices = @transform_6, window_bounds = array<i64: 1>}, {transform_indices = @transform_7, window_bounds = array<i64: 1, 1, 512>}]} {
    %c0 = arith.constant 0 : index
    %c0_0 = arith.constant 0 : index
    %0 = vector.load %arg1[%c0, %c0_0] : memref<512x256xf32, #tpu.memory_space<vmem>>, vector<512x256xf32>
    %1 = arith.truncf %0 : vector<512x256xf32> to vector<512x256xbf16>
    %c0_1 = arith.constant 0 : index
    %c0_2 = arith.constant 0 : index
    %2 = vector.load %arg2[%c0_1, %c0_2] : memref<256x256xbf16, #tpu.memory_space<vmem>>, vector<256x256xbf16>
    %cst = arith.constant dense<0.000000e+00> : vector<512x256xf32>
    %3 = tpu.matmul %1, %2, %cst {dimension_numbers = #tpu.dot_dimension_numbers<[1], [0], [0], [1], [0, 0, 1, 1], [], []>} : vector<512x256xbf16>, vector<256x256xbf16>, vector<512x256xf32> -> vector<512x256xf32>
    %c0_3 = arith.constant 0 : index
    %c0_4 = arith.constant 0 : index
    %4 = vector.load %arg3[%c0_3, %c0_4] : memref<1x256xf32, #tpu.memory_space<vmem>>, vector<1x256xf32>
    %5 = vector.broadcast %4 : vector<1x256xf32> to vector<512x256xf32>
    %6 = arith.addf %3, %5 : vector<512x256xf32>
    %cst_5 = arith.constant 2.000000e-01 : f32
    %7 = vector.broadcast %cst_5 : f32 to vector<512x256xf32>
    %8 = arith.mulf %7, %6 : vector<512x256xf32>
    %9 = arith.maximumf %6, %8 : vector<512x256xf32>
    %10 = arith.truncf %9 : vector<512x256xf32> to vector<512x256xbf16>
    %c0_6 = arith.constant 0 : index
    %c0_7 = arith.constant 0 : index
    %11 = vector.load %arg4[%c0_6, %c0_7] : memref<256x256xbf16, #tpu.memory_space<vmem>>, vector<256x256xbf16>
    %cst_8 = arith.constant dense<0.000000e+00> : vector<512x256xf32>
    %12 = tpu.matmul %10, %11, %cst_8 {dimension_numbers = #tpu.dot_dimension_numbers<[1], [0], [0], [1], [0, 0, 1, 1], [], []>} : vector<512x256xbf16>, vector<256x256xbf16>, vector<512x256xf32> -> vector<512x256xf32>
    %c0_9 = arith.constant 0 : index
    %c0_10 = arith.constant 0 : index
    %13 = vector.load %arg5[%c0_9, %c0_10] : memref<1x256xf32, #tpu.memory_space<vmem>>, vector<1x256xf32>
    %14 = vector.broadcast %13 : vector<1x256xf32> to vector<512x256xf32>
    %15 = arith.addf %12, %14 : vector<512x256xf32>
    %cst_11 = arith.constant 2.000000e-01 : f32
    %16 = vector.broadcast %cst_11 : f32 to vector<512x256xf32>
    %17 = arith.mulf %16, %15 : vector<512x256xf32>
    %18 = arith.maximumf %15, %17 : vector<512x256xf32>
    %c0_12 = arith.constant 0 : index
    %c0_13 = arith.constant 0 : index
    %19 = vector.load %arg6[%c0_12, %c0_13] : memref<1x256xf32, #tpu.memory_space<vmem>>, vector<1x256xf32>
    %20 = vector.broadcast %19 : vector<1x256xf32> to vector<512x256xf32>
    %21 = arith.mulf %18, %20 : vector<512x256xf32>
    %cst_14 = arith.constant dense<0.000000e+00> : vector<512xf32>
    %22 = vector.multi_reduction <add>, %21, %cst_14 [1] : vector<512x256xf32> to vector<512xf32>
    %23 = vector.shape_cast %22 : vector<512xf32> to vector<512x1xf32>
    %c0_15 = arith.constant 0 : index
    %24 = memref.load %arg7[%c0_15] : memref<1xf32, #tpu.memory_space<smem>>
    %25 = vector.broadcast %24 : f32 to vector<512x1xf32>
    %26 = arith.addf %23, %25 : vector<512x1xf32>
    %27 = math.absf %26 : vector<512x1xf32>
    %cst_16 = arith.constant 0.000000e+00 : f32
    %28 = vector.broadcast %cst_16 : f32 to vector<512x1xf32>
    %29 = arith.subf %28, %27 : vector<512x1xf32>
    %30 = math.exp %29 : vector<512x1xf32>
    %cst_17 = arith.constant 1.000000e+00 : f32
    %31 = vector.broadcast %cst_17 : f32 to vector<512x1xf32>
    %32 = arith.addf %31, %30 : vector<512x1xf32>
    %33 = tpu.reciprocal %32 : vector<512x1xf32> -> vector<512x1xf32>
    %cst_18 = arith.constant 0.000000e+00 : f32
    %34 = vector.broadcast %cst_18 : f32 to vector<512x1xf32>
    %35 = arith.cmpf oge, %26, %34 : vector<512x1xf32>
    %36 = arith.mulf %30, %33 : vector<512x1xf32>
    %37 = arith.select %35, %33, %36 : vector<512x1xi1>, vector<512x1xf32>
    %38 = tpu.transpose %37, [1, 0] : vector<512x1xf32> -> vector<1x512xf32>
    %c0_19 = arith.constant 0 : index
    %c0_20 = arith.constant 0 : index
    %c0_21 = arith.constant 0 : index
    %39 = vector.load %arg8[%c0_19, %c0_20, %c0_21] : memref<1x1x512xf32, #tpu.memory_space<vmem>>, vector<1x1x512xf32>
    %40 = vector.shape_cast %39 : vector<1x1x512xf32> to vector<1x512xf32>
    %41 = vector.shape_cast %38 : vector<1x512xf32> to vector<1x1x512xf32>
    tpu.vector_store %arg8[%c0_19, %c0_20, %c0_21], %41 {strides = array<i32>} : memref<1x1x512xf32, #tpu.memory_space<vmem>>, vector<1x1x512xf32>,
    return
  }
  func.func @transform_0(%arg0: i32) -> (i32, i32) {
    %c0_i32 = arith.constant 0 : i32
    %c0_i32_0 = arith.constant 0 : i32
    return %arg0, %c0_i32 : i32, i32
  }
  func.func @transform_1(%arg0: i32) -> (i32, i32) {
    %c0_i32 = arith.constant 0 : i32
    %c0_i32_0 = arith.constant 0 : i32
    %c0_i32_1 = arith.constant 0 : i32
    return %c0_i32, %c0_i32_0 : i32, i32
  }
  func.func @transform_2(%arg0: i32) -> (i32, i32) {
    %c0_i32 = arith.constant 0 : i32
    %c0_i32_0 = arith.constant 0 : i32
    %c0_i32_1 = arith.constant 0 : i32
    return %c0_i32, %c0_i32_0 : i32, i32
  }
  func.func @transform_3(%arg0: i32) -> (i32, i32) {
    %c0_i32 = arith.constant 0 : i32
    %c0_i32_0 = arith.constant 0 : i32
    %c0_i32_1 = arith.constant 0 : i32
    return %c0_i32, %c0_i32_0 : i32, i32
  }
  func.func @transform_4(%arg0: i32) -> (i32, i32) {
    %c0_i32 = arith.constant 0 : i32
    %c0_i32_0 = arith.constant 0 : i32
    %c0_i32_1 = arith.constant 0 : i32
    return %c0_i32, %c0_i32_0 : i32, i32
  }
  func.func @transform_5(%arg0: i32) -> (i32, i32) {
    %c0_i32 = arith.constant 0 : i32
    %c0_i32_0 = arith.constant 0 : i32
    %c0_i32_1 = arith.constant 0 : i32
    return %c0_i32, %c0_i32_0 : i32, i32
  }
  func.func @transform_6(%arg0: i32) -> i32 {
    %c0_i32 = arith.constant 0 : i32
    %c0_i32_0 = arith.constant 0 : i32
    return %c0_i32 : i32
  }
  func.func @transform_7(%arg0: i32) -> (i32, i32, i32) {
    %c0_i32 = arith.constant 0 : i32
    %c0_i32_0 = arith.constant 0 : i32
    %c0_i32_1 = arith.constant 0 : i32
    return %arg0, %c0_i32, %c0_i32_0 : i32, i32, i32
  }
}

</mosaic_0001>

<llo_original>
// kernel: tpu_custom_call.1
$region0: #{tpu_custom_call.1}
  #allocation0 [shape = 'u32[]', space=smem, size = 0x4, offset = 0x4, fixed_abs, tag = 'smem constant byte address 0x4 - core index']
  #allocation1 [shape = 'u32[144,128]{1,0:T(1,128)}', space=vmem, size = 0x12000, scoped, tag = 'internal scratch']
  #allocation2 [shape = 'f32[1]{0:T(128)S(6)}', space=smem, size = 0x200, scoped, tag = 'scoped memory for tpu_custom_call.1']
  %s0 = inlined_call_operand.hbm [shape: f32[1024,256], index: 0, kind: input, shape index: {}]
  %s1 = inlined_call_operand.hbm [shape: bf16[256,256], index: 1, kind: input, shape index: {}]
  %s2 = inlined_call_operand.vmem [shape: f32[1,256], index: 2, kind: input, shape index: {}]
  %s3 = inlined_call_operand.hbm [shape: bf16[256,256], index: 3, kind: input, shape index: {}]
  %s4 = inlined_call_operand.vmem [shape: f32[1,256], index: 4, kind: input, shape index: {}]
  %s5 = inlined_call_operand.vmem [shape: f32[1,256], index: 5, kind: input, shape index: {}]
  %s6 = inlined_call_operand.<no memory space> [shape: f32[1], index: 6, kind: input, shape index: {}]
  %s7 = inlined_call_operand.hbm [shape: f32[2,1,512], index: 7, kind: output, shape index: {}]
  %s8 = sld [smem:[#allocation0]]
  $region73: #{tpu_custom_call.1} parent=0
    _
  %s10 = ssub.s32 1, %s8
  %s11 = scalar_select 0, %s10, %s8
  %12 = sst [smem:[#allocation2]] %s6
  $region1: #{tpu_custom_call.1} parent=0
    #allocation3 [shape = 'u8[1048576]{0}', space=vmem, size = 0x100000, scoped, tag = 'input window, operand 0']
    #allocation4 [shape = 's32[2]{0}', space=sflag, size = 0x8, scoped, tag = 'scoped memory for tpu_custom_call.1']
    #allocation5 [shape = 's32[2]{0}', space=sflag, size = 0x8, scoped, tag = 'scoped memory for tpu_custom_call.1']
    #allocation6 [shape = 'u8[131072]{0}', space=vmem, size = 0x20000, scoped, tag = 'input window, operand 1, single buffered']
    #allocation7 [shape = 's32[1]{0}', space=sflag, size = 0x4, scoped, tag = 'scoped memory for tpu_custom_call.1']
    #allocation8 [shape = 'u8[131072]{0}', space=vmem, size = 0x20000, scoped, tag = 'input window, operand 3, single buffered']
    #allocation9 [shape = 'u8[4096]{0}', space=vmem, size = 0x1000, scoped, tag = 'output window, operand 0']
    %13 = vsyncpa [#allocation4], 0
    %s14 = scalar_lea.sflag [#allocation4], 1
    %15 = vsyncpa %s14, 0
    %16 = vsyncpa [#allocation7], 0
    %17 = vsyncpa [#allocation5], 0
    %s18 = scalar_lea.sflag [#allocation5], 1
    %19 = vsyncpa %s18, 0
    loop: start=0, step=1, limit=4
    $region2: #{tpu_custom_call.1} parent=1 // loop_pre_header
      _
    $region3: #{tpu_custom_call.1} parent=1 // loop_header
      %s21 = sphi 0, %s25
      %p22 = scmp.ge.s32.totalorder %s21, 4
      %s31 = sphi 0, %s33
      %s34 = sphi 0, %s31
      %s35 = sphi 0, %s34
      %s51 = sphi 0, %s35
      %s55 = sphi 0, %s55
      %s57 = sphi 0, %s55
      %s58 = sphi 0, %s57
      %s72 = sphi 0, %s58
      %s76 = sphi 0, %s76
      %s78 = sphi 0, %s76
      %s79 = sphi 0, %s78
      %s93 = sphi 0, %s79
      %s97 = sphi 0, %s97
      %s99 = sphi 0, %s97
      %s100 = sphi 0, %s99
      %s114 = sphi 0, %s100
      %s118 = sphi 0, %s118
      %s120 = sphi 0, %s118
      %s121 = sphi 0, %s120
      %s135 = sphi 0, %s121
      %s139 = sphi 0, %s139
      %s141 = sphi 0, %s139
      %s142 = sphi 0, %s141
      %s156 = sphi 0, %s142
      %s160 = sphi 0, %s160
      %s162 = sphi 0, %s160
      %s163 = sphi 0, %s162
      %s177 = sphi 0, %s163
      %s183 = sphi 0, %s185
      %s186 = sphi 0, %s183
      %s187 = sphi 0, %s186
      %s203 = sphi 0, %s187
    $region4: #{tpu_custom_call.1} parent=1 // loop_header_branch
      %24 = sbr.rel (%p22) target = $region8
    $region5: #{tpu_custom_call.1} parent=1 // loop_body
      %s26 = ssub.s32 %s21, 1
      %s27 = ssub.s32 %s21, 2
      %s28 = sadd.s32 %s21, 1
      %s29 = ssub.s32 %s21, %s28
      %p30 = scmp.eq.s32.totalorder %s29, 0
      %s32 = sadd.s32 %s31, 1
      %s33 = scalar_select %p30, %s31, %s32
      %p36 = pneg %p30
      %p37 = scmp.eq.s32.totalorder %s21, 1
      %p38 = por %p36, %p37
      %p39 = scmp.ne.s32.totalorder %s31, %s34
      %p40 = scmp.eq.s32.totalorder %s21, 0
      %p41 = por %p39, %p40
      %p42 = scmp.ne.s32.totalorder %s31, %s34
      %p43 = scmp.eq.s32.totalorder %s26, 1
      %p44 = por %p42, %p43
      %p45 = scmp.ne.s32.totalorder %s34, %s35
      %p46 = scmp.eq.s32.totalorder %s26, 0
      %p47 = por %p45, %p46
      %p48 = scmp.ne.s32.totalorder %s34, %s35
      %p49 = scmp.eq.s32.totalorder %s27, 1
      %p50 = por %p48, %p49
      %p52 = scmp.ne.s32.totalorder %s35, %s51
      %p53 = scmp.eq.s32.totalorder %s27, 0
      %p54 = por %p52, %p53
      %s56 = sadd.s32 %s55, 1
      %p59 = scmp.eq.s32.totalorder %s21, 1
      %p60 = scmp.ne.s32.totalorder %s55, %s57
      %p61 = scmp.eq.s32.totalorder %s21, 0
      %p62 = por %p60, %p61
      %p63 = scmp.ne.s32.totalorder %s55, %s57
      %p64 = scmp.eq.s32.totalorder %s26, 1
      %p65 = por %p63, %p64
      %p66 = scmp.ne.s32.totalorder %s57, %s58
      %p67 = scmp.eq.s32.totalorder %s26, 0
      %p68 = por %p66, %p67
      %p69 = scmp.ne.s32.totalorder %s57, %s58
      %p70 = scmp.eq.s32.totalorder %s27, 1
      %p71 = por %p69, %p70
      %p73 = scmp.ne.s32.totalorder %s58, %s72
      %p74 = scmp.eq.s32.totalorder %s27, 0
      %p75 = por %p73, %p74
      %s77 = sadd.s32 %s76, 1
      %p80 = scmp.eq.s32.totalorder %s21, 1
      %p81 = scmp.ne.s32.totalorder %s76, %s78
      %p82 = scmp.eq.s32.totalorder %s21, 0
      %p83 = por %p81, %p82
      %p84 = scmp.ne.s32.totalorder %s76, %s78
      %p85 = scmp.eq.s32.totalorder %s26, 1
      %p86 = por %p84, %p85
      %p87 = scmp.ne.s32.totalorder %s78, %s79
      %p88 = scmp.eq.s32.totalorder %s26, 0
      %p89 = por %p87, %p88
      %p90 = scmp.ne.s32.totalorder %s78, %s79
      %p91 = scmp.eq.s32.totalorder %s27, 1
      %p92 = por %p90, %p91
      %p94 = scmp.ne.s32.totalorder %s79, %s93
      %p95 = scmp.eq.s32.totalorder %s27, 0
      %p96 = por %p94, %p95
      %s98 = sadd.s32 %s97, 1
      %p101 = scmp.eq.s32.totalorder %s21, 1
      %p102 = scmp.ne.s32.totalorder %s97, %s99
      %p103 = scmp.eq.s32.totalorder %s21, 0
      %p104 = por %p102, %p103
      %p105 = scmp.ne.s32.totalorder %s97, %s99
      %p106 = scmp.eq.s32.totalorder %s26, 1
      %p107 = por %p105, %p106
      %p108 = scmp.ne.s32.totalorder %s99, %s100
      %p109 = scmp.eq.s32.totalorder %s26, 0
      %p110 = por %p108, %p109
      %p111 = scmp.ne.s32.totalorder %s99, %s100
      %p112 = scmp.eq.s32.totalorder %s27, 1
      %p113 = por %p111, %p112
      %p115 = scmp.ne.s32.totalorder %s100, %s114
      %p116 = scmp.eq.s32.totalorder %s27, 0
      %p117 = por %p115, %p116
      %s119 = sadd.s32 %s118, 1
      %p122 = scmp.eq.s32.totalorder %s21, 1
      %p123 = scmp.ne.s32.totalorder %s118, %s120
      %p124 = scmp.eq.s32.totalorder %s21, 0
      %p125 = por %p123, %p124
      %p126 = scmp.ne.s32.totalorder %s118, %s120
      %p127 = scmp.eq.s32.totalorder %s26, 1
      %p128 = por %p126, %p127
      %p129 = scmp.ne.s32.totalorder %s120, %s121
      %p130 = scmp.eq.s32.totalorder %s26, 0
      %p131 = por %p129, %p130
      %p132 = scmp.ne.s32.totalorder %s120, %s121
      %p133 = scmp.eq.s32.totalorder %s27, 1
      %p134 = por %p132, %p133
      %p136 = scmp.ne.s32.totalorder %s121, %s135
      %p137 = scmp.eq.s32.totalorder %s27, 0
      %p138 = por %p136, %p137
      %s140 = sadd.s32 %s139, 1
      %p143 = scmp.eq.s32.totalorder %s21, 1
      %p144 = scmp.ne.s32.totalorder %s139, %s141
      %p145 = scmp.eq.s32.totalorder %s21, 0
      %p146 = por %p144, %p145
      %p147 = scmp.ne.s32.totalorder %s139, %s141
      %p148 = scmp.eq.s32.totalorder %s26, 1
      %p149 = por %p147, %p148
      %p150 = scmp.ne.s32.totalorder %s141, %s142
      %p151 = scmp.eq.s32.totalorder %s26, 0
      %p152 = por %p150, %p151
      %p153 = scmp.ne.s32.totalorder %s141, %s142
      %p154 = scmp.eq.s32.totalorder %s27, 1
      %p155 = por %p153, %p154
      %p157 = scmp.ne.s32.totalorder %s142, %s156
      %p158 = scmp.eq.s32.totalorder %s27, 0
      %p159 = por %p157, %p158
      %s161 = sadd.s32 %s160, 1
      %p164 = scmp.eq.s32.totalorder %s21, 1
      %p165 = scmp.ne.s32.totalorder %s160, %s162
      %p166 = scmp.eq.s32.totalorder %s21, 0
      %p167 = por %p165, %p166
      %p168 = scmp.ne.s32.totalorder %s160, %s162
      %p169 = scmp.eq.s32.totalorder %s26, 1
      %p170 = por %p168, %p169
      %p171 = scmp.ne.s32.totalorder %s162, %s163
      %p172 = scmp.eq.s32.totalorder %s26, 0
      %p173 = por %p171, %p172
      %p174 = scmp.ne.s32.totalorder %s162, %s163
      %p175 = scmp.eq.s32.totalorder %s27, 1
      %p176 = por %p174, %p175
      %p178 = scmp.ne.s32.totalorder %s163, %s177
      %p179 = scmp.eq.s32.totalorder %s27, 0
      %p180 = por %p178, %p179
      %s181 = ssub.s32 %s21, %s28
      %p182 = scmp.eq.s32.totalorder %s181, 0
      %s184 = sadd.s32 %s183, 1
      %s185 = scalar_select %p182, %s183, %s184
      %p188 = pneg %p182
      %p189 = scmp.eq.s32.totalorder %s21, 1
      %p190 = por %p188, %p189
      %p191 = scmp.ne.s32.totalorder %s183, %s186
      %p192 = scmp.eq.s32.totalorder %s21, 0
      %p193 = por %p191, %p192
      %p194 = scmp.ne.s32.totalorder %s183, %s186
      %p195 = scmp.eq.s32.totalorder %s26, 1
      %p196 = por %p194, %p195
      %p197 = scmp.ne.s32.totalorder %s186, %s187
      %p198 = scmp.eq.s32.totalorder %s26, 0
      %p199 = por %p197, %p198
      %p200 = scmp.ne.s32.totalorder %s186, %s187
      %p201 = scmp.eq.s32.totalorder %s27, 1
      %p202 = por %p200, %p201
      %p204 = scmp.ne.s32.totalorder %s187, %s203
      %p205 = scmp.eq.s32.totalorder %s27, 0
      %p206 = por %p204, %p205
      %p207 = scmp.le.s32.totalorder 1, %s21
      %p208 = scmp.lt.s32.totalorder %s21, 3
      %p209 = pnand %p207, %p208
      %p210 = pneg %p209
      // Predicated region
      $region9: #{tpu_custom_call.1} parent=5 // pred_check
        _
      $region10: #{tpu_custom_call.1} parent=5 // pred_check_branch
        %212 = sbr.rel (%p209) target = $region12
      $region11: #{tpu_custom_call.1} parent=5 // pred_region
        %s213 = ssub.s32 %s21, 1
        // Predicated region
        $region13: #{tpu_custom_call.1} parent=11 // pred_check
          %p214 = pneg %p68
        $region14: #{tpu_custom_call.1} parent=11 // pred_check_branch
          %216 = sbr.rel (%p214) target = $region16
        $region15: #{tpu_custom_call.1} parent=11 // pred_region
          %s218 = ssub.s32 4096, 4096
          %219 = vsyncadd [#allocation7], %s218
          %s220 = sshll.u32 [#allocation6], 4
          %s221 = int_to_ptr.vmem [resolvable:$true] %s220
          %226 = dma.hbm_to_vmem [thread:$0]  %s1, 4096, %s221, [#allocation7], 128, 128, 8
        $region16: #{tpu_custom_call.1} parent=11 // pred_fallthru
          _
        // Predicated region
        $region17: #{tpu_custom_call.1} parent=11 // pred_check
          %p227 = pneg %p89
        $region18: #{tpu_custom_call.1} parent=11 // pred_check_branch
          %229 = sbr.rel (%p227) target = $region20
        $region19: #{tpu_custom_call.1} parent=11 // pred_region
          _
        $region20: #{tpu_custom_call.1} parent=11 // pred_fallthru
          _
        // Predicated region
        $region21: #{tpu_custom_call.1} parent=11 // pred_check
          %p230 = pneg %p110
        $region22: #{tpu_custom_call.1} parent=11 // pred_check_branch
          %232 = sbr.rel (%p230) target = $region24
        $region23: #{tpu_custom_call.1} parent=11 // pred_region
          %s234 = ssub.s32 4096, 4096
          %235 = vsyncadd [#allocation7], %s234
          %s236 = sshll.u32 [#allocation8], 4
          %s237 = int_to_ptr.vmem [resolvable:$true] %s236
          %242 = dma.hbm_to_vmem [thread:$0]  %s3, 4096, %s237, [#allocation7], 128, 128, 8
        $region24: #{tpu_custom_call.1} parent=11 // pred_fallthru
          _
        // Predicated region
        $region25: #{tpu_custom_call.1} parent=11 // pred_check
          %p243 = pneg %p131
        $region26: #{tpu_custom_call.1} parent=11 // pred_check_branch
          %245 = sbr.rel (%p243) target = $region28
        $region27: #{tpu_custom_call.1} parent=11 // pred_region
          _
        $region28: #{tpu_custom_call.1} parent=11 // pred_fallthru
          _
        // Predicated region
        $region29: #{tpu_custom_call.1} parent=11 // pred_check
          %p246 = pneg %p152
        $region30: #{tpu_custom_call.1} parent=11 // pred_check_branch
          %248 = sbr.rel (%p246) target = $region32
        $region31: #{tpu_custom_call.1} parent=11 // pred_region
          _
        $region32: #{tpu_custom_call.1} parent=11 // pred_fallthru
          _
        // Predicated region
        $region33: #{tpu_custom_call.1} parent=11 // pred_check
          %p249 = pneg %p173
        $region34: #{tpu_custom_call.1} parent=11 // pred_check_branch
          %251 = sbr.rel (%p249) target = $region36
        $region35: #{tpu_custom_call.1} parent=11 // pred_region
          _
        $region36: #{tpu_custom_call.1} parent=11 // pred_fallthru
          _
      $region12: #{tpu_custom_call.1} parent=5 // pred_fallthru
        _
      %p252 = scmp.lt.s32.totalorder %s21, 2
      // Predicated region
      $region37: #{tpu_custom_call.1} parent=5 // pred_check
        %p253 = pneg %p252
      $region38: #{tpu_custom_call.1} parent=5 // pred_check_branch
        %255 = sbr.rel (%p253) target = $region40
      $region39: #{tpu_custom_call.1} parent=5 // pred_region
        // Predicated region
        $region41: #{tpu_custom_call.1} parent=39 // pred_check
          %p256 = pneg %p41
        $region42: #{tpu_custom_call.1} parent=39 // pred_check_branch
          %258 = sbr.rel (%p256) target = $region44
        $region43: #{tpu_custom_call.1} parent=39 // pred_region
          %s259 = sand.u32 %s31, 1
          %s260 = scalar_lea.sflag [#allocation4], %s259
          %s261 = sand.u32 %s31, 1
          %s262 = smul.addr %s261, 1024
          %s263 = scalar_lea.vmem [#allocation3], %s262
          %s264 = smul.u32 64, %s21
          %s266 = ssub.s32 16384, 16384
          %267 = vsyncadd %s260, %s266
          %s268 = smul.addr %s264, 2
          %s269 = smul.addr %s268, 128
          %s270 = scalar_lea.hbm %s0, %s269
          %s271 = sshll.u32 %s263, 4
          %s272 = int_to_ptr.vmem [resolvable:$true] %s271
          %277 = dma.hbm_to_vmem [thread:$0]  %s270, 16384, %s272, %s260, 256, 256, 16
        $region44: #{tpu_custom_call.1} parent=39 // pred_fallthru
          _
      $region40: #{tpu_custom_call.1} parent=5 // pred_fallthru
        _
      %p278 = scmp.le.s32.totalorder 1, %s21
      %p279 = scmp.lt.s32.totalorder %s21, 3
      %p280 = pnand %p278, %p279
      %p281 = pneg %p280
      // Predicated region
      $region45: #{tpu_custom_call.1} parent=5 // pred_check
        _
      $region46: #{tpu_custom_call.1} parent=5 // pred_check_branch
        %283 = sbr.rel (%p280) target = $region48
      $region47: #{tpu_custom_call.1} parent=5 // pred_region
        %s284 = ssub.s32 %s21, 1
        %s285 = sand.u32 %s34, 1
        %s286 = scalar_lea.sflag [#allocation4], %s285
        %s287 = sand.u32 %s34, 1
        %s288 = smul.addr %s287, 1024
        %s289 = scalar_lea.vmem [#allocation3], %s288
        // Predicated region
        $region49: #{tpu_custom_call.1} parent=47 // pred_check
          %p290 = pneg %p47
        $region50: #{tpu_custom_call.1} parent=47 // pred_check_branch
          %292 = sbr.rel (%p290) target = $region52
        $region51: #{tpu_custom_call.1} parent=47 // pred_region
          %293 = dma.done %s286, 16384
        $region52: #{tpu_custom_call.1} parent=47 // pred_fallthru
          _
        // Predicated region
        $region53: #{tpu_custom_call.1} parent=47 // pred_check
          %p294 = pneg %p68
        $region54: #{tpu_custom_call.1} parent=47 // pred_check_branch
          %296 = sbr.rel (%p294) target = $region56
        $region55: #{tpu_custom_call.1} parent=47 // pred_region
          %297 = dma.done [#allocation7], 4096
        $region56: #{tpu_custom_call.1} parent=47 // pred_fallthru
          _
        // Predicated region
        $region57: #{tpu_custom_call.1} parent=47 // pred_check
          %p298 = pneg %p110
        $region58: #{tpu_custom_call.1} parent=47 // pred_check_branch
          %300 = sbr.rel (%p298) target = $region60
        $region59: #{tpu_custom_call.1} parent=47 // pred_region
          %301 = dma.done [#allocation7], 4096
        $region60: #{tpu_custom_call.1} parent=47 // pred_fallthru
          _
        %s302 = sand.u32 %s34, 1
        %s303 = scalar_lea.sflag [#allocation4], %s302
        %s304 = sand.u32 %s34, 1
        %s305 = smul.addr %s304, 1024
        %s306 = scalar_lea.vmem [#allocation3], %s305
        %p307 = pneg %p47
        %p308 = pneg %p44
        %p309 = pneg %p68
        %p310 = pneg %p65
        %p311 = pneg %p89
        %p312 = pneg %p86
        %p313 = pneg %p110
        %p314 = pneg %p107
        %p315 = pneg %p131
        %p316 = pneg %p128
        %p317 = pneg %p152
        %p318 = pneg %p149
        %p319 = pneg %p173
        %p320 = pneg %p170
        %p321 = pneg %p199
        %p322 = pneg %p196
        %s323 = sand.u32 %s186, 1
        %s324 = scalar_lea.sflag [#allocation5], %s323
        %s325 = sand.u32 %s186, 1
        %s326 = smul.addr %s325, 4
        %s327 = scalar_lea.vmem [#allocation9], %s326
        %s328 = smul.u32 64, %s26
        %v329 = vld [vmem:[%s289] sm:$0xff]
        %v330 = vld [vmem:[%s289 + $0x8] sm:$0xff]
        %v331 = vld [vmem:[%s289 + $0x10] sm:$0xff]
        %v332 = vld [vmem:[%s289 + $0x18] sm:$0xff]
        %v333 = vld [vmem:[%s289 + $0x20] sm:$0xff]
        %v334 = vld [vmem:[%s289 + $0x28] sm:$0xff]
        %v335 = vld [vmem:[%s289 + $0x30] sm:$0xff]
        %v336 = vld [vmem:[%s289 + $0x38] sm:$0xff]
        %v337 = vld [vmem:[%s289 + $0x40] sm:$0xff]
        %v338 = vld [vmem:[%s289 + $0x48] sm:$0xff]
        %v339 = vld [vmem:[%s289 + $0x50] sm:$0xff]
        %v340 = vld [vmem:[%s289 + $0x58] sm:$0xff]
        %v341 = vld [vmem:[%s289 + $0x60] sm:$0xff]
        %v342 = vld [vmem:[%s289 + $0x68] sm:$0xff]
        %v343 = vld [vmem:[%s289 + $0x70] sm:$0xff]
        %v344 = vld [vmem:[%s289 + $0x78] sm:$0xff]
        %v345 = vld [vmem:[%s289 + $0x80] sm:$0xff]
        %v346 = vld [vmem:[%s289 + $0x88] sm:$0xff]
        %v347 = vld [vmem:[%s289 + $0x90] sm:$0xff]
        %v348 = vld [vmem:[%s289 + $0x98] sm:$0xff]
        %v349 = vld [vmem:[%s289 + $0xa0] sm:$0xff]
        %v350 = vld [vmem:[%s289 + $0xa8] sm:$0xff]
        %v351 = vld [vmem:[%s289 + $0xb0] sm:$0xff]
        %v352 = vld [vmem:[%s289 + $0xb8] sm:$0xff]
        %v353 = vld [vmem:[%s289 + $0xc0] sm:$0xff]
        %v354 = vld [vmem:[%s289 + $0xc8] sm:$0xff]
        %v355 = vld [vmem:[%s289 + $0xd0] sm:$0xff]
        %v356 = vld [vmem:[%s289 + $0xd8] sm:$0xff]
        %v357 = vld [vmem:[%s289 + $0xe0] sm:$0xff]
        %v358 = vld [vmem:[%s289 + $0xe8] sm:$0xff]
        %v359 = vld [vmem:[%s289 + $0xf0] sm:$0xff]
        %v360 = vld [vmem:[%s289 + $0xf8] sm:$0xff]
        %v361 = vld [vmem:[%s289 + $0x100] sm:$0xff]
        %v362 = vld [vmem:[%s289 + $0x108] sm:$0xff]
        %v363 = vld [vmem:[%s289 + $0x110] sm:$0xff]
        %v364 = vld [vmem:[%s289 + $0x118] sm:$0xff]
        %v365 = vld [vmem:[%s289 + $0x120] sm:$0xff]
        %v366 = vld [vmem:[%s289 + $0x128] sm:$0xff]
        %v367 = vld [vmem:[%s289 + $0x130] sm:$0xff]
        %v368 = vld [vmem:[%s289 + $0x138] sm:$0xff]
        %v369 = vld [vmem:[%s289 + $0x140] sm:$0xff]
        %v370 = vld [vmem:[%s289 + $0x148] sm:$0xff]
        %v371 = vld [vmem:[%s289 + $0x150] sm:$0xff]
        %v372 = vld [vmem:[%s289 + $0x158] sm:$0xff]
        %v373 = vld [vmem:[%s289 + $0x160] sm:$0xff]
        %v374 = vld [vmem:[%s289 + $0x168] sm:$0xff]
        %v375 = vld [vmem:[%s289 + $0x170] sm:$0xff]
        %v376 = vld [vmem:[%s289 + $0x178] sm:$0xff]
        %v377 = vld [vmem:[%s289 + $0x180] sm:$0xff]
        %v378 = vld [vmem:[%s289 + $0x188] sm:$0xff]
        %v379 = vld [vmem:[%s289 + $0x190] sm:$0xff]
        %v380 = vld [vmem:[%s289 + $0x198] sm:$0xff]
        %v381 = vld [vmem:[%s289 + $0x1a0] sm:$0xff]
        %v382 = vld [vmem:[%s289 + $0x1a8] sm:$0xff]
        %v383 = vld [vmem:[%s289 + $0x1b0] sm:$0xff]
        %v384 = vld [vmem:[%s289 + $0x1b8] sm:$0xff]
        %v385 = vld [vmem:[%s289 + $0x1c0] sm:$0xff]
        %v386 = vld [vmem:[%s289 + $0x1c8] sm:$0xff]
        %v387 = vld [vmem:[%s289 + $0x1d0] sm:$0xff]
        %v388 = vld [vmem:[%s289 + $0x1d8] sm:$0xff]
        %v389 = vld [vmem:[%s289 + $0x1e0] sm:$0xff]
        %v390 = vld [vmem:[%s289 + $0x1e8] sm:$0xff]
        %v391 = vld [vmem:[%s289 + $0x1f0] sm:$0xff]
        %v392 = vld [vmem:[%s289 + $0x1f8] sm:$0xff]
        %v393 = vld [vmem:[%s289 + $0x200] sm:$0xff]
        %v394 = vld [vmem:[%s289 + $0x208] sm:$0xff]
        %v395 = vld [vmem:[%s289 + $0x210] sm:$0xff]
        %v396 = vld [vmem:[%s289 + $0x218] sm:$0xff]
        %v397 = vld [vmem:[%s289 + $0x220] sm:$0xff]
        %v398 = vld [vmem:[%s289 + $0x228] sm:$0xff]
        %v399 = vld [vmem:[%s289 + $0x230] sm:$0xff]
        %v400 = vld [vmem:[%s289 + $0x238] sm:$0xff]
        %v401 = vld [vmem:[%s289 + $0x240] sm:$0xff]
        %v402 = vld [vmem:[%s289 + $0x248] sm:$0xff]
        %v403 = vld [vmem:[%s289 + $0x250] sm:$0xff]
        %v404 = vld [vmem:[%s289 + $0x258] sm:$0xff]
        %v405 = vld [vmem:[%s289 + $0x260] sm:$0xff]
        %v406 = vld [vmem:[%s289 + $0x268] sm:$0xff]
        %v407 = vld [vmem:[%s289 + $0x270] sm:$0xff]
        %v408 = vld [vmem:[%s289 + $0x278] sm:$0xff]
        %v409 = vld [vmem:[%s289 + $0x280] sm:$0xff]
        %v410 = vld [vmem:[%s289 + $0x288] sm:$0xff]
        %v411 = vld [vmem:[%s289 + $0x290] sm:$0xff]
        %v412 = vld [vmem:[%s289 + $0x298] sm:$0xff]
        %v413 = vld [vmem:[%s289 + $0x2a0] sm:$0xff]
        %v414 = vld [vmem:[%s289 + $0x2a8] sm:$0xff]
        %v415 = vld [vmem:[%s289 + $0x2b0] sm:$0xff]
        %v416 = vld [vmem:[%s289 + $0x2b8] sm:$0xff]
        %v417 = vld [vmem:[%s289 + $0x2c0] sm:$0xff]
        %v418 = vld [vmem:[%s289 + $0x2c8] sm:$0xff]
        %v419 = vld [vmem:[%s289 + $0x2d0] sm:$0xff]
        %v420 = vld [vmem:[%s289 + $0x2d8] sm:$0xff]
        %v421 = vld [vmem:[%s289 + $0x2e0] sm:$0xff]
        %v422 = vld [vmem:[%s289 + $0x2e8] sm:$0xff]
        %v423 = vld [vmem:[%s289 + $0x2f0] sm:$0xff]
        %v424 = vld [vmem:[%s289 + $0x2f8] sm:$0xff]
        %v425 = vld [vmem:[%s289 + $0x300] sm:$0xff]
        %v426 = vld [vmem:[%s289 + $0x308] sm:$0xff]
        %v427 = vld [vmem:[%s289 + $0x310] sm:$0xff]
        %v428 = vld [vmem:[%s289 + $0x318] sm:$0xff]
        %v429 = vld [vmem:[%s289 + $0x320] sm:$0xff]
        %v430 = vld [vmem:[%s289 + $0x328] sm:$0xff]
        %v431 = vld [vmem:[%s289 + $0x330] sm:$0xff]
        %v432 = vld [vmem:[%s289 + $0x338] sm:$0xff]
        %v433 = vld [vmem:[%s289 + $0x340] sm:$0xff]
        %v434 = vld [vmem:[%s289 + $0x348] sm:$0xff]
        %v435 = vld [vmem:[%s289 + $0x350] sm:$0xff]
        %v436 = vld [vmem:[%s289 + $0x358] sm:$0xff]
        %v437 = vld [vmem:[%s289 + $0x360] sm:$0xff]
        %v438 = vld [vmem:[%s289 + $0x368] sm:$0xff]
        %v439 = vld [vmem:[%s289 + $0x370] sm:$0xff]
        %v440 = vld [vmem:[%s289 + $0x378] sm:$0xff]
        %v441 = vld [vmem:[%s289 + $0x380] sm:$0xff]
        %v442 = vld [vmem:[%s289 + $0x388] sm:$0xff]
        %v443 = vld [vmem:[%s289 + $0x390] sm:$0xff]
        %v444 = vld [vmem:[%s289 + $0x398] sm:$0xff]
        %v445 = vld [vmem:[%s289 + $0x3a0] sm:$0xff]
        %v446 = vld [vmem:[%s289 + $0x3a8] sm:$0xff]
        %v447 = vld [vmem:[%s289 + $0x3b0] sm:$0xff]
        %v448 = vld [vmem:[%s289 + $0x3b8] sm:$0xff]
        %v449 = vld [vmem:[%s289 + $0x3c0] sm:$0xff]
        %v450 = vld [vmem:[%s289 + $0x3c8] sm:$0xff]
        %v451 = vld [vmem:[%s289 + $0x3d0] sm:$0xff]
        %v452 = vld [vmem:[%s289 + $0x3d8] sm:$0xff]
        %v453 = vld [vmem:[%s289 + $0x3e0] sm:$0xff]
        %v454 = vld [vmem:[%s289 + $0x3e8] sm:$0xff]
        %v455 = vld [vmem:[%s289 + $0x3f0] sm:$0xff]
        %v456 = vld [vmem:[%s289 + $0x3f8] sm:$0xff]
        %v457 = vpack.c.bf16 %v331, %v329
        %v458 = vpack.c.bf16 %v332, %v330
        %v459 = vpack.c.bf16 %v335, %v333
        %v460 = vpack.c.bf16 %v336, %v334
        %v461 = vpack.c.bf16 %v339, %v337
        %v462 = vpack.c.bf16 %v340, %v338
        %v463 = vpack.c.bf16 %v343, %v341
        %v464 = vpack.c.bf16 %v344, %v342
        %v465 = vpack.c.bf16 %v347, %v345
        %v466 = vpack.c.bf16 %v348, %v346
        %v467 = vpack.c.bf16 %v351, %v349
        %v468 = vpack.c.bf16 %v352, %v350
        %v469 = vpack.c.bf16 %v355, %v353
        %v470 = vpack.c.bf16 %v356, %v354
        %v471 = vpack.c.bf16 %v359, %v357
        %v472 = vpack.c.bf16 %v360, %v358
        %v473 = vpack.c.bf16 %v363, %v361
        %v474 = vpack.c.bf16 %v364, %v362
        %v475 = vpack.c.bf16 %v367, %v365
        %v476 = vpack.c.bf16 %v368, %v366
        %v477 = vpack.c.bf16 %v371, %v369
        %v478 = vpack.c.bf16 %v372, %v370
        %v479 = vpack.c.bf16 %v375, %v373
        %v480 = vpack.c.bf16 %v376, %v374
        %v481 = vpack.c.bf16 %v379, %v377
        %v482 = vpack.c.bf16 %v380, %v378
        %v483 = vpack.c.bf16 %v383, %v381
        %v484 = vpack.c.bf16 %v384, %v382
        %v485 = vpack.c.bf16 %v387, %v385
        %v486 = vpack.c.bf16 %v388, %v386
        %v487 = vpack.c.bf16 %v391, %v389
        %v488 = vpack.c.bf16 %v392, %v390
        %v489 = vpack.c.bf16 %v395, %v393
        %v490 = vpack.c.bf16 %v396, %v394
        %v491 = vpack.c.bf16 %v399, %v397
        %v492 = vpack.c.bf16 %v400, %v398
        %v493 = vpack.c.bf16 %v403, %v401
        %v494 = vpack.c.bf16 %v404, %v402
        %v495 = vpack.c.bf16 %v407, %v405
        %v496 = vpack.c.bf16 %v408, %v406
        %v497 = vpack.c.bf16 %v411, %v409
        %v498 = vpack.c.bf16 %v412, %v410
        %v499 = vpack.c.bf16 %v415, %v413
        %v500 = vpack.c.bf16 %v416, %v414
        %v501 = vpack.c.bf16 %v419, %v417
        %v502 = vpack.c.bf16 %v420, %v418
        %v503 = vpack.c.bf16 %v423, %v421
        %v504 = vpack.c.bf16 %v424, %v422
        %v505 = vpack.c.bf16 %v427, %v425
        %v506 = vpack.c.bf16 %v428, %v426
        %v507 = vpack.c.bf16 %v431, %v429
        %v508 = vpack.c.bf16 %v432, %v430
        %v509 = vpack.c.bf16 %v435, %v433
        %v510 = vpack.c.bf16 %v436, %v434
        %v511 = vpack.c.bf16 %v439, %v437
        %v512 = vpack.c.bf16 %v440, %v438
        %v513 = vpack.c.bf16 %v443, %v441
        %v514 = vpack.c.bf16 %v444, %v442
        %v515 = vpack.c.bf16 %v447, %v445
        %v516 = vpack.c.bf16 %v448, %v446
        %v517 = vpack.c.bf16 %v451, %v449
        %v518 = vpack.c.bf16 %v452, %v450
        %v519 = vpack.c.bf16 %v455, %v453
        %v520 = vpack.c.bf16 %v456, %v454
        %v521 = vld [vmem:[#allocation6] sm:$0xff]
        %v522 = vld [vmem:[#allocation6 + $0x8] sm:$0xff]
        %v523 = vld [vmem:[#allocation6 + $0x10] sm:$0xff]
        %v524 = vld [vmem:[#allocation6 + $0x18] sm:$0xff]
        %v525 = vld [vmem:[#allocation6 + $0x20] sm:$0xff]
        %v526 = vld [vmem:[#allocation6 + $0x28] sm:$0xff]
        %v527 = vld [vmem:[#allocation6 + $0x30] sm:$0xff]
        %v528 = vld [vmem:[#allocation6 + $0x38] sm:$0xff]
        %v529 = vld [vmem:[#allocation6 + $0x40] sm:$0xff]
        %v530 = vld [vmem:[#allocation6 + $0x48] sm:$0xff]
        %v531 = vld [vmem:[#allocation6 + $0x50] sm:$0xff]
        %v532 = vld [vmem:[#allocation6 + $0x58] sm:$0xff]
        %v533 = vld [vmem:[#allocation6 + $0x60] sm:$0xff]
        %v534 = vld [vmem:[#allocation6 + $0x68] sm:$0xff]
        %v535 = vld [vmem:[#allocation6 + $0x70] sm:$0xff]
        %v536 = vld [vmem:[#allocation6 + $0x78] sm:$0xff]
        %v537 = vld [vmem:[#allocation6 + $0x80] sm:$0xff]
        %v538 = vld [vmem:[#allocation6 + $0x88] sm:$0xff]
        %v539 = vld [vmem:[#allocation6 + $0x90] sm:$0xff]
        %v540 = vld [vmem:[#allocation6 + $0x98] sm:$0xff]
        %v541 = vld [vmem:[#allocation6 + $0xa0] sm:$0xff]
        %v542 = vld [vmem:[#allocation6 + $0xa8] sm:$0xff]
        %v543 = vld [vmem:[#allocation6 + $0xb0] sm:$0xff]
        %v544 = vld [vmem:[#allocation6 + $0xb8] sm:$0xff]
        %v545 = vld [vmem:[#allocation6 + $0xc0] sm:$0xff]
        %v546 = vld [vmem:[#allocation6 + $0xc8] sm:$0xff]
        %v547 = vld [vmem:[#allocation6 + $0xd0] sm:$0xff]
        %v548 = vld [vmem:[#allocation6 + $0xd8] sm:$0xff]
        %v549 = vld [vmem:[#allocation6 + $0xe0] sm:$0xff]
        %v550 = vld [vmem:[#allocation6 + $0xe8] sm:$0xff]
        %v551 = vld [vmem:[#allocation6 + $0xf0] sm:$0xff]
        %v552 = vld [vmem:[#allocation6 + $0xf8] sm:$0xff]
        %v553 = vld [vmem:[%s2] sm:$0x3]
        %v555 = vlaneseq
        %v556 = vshrl.u32 %v555, 7
        %v557 = vsub.s32 0, %v556
        %v558 = vrot.slane %v553, %v557
        %v559 = vlaneseq
        %v560 = vshrl.u32 %v559, 7
        %v561 = vsub.s32 1, %v560
        %v562 = vrot.slane %v553, %v561
        %v597 = vunpack.c.l.b16 %v521
        %v598 = vunpack.c.h.b16 %v521
        %v599 = vunpack.c.l.b16 %v522
        %v600 = vunpack.c.h.b16 %v522
        %v601 = vunpack.c.l.b16 %v523
        %v602 = vunpack.c.h.b16 %v523
        %v603 = vunpack.c.l.b16 %v524
        %v604 = vunpack.c.h.b16 %v524
        %v605 = vunpack.c.l.b16 %v525
        %v606 = vunpack.c.h.b16 %v525
        %v607 = vunpack.c.l.b16 %v526
        %v608 = vunpack.c.h.b16 %v526
        %v609 = vunpack.c.l.b16 %v527
        %v610 = vunpack.c.h.b16 %v527
        %v611 = vunpack.c.l.b16 %v528
        %v612 = vunpack.c.h.b16 %v528
        %v613 = vunpack.c.l.b16 %v529
        %v614 = vunpack.c.h.b16 %v529
        %v615 = vunpack.c.l.b16 %v530
        %v616 = vunpack.c.h.b16 %v530
        %v617 = vunpack.c.l.b16 %v531
        %v618 = vunpack.c.h.b16 %v531
        %v619 = vunpack.c.l.b16 %v532
        %v620 = vunpack.c.h.b16 %v532
        %v621 = vunpack.c.l.b16 %v533
        %v622 = vunpack.c.h.b16 %v533
        %v623 = vunpack.c.l.b16 %v534
        %v624 = vunpack.c.h.b16 %v534
        %v625 = vunpack.c.l.b16 %v535
        %v626 = vunpack.c.h.b16 %v535
        %v627 = vunpack.c.l.b16 %v536
        %v628 = vunpack.c.h.b16 %v536
        %v629 = vunpack.c.l.b16 %v537
        %v630 = vunpack.c.h.b16 %v537
        %v631 = vunpack.c.l.b16 %v538
        %v632 = vunpack.c.h.b16 %v538
        %v633 = vunpack.c.l.b16 %v539
        %v634 = vunpack.c.h.b16 %v539
        %v635 = vunpack.c.l.b16 %v540
        %v636 = vunpack.c.h.b16 %v540
        %v637 = vunpack.c.l.b16 %v541
        %v638 = vunpack.c.h.b16 %v541
        %v639 = vunpack.c.l.b16 %v542
        %v640 = vunpack.c.h.b16 %v542
        %v641 = vunpack.c.l.b16 %v543
        %v642 = vunpack.c.h.b16 %v543
        %v643 = vunpack.c.l.b16 %v544
        %v644 = vunpack.c.h.b16 %v544
        %v645 = vunpack.c.l.b16 %v545
        %v646 = vunpack.c.h.b16 %v545
        %v647 = vunpack.c.l.b16 %v546
        %v648 = vunpack.c.h.b16 %v546
        %v649 = vunpack.c.l.b16 %v547
        %v650 = vunpack.c.h.b16 %v547
        %v651 = vunpack.c.l.b16 %v548
        %v652 = vunpack.c.h.b16 %v548
        %v653 = vunpack.c.l.b16 %v549
        %v654 = vunpack.c.h.b16 %v549
        %v655 = vunpack.c.l.b16 %v550
        %v656 = vunpack.c.h.b16 %v550
        %v657 = vunpack.c.l.b16 %v551
        %v658 = vunpack.c.h.b16 %v551
        %v659 = vunpack.c.l.b16 %v552
        %v660 = vunpack.c.h.b16 %v552
        %v661 = vpack.c.b16 %v599, %v597
        %v662 = vpack.c.b16 %v600, %v598
        %v663 = vpack.c.b16 %v603, %v601
        %v664 = vpack.c.b16 %v604, %v602
        %v665 = vpack.c.b16 %v607, %v605
        %v666 = vpack.c.b16 %v608, %v606
        %v667 = vpack.c.b16 %v611, %v609
        %v668 = vpack.c.b16 %v612, %v610
        %v669 = vpack.c.b16 %v615, %v613
        %v670 = vpack.c.b16 %v616, %v614
        %v671 = vpack.c.b16 %v619, %v617
        %v672 = vpack.c.b16 %v620, %v618
        %v673 = vpack.c.b16 %v623, %v621
        %v674 = vpack.c.b16 %v624, %v622
        %v675 = vpack.c.b16 %v627, %v625
        %v676 = vpack.c.b16 %v628, %v626
        %v677 = vpack.c.b16 %v631, %v629
        %v678 = vpack.c.b16 %v632, %v630
        %v679 = vpack.c.b16 %v635, %v633
        %v680 = vpack.c.b16 %v636, %v634
        %v681 = vpack.c.b16 %v639, %v637
        %v682 = vpack.c.b16 %v640, %v638
        %v683 = vpack.c.b16 %v643, %v641
        %v684 = vpack.c.b16 %v644, %v642
        %v685 = vpack.c.b16 %v647, %v645
        %v686 = vpack.c.b16 %v648, %v646
        %v687 = vpack.c.b16 %v651, %v649
        %v688 = vpack.c.b16 %v652, %v650
        %v689 = vpack.c.b16 %v655, %v653
        %v690 = vpack.c.b16 %v656, %v654
        %v691 = vpack.c.b16 %v659, %v657
        %v692 = vpack.c.b16 %v660, %v658
        %725 = vmatprep.subr.bf16.mxu0 %v662
        %726 = vmatpush1.bf16.msra.mxu0 %v661
        %727 = vmatprep.subr.bf16.mxu0 %v664
        %728 = vmatpush1.bf16.msra.mxu0 %v663
        %729 = vmatprep.subr.bf16.mxu0 %v666
        %730 = vmatpush1.bf16.msra.mxu0 %v665
        %731 = vmatprep.subr.bf16.mxu0 %v668
        %732 = vmatpush1.bf16.msra.mxu0 %v667
        %733 = vmatprep.subr.bf16.mxu0 %v670
        %734 = vmatpush1.bf16.msra.mxu0 %v669
        %735 = vmatprep.subr.bf16.mxu0 %v672
        %736 = vmatpush1.bf16.msra.mxu0 %v671
        %737 = vmatprep.subr.bf16.mxu0 %v674
        %738 = vmatpush1.bf16.msra.mxu0 %v673
        %739 = vmatprep.subr.bf16.mxu0 %v676
        %740 = vmatpush1.bf16.msra.mxu0 %v675
        %741 = vmatprep.subr.bf16.mxu0 %v678
        %742 = vmatpush1.bf16.msra.mxu0 %v677
        %743 = vmatprep.subr.bf16.mxu0 %v680
        %744 = vmatpush1.bf16.msra.mxu0 %v679
        %745 = vmatprep.subr.bf16.mxu0 %v682
        %746 = vmatpush1.bf16.msra.mxu0 %v681
        %747 = vmatprep.subr.bf16.mxu0 %v684
        %748 = vmatpush1.bf16.msra.mxu0 %v683
        %749 = vmatprep.subr.bf16.mxu0 %v686
        %750 = vmatpush1.bf16.msra.mxu0 %v685
        %751 = vmatprep.subr.bf16.mxu0 %v688
        %752 = vmatpush1.bf16.msra.mxu0 %v687
        %753 = vmatprep.subr.bf16.mxu0 %v690
        %754 = vmatpush1.bf16.msra.mxu0 %v689
        %755 = vmatprep.subr.bf16.mxu0 %v692
        %756 = vmatpush1.bf16.msra.mxu0 %v691
        %757 = vmatprep.mubr.bf16.mxu0 %v458
        %758 = vmatmul.mubr.bf16.gmra.mrb[0].mxu0 %v457
        %v759 = vpop.f32.mrb[0].mxu0
        %v760 = vadd.f32 %v558, %v759
        %v761 = vpop.f32.mrb[0].mxu0
        %v762 = vadd.f32 %v562, %v761
        %v763 = vpop.f32.mrb[0].mxu0
        %v764 = vadd.f32 %v558, %v763
        %v765 = vpop.f32.mrb[0].mxu0
        %v766 = vadd.f32 %v562, %v765
        %767 = vmatprep.mubr.bf16.mxu0 %v460
        %768 = vmatmul.mubr.bf16.gmra.mrb[0].mxu0 %v459
        %v769 = vpop.f32.mrb[0].mxu0
        %v770 = vadd.f32 %v558, %v769
        %v771 = vpop.f32.mrb[0].mxu0
        %v772 = vadd.f32 %v562, %v771
        %v773 = vpop.f32.mrb[0].mxu0
        %v774 = vadd.f32 %v558, %v773
        %v775 = vpop.f32.mrb[0].mxu0
        %v776 = vadd.f32 %v562, %v775
        %777 = vmatprep.mubr.bf16.mxu0 %v462
        %778 = vmatmul.mubr.bf16.gmra.mrb[0].mxu0 %v461
        %v779 = vpop.f32.mrb[0].mxu0
        %v780 = vadd.f32 %v558, %v779
        %v781 = vpop.f32.mrb[0].mxu0
        %v782 = vadd.f32 %v562, %v781
        %v783 = vpop.f32.mrb[0].mxu0
        %v784 = vadd.f32 %v558, %v783
        %v785 = vpop.f32.mrb[0].mxu0
        %v786 = vadd.f32 %v562, %v785
        %787 = vmatprep.mubr.bf16.mxu0 %v464
        %788 = vmatmul.mubr.bf16.gmra.mrb[0].mxu0 %v463
        %v789 = vpop.f32.mrb[0].mxu0
        %v790 = vadd.f32 %v558, %v789
        %v791 = vpop.f32.mrb[0].mxu0
        %v792 = vadd.f32 %v562, %v791
        %v793 = vpop.f32.mrb[0].mxu0
        %v794 = vadd.f32 %v558, %v793
        %v795 = vpop.f32.mrb[0].mxu0
        %v796 = vadd.f32 %v562, %v795
        %797 = vmatprep.mubr.bf16.mxu0 %v466
        %798 = vmatmul.mubr.bf16.gmra.mrb[0].mxu0 %v465
        %v799 = vpop.f32.mrb[0].mxu0
        %v800 = vadd.f32 %v558, %v799
        %v801 = vpop.f32.mrb[0].mxu0
        %v802 = vadd.f32 %v562, %v801
        %v803 = vpop.f32.mrb[0].mxu0
        %v804 = vadd.f32 %v558, %v803
        %v805 = vpop.f32.mrb[0].mxu0
        %v806 = vadd.f32 %v562, %v805
        %807 = vmatprep.mubr.bf16.mxu0 %v468
        %808 = vmatmul.mubr.bf16.gmra.mrb[0].mxu0 %v467
        %v809 = vpop.f32.mrb[0].mxu0
        %v810 = vadd.f32 %v558, %v809
        %v811 = vpop.f32.mrb[0].mxu0
        %v812 = vadd.f32 %v562, %v811
        %v813 = vpop.f32.mrb[0].mxu0
        %v814 = vadd.f32 %v558, %v813
        %v815 = vpop.f32.mrb[0].mxu0
        %v816 = vadd.f32 %v562, %v815
        %817 = vmatprep.mubr.bf16.mxu0 %v470
        %818 = vmatmul.mubr.bf16.gmra.mrb[0].mxu0 %v469
        %v819 = vpop.f32.mrb[0].mxu0
        %v820 = vadd.f32 %v558, %v819
        %v821 = vpop.f32.mrb[0].mxu0
        %v822 = vadd.f32 %v562, %v821
        %v823 = vpop.f32.mrb[0].mxu0
        %v824 = vadd.f32 %v558, %v823
        %v825 = vpop.f32.mrb[0].mxu0
        %v826 = vadd.f32 %v562, %v825
        %827 = vmatprep.mubr.bf16.mxu0 %v472
        %828 = vmatmul.mubr.bf16.gmra.mrb[0].mxu0 %v471
        %v829 = vpop.f32.mrb[0].mxu0
        %v830 = vadd.f32 %v558, %v829
        %v831 = vpop.f32.mrb[0].mxu0
        %v832 = vadd.f32 %v562, %v831
        %v833 = vpop.f32.mrb[0].mxu0
        %v834 = vadd.f32 %v558, %v833
        %v835 = vpop.f32.mrb[0].mxu0
        %v836 = vadd.f32 %v562, %v835
        %837 = vmatprep.mubr.bf16.mxu0 %v474
        %838 = vmatmul.mubr.bf16.gmra.mrb[0].mxu0 %v473
        %v839 = vpop.f32.mrb[0].mxu0
        %v840 = vadd.f32 %v558, %v839
        %v841 = vpop.f32.mrb[0].mxu0
        %v842 = vadd.f32 %v562, %v841
        %v843 = vpop.f32.mrb[0].mxu0
        %v844 = vadd.f32 %v558, %v843
        %v845 = vpop.f32.mrb[0].mxu0
        %v846 = vadd.f32 %v562, %v845
        %847 = vmatprep.mubr.bf16.mxu0 %v476
        %848 = vmatmul.mubr.bf16.gmra.mrb[0].mxu0 %v475
        %v849 = vpop.f32.mrb[0].mxu0
        %v850 = vadd.f32 %v558, %v849
        %v851 = vpop.f32.mrb[0].mxu0
        %v852 = vadd.f32 %v562, %v851
        %v853 = vpop.f32.mrb[0].mxu0
        %v854 = vadd.f32 %v558, %v853
        %v855 = vpop.f32.mrb[0].mxu0
        %v856 = vadd.f32 %v562, %v855
        %857 = vmatprep.mubr.bf16.mxu0 %v478
        %858 = vmatmul.mubr.bf16.gmra.mrb[0].mxu0 %v477
        %v859 = vpop.f32.mrb[0].mxu0
        %v860 = vadd.f32 %v558, %v859
        %v861 = vpop.f32.mrb[0].mxu0
        %v862 = vadd.f32 %v562, %v861
        %v863 = vpop.f32.mrb[0].mxu0
        %v864 = vadd.f32 %v558, %v863
        %v865 = vpop.f32.mrb[0].mxu0
        %v866 = vadd.f32 %v562, %v865
        %867 = vmatprep.mubr.bf16.mxu0 %v480
        %868 = vmatmul.mubr.bf16.gmra.mrb[0].mxu0 %v479
        %v869 = vpop.f32.mrb[0].mxu0
        %v870 = vadd.f32 %v558, %v869
        %v871 = vpop.f32.mrb[0].mxu0
        %v872 = vadd.f32 %v562, %v871
        %v873 = vpop.f32.mrb[0].mxu0
        %v874 = vadd.f32 %v558, %v873
        %v875 = vpop.f32.mrb[0].mxu0
        %v876 = vadd.f32 %v562, %v875
        %877 = vmatprep.mubr.bf16.mxu0 %v482
        %878 = vmatmul.mubr.bf16.gmra.mrb[0].mxu0 %v481
        %v879 = vpop.f32.mrb[0].mxu0
        %v880 = vadd.f32 %v558, %v879
        %v881 = vpop.f32.mrb[0].mxu0
        %v882 = vadd.f32 %v562, %v881
        %v883 = vpop.f32.mrb[0].mxu0
        %v884 = vadd.f32 %v558, %v883
        %v885 = vpop.f32.mrb[0].mxu0
        %v886 = vadd.f32 %v562, %v885
        %887 = vmatprep.mubr.bf16.mxu0 %v484
        %888 = vmatmul.mubr.bf16.gmra.mrb[0].mxu0 %v483
        %v889 = vpop.f32.mrb[0].mxu0
        %v890 = vadd.f32 %v558, %v889
        %v891 = vpop.f32.mrb[0].mxu0
        %v892 = vadd.f32 %v562, %v891
        %v893 = vpop.f32.mrb[0].mxu0
        %v894 = vadd.f32 %v558, %v893
        %v895 = vpop.f32.mrb[0].mxu0
        %v896 = vadd.f32 %v562, %v895
        %897 = vmatprep.mubr.bf16.mxu0 %v486
        %898 = vmatmul.mubr.bf16.gmra.mrb[0].mxu0 %v485
        %v899 = vpop.f32.mrb[0].mxu0
        %v900 = vadd.f32 %v558, %v899
        %v901 = vpop.f32.mrb[0].mxu0
        %v902 = vadd.f32 %v562, %v901
        %v903 = vpop.f32.mrb[0].mxu0
        %v904 = vadd.f32 %v558, %v903
        %v905 = vpop.f32.mrb[0].mxu0
        %v906 = vadd.f32 %v562, %v905
        %907 = vmatprep.mubr.bf16.mxu0 %v488
        %908 = vmatmul.mubr.bf16.gmra.mrb[0].mxu0 %v487
        %v909 = vpop.f32.mrb[0].mxu0
        %v910 = vadd.f32 %v558, %v909
        %v911 = vpop.f32.mrb[0].mxu0
        %v912 = vadd.f32 %v562, %v911
        %v913 = vpop.f32.mrb[0].mxu0
        %v914 = vadd.f32 %v558, %v913
        %v915 = vpop.f32.mrb[0].mxu0
        %v916 = vadd.f32 %v562, %v915
        %917 = vmatprep.mubr.bf16.mxu0 %v490
        %918 = vmatmul.mubr.bf16.gmra.mrb[0].mxu0 %v489
        %v919 = vpop.f32.mrb[0].mxu0
        %v920 = vadd.f32 %v558, %v919
        %v921 = vpop.f32.mrb[0].mxu0
        %v922 = vadd.f32 %v562, %v921
        %v923 = vpop.f32.mrb[0].mxu0
        %v924 = vadd.f32 %v558, %v923
        %v925 = vpop.f32.mrb[0].mxu0
        %v926 = vadd.f32 %v562, %v925
        %927 = vmatprep.mubr.bf16.mxu0 %v492
        %928 = vmatmul.mubr.bf16.gmra.mrb[0].mxu0 %v491
        %v929 = vpop.f32.mrb[0].mxu0
        %v930 = vadd.f32 %v558, %v929
        %v931 = vpop.f32.mrb[0].mxu0
        %v932 = vadd.f32 %v562, %v931
        %v933 = vpop.f32.mrb[0].mxu0
        %v934 = vadd.f32 %v558, %v933
        %v935 = vpop.f32.mrb[0].mxu0
        %v936 = vadd.f32 %v562, %v935
        %937 = vmatprep.mubr.bf16.mxu0 %v494
        %938 = vmatmul.mubr.bf16.gmra.mrb[0].mxu0 %v493
        %v939 = vpop.f32.mrb[0].mxu0
        %v940 = vadd.f32 %v558, %v939
        %v941 = vpop.f32.mrb[0].mxu0
        %v942 = vadd.f32 %v562, %v941
        %v943 = vpop.f32.mrb[0].mxu0
        %v944 = vadd.f32 %v558, %v943
        %v945 = vpop.f32.mrb[0].mxu0
        %v946 = vadd.f32 %v562, %v945
        %947 = vmatprep.mubr.bf16.mxu0 %v496
        %948 = vmatmul.mubr.bf16.gmra.mrb[0].mxu0 %v495
        %v949 = vpop.f32.mrb[0].mxu0
        %v950 = vadd.f32 %v558, %v949
        %v951 = vpop.f32.mrb[0].mxu0
        %v952 = vadd.f32 %v562, %v951
        %v953 = vpop.f32.mrb[0].mxu0
        %v954 = vadd.f32 %v558, %v953
        %v955 = vpop.f32.mrb[0].mxu0
        %v956 = vadd.f32 %v562, %v955
        %957 = vmatprep.mubr.bf16.mxu0 %v498
        %958 = vmatmul.mubr.bf16.gmra.mrb[0].mxu0 %v497
        %v959 = vpop.f32.mrb[0].mxu0
        %v960 = vadd.f32 %v558, %v959
        %v961 = vpop.f32.mrb[0].mxu0
        %v962 = vadd.f32 %v562, %v961
        %v963 = vpop.f32.mrb[0].mxu0
        %v964 = vadd.f32 %v558, %v963
        %v965 = vpop.f32.mrb[0].mxu0
        %v966 = vadd.f32 %v562, %v965
        %967 = vmatprep.mubr.bf16.mxu0 %v500
        %968 = vmatmul.mubr.bf16.gmra.mrb[0].mxu0 %v499
        %v969 = vpop.f32.mrb[0].mxu0
        %v970 = vadd.f32 %v558, %v969
        %v971 = vpop.f32.mrb[0].mxu0
        %v972 = vadd.f32 %v562, %v971
        %v973 = vpop.f32.mrb[0].mxu0
        %v974 = vadd.f32 %v558, %v973
        %v975 = vpop.f32.mrb[0].mxu0
        %v976 = vadd.f32 %v562, %v975
        %977 = vmatprep.mubr.bf16.mxu0 %v502
        %978 = vmatmul.mubr.bf16.gmra.mrb[0].mxu0 %v501
        %v979 = vpop.f32.mrb[0].mxu0
        %v980 = vadd.f32 %v558, %v979
        %v981 = vpop.f32.mrb[0].mxu0
        %v982 = vadd.f32 %v562, %v981
        %v983 = vpop.f32.mrb[0].mxu0
        %v984 = vadd.f32 %v558, %v983
        %v985 = vpop.f32.mrb[0].mxu0
        %v986 = vadd.f32 %v562, %v985
        %987 = vmatprep.mubr.bf16.mxu0 %v504
        %988 = vmatmul.mubr.bf16.gmra.mrb[0].mxu0 %v503
        %v989 = vpop.f32.mrb[0].mxu0
        %v990 = vadd.f32 %v558, %v989
        %v991 = vpop.f32.mrb[0].mxu0
        %v992 = vadd.f32 %v562, %v991
        %v993 = vpop.f32.mrb[0].mxu0
        %v994 = vadd.f32 %v558, %v993
        %v995 = vpop.f32.mrb[0].mxu0
        %v996 = vadd.f32 %v562, %v995
        %997 = vmatprep.mubr.bf16.mxu0 %v506
        %998 = vmatmul.mubr.bf16.gmra.mrb[0].mxu0 %v505
        %v999 = vpop.f32.mrb[0].mxu0
        %v1000 = vadd.f32 %v558, %v999
        %v1001 = vpop.f32.mrb[0].mxu0
        %v1002 = vadd.f32 %v562, %v1001
        %v1003 = vpop.f32.mrb[0].mxu0
        %v1004 = vadd.f32 %v558, %v1003
        %v1005 = vpop.f32.mrb[0].mxu0
        %v1006 = vadd.f32 %v562, %v1005
        %1007 = vmatprep.mubr.bf16.mxu0 %v508
        %1008 = vmatmul.mubr.bf16.gmra.mrb[0].mxu0 %v507
        %v1009 = vpop.f32.mrb[0].mxu0
        %v1010 = vadd.f32 %v558, %v1009
        %v1011 = vpop.f32.mrb[0].mxu0
        %v1012 = vadd.f32 %v562, %v1011
        %v1013 = vpop.f32.mrb[0].mxu0
        %v1014 = vadd.f32 %v558, %v1013
        %v1015 = vpop.f32.mrb[0].mxu0
        %v1016 = vadd.f32 %v562, %v1015
        %1017 = vmatprep.mubr.bf16.mxu0 %v510
        %1018 = vmatmul.mubr.bf16.gmra.mrb[0].mxu0 %v509
        %v1019 = vpop.f32.mrb[0].mxu0
        %v1020 = vadd.f32 %v558, %v1019
        %v1021 = vpop.f32.mrb[0].mxu0
        %v1022 = vadd.f32 %v562, %v1021
        %v1023 = vpop.f32.mrb[0].mxu0
        %v1024 = vadd.f32 %v558, %v1023
        %v1025 = vpop.f32.mrb[0].mxu0
        %v1026 = vadd.f32 %v562, %v1025
        %1027 = vmatprep.mubr.bf16.mxu0 %v512
        %1028 = vmatmul.mubr.bf16.gmra.mrb[0].mxu0 %v511
        %v1029 = vpop.f32.mrb[0].mxu0
        %v1030 = vadd.f32 %v558, %v1029
        %v1031 = vpop.f32.mrb[0].mxu0
        %v1032 = vadd.f32 %v562, %v1031
        %v1033 = vpop.f32.mrb[0].mxu0
        %v1034 = vadd.f32 %v558, %v1033
        %v1035 = vpop.f32.mrb[0].mxu0
        %v1036 = vadd.f32 %v562, %v1035
        %1037 = vmatprep.mubr.bf16.mxu0 %v514
        %1038 = vmatmul.mubr.bf16.gmra.mrb[0].mxu0 %v513
        %v1039 = vpop.f32.mrb[0].mxu0
        %v1040 = vadd.f32 %v558, %v1039
        %v1041 = vpop.f32.mrb[0].mxu0
        %v1042 = vadd.f32 %v562, %v1041
        %v1043 = vpop.f32.mrb[0].mxu0
        %v1044 = vadd.f32 %v558, %v1043
        %v1045 = vpop.f32.mrb[0].mxu0
        %v1046 = vadd.f32 %v562, %v1045
        %1047 = vmatprep.mubr.bf16.mxu0 %v516
        %1048 = vmatmul.mubr.bf16.gmra.mrb[0].mxu0 %v515
        %v1049 = vpop.f32.mrb[0].mxu0
        %v1050 = vadd.f32 %v558, %v1049
        %v1051 = vpop.f32.mrb[0].mxu0
        %v1052 = vadd.f32 %v562, %v1051
        %v1053 = vpop.f32.mrb[0].mxu0
        %v1054 = vadd.f32 %v558, %v1053
        %v1055 = vpop.f32.mrb[0].mxu0
        %v1056 = vadd.f32 %v562, %v1055
        %1057 = vmatprep.mubr.bf16.mxu0 %v518
        %1058 = vmatmul.mubr.bf16.gmra.mrb[0].mxu0 %v517
        %v1059 = vpop.f32.mrb[0].mxu0
        %v1060 = vadd.f32 %v558, %v1059
        %v1061 = vpop.f32.mrb[0].mxu0
        %v1062 = vadd.f32 %v562, %v1061
        %v1063 = vpop.f32.mrb[0].mxu0
        %v1064 = vadd.f32 %v558, %v1063
        %v1065 = vpop.f32.mrb[0].mxu0
        %v1066 = vadd.f32 %v562, %v1065
        %1067 = vmatprep.mubr.bf16.mxu0 %v520
        %1068 = vmatmul.mubr.bf16.gmra.mrb[0].mxu0 %v519
        %v1069 = vpop.f32.mrb[0].mxu0
        %v1070 = vadd.f32 %v558, %v1069
        %v1071 = vpop.f32.mrb[0].mxu0
        %v1072 = vadd.f32 %v562, %v1071
        %v1073 = vpop.f32.mrb[0].mxu0
        %v1074 = vadd.f32 %v558, %v1073
        %v1075 = vpop.f32.mrb[0].mxu0
        %v1076 = vadd.f32 %v562, %v1075
        %1077 = vdwg.mxu0
        %v1078 = vmul.f32 %v760, 0.2
        %v1079 = vmul.f32 %v762, 0.2
        %v1080 = vmul.f32 %v764, 0.2
        %v1081 = vmul.f32 %v766, 0.2
        %v1082 = vmul.f32 %v770, 0.2
        %v1083 = vmul.f32 %v772, 0.2
        %v1084 = vmul.f32 %v774, 0.2
        %v1085 = vmul.f32 %v776, 0.2
        %v1086 = vmul.f32 %v780, 0.2
        %v1087 = vmul.f32 %v782, 0.2
        %v1088 = vmul.f32 %v784, 0.2
        %v1089 = vmul.f32 %v786, 0.2
        %v1090 = vmul.f32 %v790, 0.2
        %v1091 = vmul.f32 %v792, 0.2
        %v1092 = vmul.f32 %v794, 0.2
        %v1093 = vmul.f32 %v796, 0.2
        %v1094 = vmul.f32 %v800, 0.2
        %v1095 = vmul.f32 %v802, 0.2
        %v1096 = vmul.f32 %v804, 0.2
        %v1097 = vmul.f32 %v806, 0.2
        %v1098 = vmul.f32 %v810, 0.2
        %v1099 = vmul.f32 %v812, 0.2
        %v1100 = vmul.f32 %v814, 0.2
        %v1101 = vmul.f32 %v816, 0.2
        %v1102 = vmul.f32 %v820, 0.2
        %v1103 = vmul.f32 %v822, 0.2
        %v1104 = vmul.f32 %v824, 0.2
        %v1105 = vmul.f32 %v826, 0.2
        %v1106 = vmul.f32 %v830, 0.2
        %v1107 = vmul.f32 %v832, 0.2
        %v1108 = vmul.f32 %v834, 0.2
        %v1109 = vmul.f32 %v836, 0.2
        %v1110 = vmul.f32 %v840, 0.2
        %v1111 = vmul.f32 %v842, 0.2
        %v1112 = vmul.f32 %v844, 0.2
        %v1113 = vmul.f32 %v846, 0.2
        %v1114 = vmul.f32 %v850, 0.2
        %v1115 = vmul.f32 %v852, 0.2
        %v1116 = vmul.f32 %v854, 0.2
        %v1117 = vmul.f32 %v856, 0.2
        %v1118 = vmul.f32 %v860, 0.2
        %v1119 = vmul.f32 %v862, 0.2
        %v1120 = vmul.f32 %v864, 0.2
        %v1121 = vmul.f32 %v866, 0.2
        %v1122 = vmul.f32 %v870, 0.2
        %v1123 = vmul.f32 %v872, 0.2
        %v1124 = vmul.f32 %v874, 0.2
        %v1125 = vmul.f32 %v876, 0.2
        %v1126 = vmul.f32 %v880, 0.2
        %v1127 = vmul.f32 %v882, 0.2
        %v1128 = vmul.f32 %v884, 0.2
        %v1129 = vmul.f32 %v886, 0.2
        %v1130 = vmul.f32 %v890, 0.2
        %v1131 = vmul.f32 %v892, 0.2
        %v1132 = vmul.f32 %v894, 0.2
        %v1133 = vmul.f32 %v896, 0.2
        %v1134 = vmul.f32 %v900, 0.2
        %v1135 = vmul.f32 %v902, 0.2
        %v1136 = vmul.f32 %v904, 0.2
        %v1137 = vmul.f32 %v906, 0.2
        %v1138 = vmul.f32 %v910, 0.2
        %v1139 = vmul.f32 %v912, 0.2
        %v1140 = vmul.f32 %v914, 0.2
        %v1141 = vmul.f32 %v916, 0.2
        %v1142 = vmul.f32 %v920, 0.2
        %v1143 = vmul.f32 %v922, 0.2
        %v1144 = vmul.f32 %v924, 0.2
        %v1145 = vmul.f32 %v926, 0.2
        %v1146 = vmul.f32 %v930, 0.2
        %v1147 = vmul.f32 %v932, 0.2
        %v1148 = vmul.f32 %v934, 0.2
        %v1149 = vmul.f32 %v936, 0.2
        %v1150 = vmul.f32 %v940, 0.2
        %v1151 = vmul.f32 %v942, 0.2
        %v1152 = vmul.f32 %v944, 0.2
        %v1153 = vmul.f32 %v946, 0.2
        %v1154 = vmul.f32 %v950, 0.2
        %v1155 = vmul.f32 %v952, 0.2
        %v1156 = vmul.f32 %v954, 0.2
        %v1157 = vmul.f32 %v956, 0.2
        %v1158 = vmul.f32 %v960, 0.2
        %v1159 = vmul.f32 %v962, 0.2
        %v1160 = vmul.f32 %v964, 0.2
        %v1161 = vmul.f32 %v966, 0.2
        %v1162 = vmul.f32 %v970, 0.2
        %v1163 = vmul.f32 %v972, 0.2
        %v1164 = vmul.f32 %v974, 0.2
        %v1165 = vmul.f32 %v976, 0.2
        %v1166 = vmul.f32 %v980, 0.2
        %v1167 = vmul.f32 %v982, 0.2
        %v1168 = vmul.f32 %v984, 0.2
        %v1169 = vmul.f32 %v986, 0.2
        %v1170 = vmul.f32 %v990, 0.2
        %v1171 = vmul.f32 %v992, 0.2
        %v1172 = vmul.f32 %v994, 0.2
        %v1173 = vmul.f32 %v996, 0.2
        %v1174 = vmul.f32 %v1000, 0.2
        %v1175 = vmul.f32 %v1002, 0.2
        %v1176 = vmul.f32 %v1004, 0.2
        %v1177 = vmul.f32 %v1006, 0.2
        %v1178 = vmul.f32 %v1010, 0.2
        %v1179 = vmul.f32 %v1012, 0.2
        %v1180 = vmul.f32 %v1014, 0.2
        %v1181 = vmul.f32 %v1016, 0.2
        %v1182 = vmul.f32 %v1020, 0.2
        %v1183 = vmul.f32 %v1022, 0.2
        %v1184 = vmul.f32 %v1024, 0.2
        %v1185 = vmul.f32 %v1026, 0.2
        %v1186 = vmul.f32 %v1030, 0.2
        %v1187 = vmul.f32 %v1032, 0.2
        %v1188 = vmul.f32 %v1034, 0.2
        %v1189 = vmul.f32 %v1036, 0.2
        %v1190 = vmul.f32 %v1040, 0.2
        %v1191 = vmul.f32 %v1042, 0.2
        %v1192 = vmul.f32 %v1044, 0.2
        %v1193 = vmul.f32 %v1046, 0.2
        %v1194 = vmul.f32 %v1050, 0.2
        %v1195 = vmul.f32 %v1052, 0.2
        %v1196 = vmul.f32 %v1054, 0.2
        %v1197 = vmul.f32 %v1056, 0.2
        %v1198 = vmul.f32 %v1060, 0.2
        %v1199 = vmul.f32 %v1062, 0.2
        %v1200 = vmul.f32 %v1064, 0.2
        %v1201 = vmul.f32 %v1066, 0.2
        %v1202 = vmul.f32 %v1070, 0.2
        %v1203 = vmul.f32 %v1072, 0.2
        %v1204 = vmul.f32 %v1074, 0.2
        %v1205 = vmul.f32 %v1076, 0.2
        %v1206 = vmax.f32 %v760, %v1078
        %v1207 = vmax.f32 %v762, %v1079
        %v1208 = vmax.f32 %v764, %v1080
        %v1209 = vmax.f32 %v766, %v1081
        %v1210 = vmax.f32 %v770, %v1082
        %v1211 = vmax.f32 %v772, %v1083
        %v1212 = vmax.f32 %v774, %v1084
        %v1213 = vmax.f32 %v776, %v1085
        %v1214 = vmax.f32 %v780, %v1086
        %v1215 = vmax.f32 %v782, %v1087
        %v1216 = vmax.f32 %v784, %v1088
        %v1217 = vmax.f32 %v786, %v1089
        %v1218 = vmax.f32 %v790, %v1090
        %v1219 = vmax.f32 %v792, %v1091
        %v1220 = vmax.f32 %v794, %v1092
        %v1221 = vmax.f32 %v796, %v1093
        %v1222 = vmax.f32 %v800, %v1094
        %v1223 = vmax.f32 %v802, %v1095
        %v1224 = vmax.f32 %v804, %v1096
        %v1225 = vmax.f32 %v806, %v1097
        %v1226 = vmax.f32 %v810, %v1098
        %v1227 = vmax.f32 %v812, %v1099
        %v1228 = vmax.f32 %v814, %v1100
        %v1229 = vmax.f32 %v816, %v1101
        %v1230 = vmax.f32 %v820, %v1102
        %v1231 = vmax.f32 %v822, %v1103
        %v1232 = vmax.f32 %v824, %v1104
        %v1233 = vmax.f32 %v826, %v1105
        %v1234 = vmax.f32 %v830, %v1106
        %v1235 = vmax.f32 %v832, %v1107
        %v1236 = vmax.f32 %v834, %v1108
        %v1237 = vmax.f32 %v836, %v1109
        %v1238 = vmax.f32 %v840, %v1110
        %v1239 = vmax.f32 %v842, %v1111
        %v1240 = vmax.f32 %v844, %v1112
        %v1241 = vmax.f32 %v846, %v1113
        %v1242 = vmax.f32 %v850, %v1114
        %v1243 = vmax.f32 %v852, %v1115
        %v1244 = vmax.f32 %v854, %v1116
        %v1245 = vmax.f32 %v856, %v1117
        %v1246 = vmax.f32 %v860, %v1118
        %v1247 = vmax.f32 %v862, %v1119
        %v1248 = vmax.f32 %v864, %v1120
        %v1249 = vmax.f32 %v866, %v1121
        %v1250 = vmax.f32 %v870, %v1122
        %v1251 = vmax.f32 %v872, %v1123
        %v1252 = vmax.f32 %v874, %v1124
        %v1253 = vmax.f32 %v876, %v1125
        %v1254 = vmax.f32 %v880, %v1126
        %v1255 = vmax.f32 %v882, %v1127
        %v1256 = vmax.f32 %v884, %v1128
        %v1257 = vmax.f32 %v886, %v1129
        %v1258 = vmax.f32 %v890, %v1130
        %v1259 = vmax.f32 %v892, %v1131
        %v1260 = vmax.f32 %v894, %v1132
        %v1261 = vmax.f32 %v896, %v1133
        %v1262 = vmax.f32 %v900, %v1134
        %v1263 = vmax.f32 %v902, %v1135
        %v1264 = vmax.f32 %v904, %v1136
        %v1265 = vmax.f32 %v906, %v1137
        %v1266 = vmax.f32 %v910, %v1138
        %v1267 = vmax.f32 %v912, %v1139
        %v1268 = vmax.f32 %v914, %v1140
        %v1269 = vmax.f32 %v916, %v1141
        %v1270 = vmax.f32 %v920, %v1142
        %v1271 = vmax.f32 %v922, %v1143
        %v1272 = vmax.f32 %v924, %v1144
        %v1273 = vmax.f32 %v926, %v1145
        %v1274 = vmax.f32 %v930, %v1146
        %v1275 = vmax.f32 %v932, %v1147
        %v1276 = vmax.f32 %v934, %v1148
        %v1277 = vmax.f32 %v936, %v1149
        %v1278 = vmax.f32 %v940, %v1150
        %v1279 = vmax.f32 %v942, %v1151
        %v1280 = vmax.f32 %v944, %v1152
        %v1281 = vmax.f32 %v946, %v1153
        %v1282 = vmax.f32 %v950, %v1154
        %v1283 = vmax.f32 %v952, %v1155
        %v1284 = vmax.f32 %v954, %v1156
        %v1285 = vmax.f32 %v956, %v1157
        %v1286 = vmax.f32 %v960, %v1158
        %v1287 = vmax.f32 %v962, %v1159
        %v1288 = vmax.f32 %v964, %v1160
        %v1289 = vmax.f32 %v966, %v1161
        %v1290 = vmax.f32 %v970, %v1162
        %v1291 = vmax.f32 %v972, %v1163
        %v1292 = vmax.f32 %v974, %v1164
        %v1293 = vmax.f32 %v976, %v1165
        %v1294 = vmax.f32 %v980, %v1166
        %v1295 = vmax.f32 %v982, %v1167
        %v1296 = vmax.f32 %v984, %v1168
        %v1297 = vmax.f32 %v986, %v1169
        %v1298 = vmax.f32 %v990, %v1170
        %v1299 = vmax.f32 %v992, %v1171
        %v1300 = vmax.f32 %v994, %v1172
        %v1301 = vmax.f32 %v996, %v1173
        %v1302 = vmax.f32 %v1000, %v1174
        %v1303 = vmax.f32 %v1002, %v1175
        %v1304 = vmax.f32 %v1004, %v1176
        %v1305 = vmax.f32 %v1006, %v1177
        %v1306 = vmax.f32 %v1010, %v1178
        %v1307 = vmax.f32 %v1012, %v1179
        %v1308 = vmax.f32 %v1014, %v1180
        %v1309 = vmax.f32 %v1016, %v1181
        %v1310 = vmax.f32 %v1020, %v1182
        %v1311 = vmax.f32 %v1022, %v1183
        %v1312 = vmax.f32 %v1024, %v1184
        %v1313 = vmax.f32 %v1026, %v1185
        %v1314 = vmax.f32 %v1030, %v1186
        %v1315 = vmax.f32 %v1032, %v1187
        %v1316 = vmax.f32 %v1034, %v1188
        %v1317 = vmax.f32 %v1036, %v1189
        %v1318 = vmax.f32 %v1040, %v1190
        %v1319 = vmax.f32 %v1042, %v1191
        %v1320 = vmax.f32 %v1044, %v1192
        %v1321 = vmax.f32 %v1046, %v1193
        %v1322 = vmax.f32 %v1050, %v1194
        %v1323 = vmax.f32 %v1052, %v1195
        %v1324 = vmax.f32 %v1054, %v1196
        %v1325 = vmax.f32 %v1056, %v1197
        %v1326 = vmax.f32 %v1060, %v1198
        %v1327 = vmax.f32 %v1062, %v1199
        %v1328 = vmax.f32 %v1064, %v1200
        %v1329 = vmax.f32 %v1066, %v1201
        %v1330 = vmax.f32 %v1070, %v1202
        %v1331 = vmax.f32 %v1072, %v1203
        %v1332 = vmax.f32 %v1074, %v1204
        %v1333 = vmax.f32 %v1076, %v1205
        %v1334 = vpack.c.bf16 %v1208, %v1206
        %v1335 = vpack.c.bf16 %v1209, %v1207
        %v1336 = vpack.c.bf16 %v1212, %v1210
        %v1337 = vpack.c.bf16 %v1213, %v1211
        %v1338 = vpack.c.bf16 %v1216, %v1214
        %v1339 = vpack.c.bf16 %v1217, %v1215
        %v1340 = vpack.c.bf16 %v1220, %v1218
        %v1341 = vpack.c.bf16 %v1221, %v1219
        %v1342 = vpack.c.bf16 %v1224, %v1222
        %v1343 = vpack.c.bf16 %v1225, %v1223
        %v1344 = vpack.c.bf16 %v1228, %v1226
        %v1345 = vpack.c.bf16 %v1229, %v1227
        %v1346 = vpack.c.bf16 %v1232, %v1230
        %v1347 = vpack.c.bf16 %v1233, %v1231
        %v1348 = vpack.c.bf16 %v1236, %v1234
        %v1349 = vpack.c.bf16 %v1237, %v1235
        %v1350 = vpack.c.bf16 %v1240, %v1238
        %v1351 = vpack.c.bf16 %v1241, %v1239
        %v1352 = vpack.c.bf16 %v1244, %v1242
        %v1353 = vpack.c.bf16 %v1245, %v1243
        %v1354 = vpack.c.bf16 %v1248, %v1246
        %v1355 = vpack.c.bf16 %v1249, %v1247
        %v1356 = vpack.c.bf16 %v1252, %v1250
        %v1357 = vpack.c.bf16 %v1253, %v1251
        %v1358 = vpack.c.bf16 %v1256, %v1254
        %v1359 = vpack.c.bf16 %v1257, %v1255
        %v1360 = vpack.c.bf16 %v1260, %v1258
        %v1361 = vpack.c.bf16 %v1261, %v1259
        %v1362 = vpack.c.bf16 %v1264, %v1262
        %v1363 = vpack.c.bf16 %v1265, %v1263
        %v1364 = vpack.c.bf16 %v1268, %v1266
        %v1365 = vpack.c.bf16 %v1269, %v1267
        %v1366 = vpack.c.bf16 %v1272, %v1270
        %v1367 = vpack.c.bf16 %v1273, %v1271
        %v1368 = vpack.c.bf16 %v1276, %v1274
        %v1369 = vpack.c.bf16 %v1277, %v1275
        %v1370 = vpack.c.bf16 %v1280, %v1278
        %v1371 = vpack.c.bf16 %v1281, %v1279
        %v1372 = vpack.c.bf16 %v1284, %v1282
        %v1373 = vpack.c.bf16 %v1285, %v1283
        %v1374 = vpack.c.bf16 %v1288, %v1286
        %v1375 = vpack.c.bf16 %v1289, %v1287
        %v1376 = vpack.c.bf16 %v1292, %v1290
        %v1377 = vpack.c.bf16 %v1293, %v1291
        %v1378 = vpack.c.bf16 %v1296, %v1294
        %v1379 = vpack.c.bf16 %v1297, %v1295
        %v1380 = vpack.c.bf16 %v1300, %v1298
        %v1381 = vpack.c.bf16 %v1301, %v1299
        %v1382 = vpack.c.bf16 %v1304, %v1302
        %v1383 = vpack.c.bf16 %v1305, %v1303
        %v1384 = vpack.c.bf16 %v1308, %v1306
        %v1385 = vpack.c.bf16 %v1309, %v1307
        %v1386 = vpack.c.bf16 %v1312, %v1310
        %v1387 = vpack.c.bf16 %v1313, %v1311
        %v1388 = vpack.c.bf16 %v1316, %v1314
        %v1389 = vpack.c.bf16 %v1317, %v1315
        %v1390 = vpack.c.bf16 %v1320, %v1318
        %v1391 = vpack.c.bf16 %v1321, %v1319
        %v1392 = vpack.c.bf16 %v1324, %v1322
        %v1393 = vpack.c.bf16 %v1325, %v1323
        %v1394 = vpack.c.bf16 %v1328, %v1326
        %v1395 = vpack.c.bf16 %v1329, %v1327
        %v1396 = vpack.c.bf16 %v1332, %v1330
        %v1397 = vpack.c.bf16 %v1333, %v1331
        %v1398 = vld [vmem:[#allocation8] sm:$0xff]
        %v1399 = vld [vmem:[#allocation8 + $0x8] sm:$0xff]
        %v1400 = vld [vmem:[#allocation8 + $0x10] sm:$0xff]
        %v1401 = vld [vmem:[#allocation8 + $0x18] sm:$0xff]
        %v1402 = vld [vmem:[#allocation8 + $0x20] sm:$0xff]
        %v1403 = vld [vmem:[#allocation8 + $0x28] sm:$0xff]
        %v1404 = vld [vmem:[#allocation8 + $0x30] sm:$0xff]
        %v1405 = vld [vmem:[#allocation8 + $0x38] sm:$0xff]
        %v1406 = vld [vmem:[#allocation8 + $0x40] sm:$0xff]
        %v1407 = vld [vmem:[#allocation8 + $0x48] sm:$0xff]
        %v1408 = vld [vmem:[#allocation8 + $0x50] sm:$0xff]
        %v1409 = vld [vmem:[#allocation8 + $0x58] sm:$0xff]
        %v1410 = vld [vmem:[#allocation8 + $0x60] sm:$0xff]
        %v1411 = vld [vmem:[#allocation8 + $0x68] sm:$0xff]
        %v1412 = vld [vmem:[#allocation8 + $0x70] sm:$0xff]
        %v1413 = vld [vmem:[#allocation8 + $0x78] sm:$0xff]
        %v1414 = vld [vmem:[#allocation8 + $0x80] sm:$0xff]
        %v1415 = vld [vmem:[#allocation8 + $0x88] sm:$0xff]
        %v1416 = vld [vmem:[#allocation8 + $0x90] sm:$0xff]
        %v1417 = vld [vmem:[#allocation8 + $0x98] sm:$0xff]
        %v1418 = vld [vmem:[#allocation8 + $0xa0] sm:$0xff]
        %v1419 = vld [vmem:[#allocation8 + $0xa8] sm:$0xff]
        %v1420 = vld [vmem:[#allocation8 + $0xb0] sm:$0xff]
        %v1421 = vld [vmem:[#allocation8 + $0xb8] sm:$0xff]
        %v1422 = vld [vmem:[#allocation8 + $0xc0] sm:$0xff]
        %v1423 = vld [vmem:[#allocation8 + $0xc8] sm:$0xff]
        %v1424 = vld [vmem:[#allocation8 + $0xd0] sm:$0xff]
        %v1425 = vld [vmem:[#allocation8 + $0xd8] sm:$0xff]
        %v1426 = vld [vmem:[#allocation8 + $0xe0] sm:$0xff]
        %v1427 = vld [vmem:[#allocation8 + $0xe8] sm:$0xff]
        %v1428 = vld [vmem:[#allocation8 + $0xf0] sm:$0xff]
        %v1429 = vld [vmem:[#allocation8 + $0xf8] sm:$0xff]
        %v1430 = vld [vmem:[%s4] sm:$0x3]
        %v1432 = vlaneseq
        %v1433 = vshrl.u32 %v1432, 7
        %v1434 = vsub.s32 0, %v1433
        %v1435 = vrot.slane %v1430, %v1434
        %v1436 = vlaneseq
        %v1437 = vshrl.u32 %v1436, 7
        %v1438 = vsub.s32 1, %v1437
        %v1439 = vrot.slane %v1430, %v1438
        %v1474 = vunpack.c.l.b16 %v1398
        %v1475 = vunpack.c.h.b16 %v1398
        %v1476 = vunpack.c.l.b16 %v1399
        %v1477 = vunpack.c.h.b16 %v1399
        %v1478 = vunpack.c.l.b16 %v1400
        %v1479 = vunpack.c.h.b16 %v1400
        %v1480 = vunpack.c.l.b16 %v1401
        %v1481 = vunpack.c.h.b16 %v1401
        %v1482 = vunpack.c.l.b16 %v1402
        %v1483 = vunpack.c.h.b16 %v1402
        %v1484 = vunpack.c.l.b16 %v1403
        %v1485 = vunpack.c.h.b16 %v1403
        %v1486 = vunpack.c.l.b16 %v1404
        %v1487 = vunpack.c.h.b16 %v1404
        %v1488 = vunpack.c.l.b16 %v1405
        %v1489 = vunpack.c.h.b16 %v1405
        %v1490 = vunpack.c.l.b16 %v1406
        %v1491 = vunpack.c.h.b16 %v1406
        %v1492 = vunpack.c.l.b16 %v1407
        %v1493 = vunpack.c.h.b16 %v1407
        %v1494 = vunpack.c.l.b16 %v1408
        %v1495 = vunpack.c.h.b16 %v1408
        %v1496 = vunpack.c.l.b16 %v1409
        %v1497 = vunpack.c.h.b16 %v1409
        %v1498 = vunpack.c.l.b16 %v1410
        %v1499 = vunpack.c.h.b16 %v1410
        %v1500 = vunpack.c.l.b16 %v1411
        %v1501 = vunpack.c.h.b16 %v1411
        %v1502 = vunpack.c.l.b16 %v1412
        %v1503 = vunpack.c.h.b16 %v1412
        %v1504 = vunpack.c.l.b16 %v1413
        %v1505 = vunpack.c.h.b16 %v1413
        %v1506 = vunpack.c.l.b16 %v1414
        %v1507 = vunpack.c.h.b16 %v1414
        %v1508 = vunpack.c.l.b16 %v1415
        %v1509 = vunpack.c.h.b16 %v1415
        %v1510 = vunpack.c.l.b16 %v1416
        %v1511 = vunpack.c.h.b16 %v1416
        %v1512 = vunpack.c.l.b16 %v1417
        %v1513 = vunpack.c.h.b16 %v1417
        %v1514 = vunpack.c.l.b16 %v1418
        %v1515 = vunpack.c.h.b16 %v1418
        %v1516 = vunpack.c.l.b16 %v1419
        %v1517 = vunpack.c.h.b16 %v1419
        %v1518 = vunpack.c.l.b16 %v1420
        %v1519 = vunpack.c.h.b16 %v1420
        %v1520 = vunpack.c.l.b16 %v1421
        %v1521 = vunpack.c.h.b16 %v1421
        %v1522 = vunpack.c.l.b16 %v1422
        %v1523 = vunpack.c.h.b16 %v1422
        %v1524 = vunpack.c.l.b16 %v1423
        %v1525 = vunpack.c.h.b16 %v1423
        %v1526 = vunpack.c.l.b16 %v1424
        %v1527 = vunpack.c.h.b16 %v1424
        %v1528 = vunpack.c.l.b16 %v1425
        %v1529 = vunpack.c.h.b16 %v1425
        %v1530 = vunpack.c.l.b16 %v1426
        %v1531 = vunpack.c.h.b16 %v1426
        %v1532 = vunpack.c.l.b16 %v1427
        %v1533 = vunpack.c.h.b16 %v1427
        %v1534 = vunpack.c.l.b16 %v1428
        %v1535 = vunpack.c.h.b16 %v1428
        %v1536 = vunpack.c.l.b16 %v1429
        %v1537 = vunpack.c.h.b16 %v1429
        %v1538 = vpack.c.b16 %v1476, %v1474
        %v1539 = vpack.c.b16 %v1477, %v1475
        %v1540 = vpack.c.b16 %v1480, %v1478
        %v1541 = vpack.c.b16 %v1481, %v1479
        %v1542 = vpack.c.b16 %v1484, %v1482
        %v1543 = vpack.c.b16 %v1485, %v1483
        %v1544 = vpack.c.b16 %v1488, %v1486
        %v1545 = vpack.c.b16 %v1489, %v1487
        %v1546 = vpack.c.b16 %v1492, %v1490
        %v1547 = vpack.c.b16 %v1493, %v1491
        %v1548 = vpack.c.b16 %v1496, %v1494
        %v1549 = vpack.c.b16 %v1497, %v1495
        %v1550 = vpack.c.b16 %v1500, %v1498
        %v1551 = vpack.c.b16 %v1501, %v1499
        %v1552 = vpack.c.b16 %v1504, %v1502
        %v1553 = vpack.c.b16 %v1505, %v1503
        %v1554 = vpack.c.b16 %v1508, %v1506
        %v1555 = vpack.c.b16 %v1509, %v1507
        %v1556 = vpack.c.b16 %v1512, %v1510
        %v1557 = vpack.c.b16 %v1513, %v1511
        %v1558 = vpack.c.b16 %v1516, %v1514
        %v1559 = vpack.c.b16 %v1517, %v1515
        %v1560 = vpack.c.b16 %v1520, %v1518
        %v1561 = vpack.c.b16 %v1521, %v1519
        %v1562 = vpack.c.b16 %v1524, %v1522
        %v1563 = vpack.c.b16 %v1525, %v1523
        %v1564 = vpack.c.b16 %v1528, %v1526
        %v1565 = vpack.c.b16 %v1529, %v1527
        %v1566 = vpack.c.b16 %v1532, %v1530
        %v1567 = vpack.c.b16 %v1533, %v1531
        %v1568 = vpack.c.b16 %v1536, %v1534
        %v1569 = vpack.c.b16 %v1537, %v1535
        %1602 = vmatprep.subr.bf16.mxu0 %v1539
        %1603 = vmatpush1.bf16.msra.mxu0 %v1538
        %1604 = vmatprep.subr.bf16.mxu0 %v1541
        %1605 = vmatpush1.bf16.msra.mxu0 %v1540
        %1606 = vmatprep.subr.bf16.mxu0 %v1543
        %1607 = vmatpush1.bf16.msra.mxu0 %v1542
        %1608 = vmatprep.subr.bf16.mxu0 %v1545
        %1609 = vmatpush1.bf16.msra.mxu0 %v1544
        %1610 = vmatprep.subr.bf16.mxu0 %v1547
        %1611 = vmatpush1.bf16.msra.mxu0 %v1546
        %1612 = vmatprep.subr.bf16.mxu0 %v1549
        %1613 = vmatpush1.bf16.msra.mxu0 %v1548
        %1614 = vmatprep.subr.bf16.mxu0 %v1551
        %1615 = vmatpush1.bf16.msra.mxu0 %v1550
        %1616 = vmatprep.subr.bf16.mxu0 %v1553
        %1617 = vmatpush1.bf16.msra.mxu0 %v1552
        %1618 = vmatprep.subr.bf16.mxu0 %v1555
        %1619 = vmatpush1.bf16.msra.mxu0 %v1554
        %1620 = vmatprep.subr.bf16.mxu0 %v1557
        %1621 = vmatpush1.bf16.msra.mxu0 %v1556
        %1622 = vmatprep.subr.bf16.mxu0 %v1559
        %1623 = vmatpush1.bf16.msra.mxu0 %v1558
        %1624 = vmatprep.subr.bf16.mxu0 %v1561
        %1625 = vmatpush1.bf16.msra.mxu0 %v1560
        %1626 = vmatprep.subr.bf16.mxu0 %v1563
        %1627 = vmatpush1.bf16.msra.mxu0 %v1562
        %1628 = vmatprep.subr.bf16.mxu0 %v1565
        %1629 = vmatpush1.bf16.msra.mxu0 %v1564
        %1630 = vmatprep.subr.bf16.mxu0 %v1567
        %1631 = vmatpush1.bf16.msra.mxu0 %v1566
        %1632 = vmatprep.subr.bf16.mxu0 %v1569
        %1633 = vmatpush1.bf16.msra.mxu0 %v1568
        %1634 = vmatprep.mubr.bf16.mxu0 %v1335
        %1635 = vmatmul.mubr.bf16.gmra.mrb[0].mxu0 %v1334
        %v1636 = vpop.f32.mrb[0].mxu0
        %v1637 = vadd.f32 %v1435, %v1636
        %v1638 = vpop.f32.mrb[0].mxu0
        %v1639 = vadd.f32 %v1439, %v1638
        %v1640 = vpop.f32.mrb[0].mxu0
        %v1641 = vadd.f32 %v1435, %v1640
        %v1642 = vpop.f32.mrb[0].mxu0
        %v1643 = vadd.f32 %v1439, %v1642
        %1644 = vmatprep.mubr.bf16.mxu0 %v1337
        %1645 = vmatmul.mubr.bf16.gmra.mrb[0].mxu0 %v1336
        %v1646 = vpop.f32.mrb[0].mxu0
        %v1647 = vadd.f32 %v1435, %v1646
        %v1648 = vpop.f32.mrb[0].mxu0
        %v1649 = vadd.f32 %v1439, %v1648
        %v1650 = vpop.f32.mrb[0].mxu0
        %v1651 = vadd.f32 %v1435, %v1650
        %v1652 = vpop.f32.mrb[0].mxu0
        %v1653 = vadd.f32 %v1439, %v1652
        %1654 = vmatprep.mubr.bf16.mxu0 %v1339
        %1655 = vmatmul.mubr.bf16.gmra.mrb[0].mxu0 %v1338
        %v1656 = vpop.f32.mrb[0].mxu0
        %v1657 = vadd.f32 %v1435, %v1656
        %v1658 = vpop.f32.mrb[0].mxu0
        %v1659 = vadd.f32 %v1439, %v1658
        %v1660 = vpop.f32.mrb[0].mxu0
        %v1661 = vadd.f32 %v1435, %v1660
        %v1662 = vpop.f32.mrb[0].mxu0
        %v1663 = vadd.f32 %v1439, %v1662
        %1664 = vmatprep.mubr.bf16.mxu0 %v1341
        %1665 = vmatmul.mubr.bf16.gmra.mrb[0].mxu0 %v1340
        %v1666 = vpop.f32.mrb[0].mxu0
        %v1667 = vadd.f32 %v1435, %v1666
        %v1668 = vpop.f32.mrb[0].mxu0
        %v1669 = vadd.f32 %v1439, %v1668
        %v1670 = vpop.f32.mrb[0].mxu0
        %v1671 = vadd.f32 %v1435, %v1670
        %v1672 = vpop.f32.mrb[0].mxu0
        %v1673 = vadd.f32 %v1439, %v1672
        %1674 = vmatprep.mubr.bf16.mxu0 %v1343
        %1675 = vmatmul.mubr.bf16.gmra.mrb[0].mxu0 %v1342
        %v1676 = vpop.f32.mrb[0].mxu0
        %v1677 = vadd.f32 %v1435, %v1676
        %v1678 = vpop.f32.mrb[0].mxu0
        %v1679 = vadd.f32 %v1439, %v1678
        %v1680 = vpop.f32.mrb[0].mxu0
        %v1681 = vadd.f32 %v1435, %v1680
        %v1682 = vpop.f32.mrb[0].mxu0
        %v1683 = vadd.f32 %v1439, %v1682
        %1684 = vmatprep.mubr.bf16.mxu0 %v1345
        %1685 = vmatmul.mubr.bf16.gmra.mrb[0].mxu0 %v1344
        %v1686 = vpop.f32.mrb[0].mxu0
        %v1687 = vadd.f32 %v1435, %v1686
        %v1688 = vpop.f32.mrb[0].mxu0
        %v1689 = vadd.f32 %v1439, %v1688
        %v1690 = vpop.f32.mrb[0].mxu0
        %v1691 = vadd.f32 %v1435, %v1690
        %v1692 = vpop.f32.mrb[0].mxu0
        %v1693 = vadd.f32 %v1439, %v1692
        %1694 = vmatprep.mubr.bf16.mxu0 %v1347
        %1695 = vmatmul.mubr.bf16.gmra.mrb[0].mxu0 %v1346
        %v1696 = vpop.f32.mrb[0].mxu0
        %v1697 = vadd.f32 %v1435, %v1696
        %v1698 = vpop.f32.mrb[0].mxu0
        %v1699 = vadd.f32 %v1439, %v1698
        %v1700 = vpop.f32.mrb[0].mxu0
        %v1701 = vadd.f32 %v1435, %v1700
        %v1702 = vpop.f32.mrb[0].mxu0
        %v1703 = vadd.f32 %v1439, %v1702
        %1704 = vmatprep.mubr.bf16.mxu0 %v1349
        %1705 = vmatmul.mubr.bf16.gmra.mrb[0].mxu0 %v1348
        %v1706 = vpop.f32.mrb[0].mxu0
        %v1707 = vadd.f32 %v1435, %v1706
        %v1708 = vpop.f32.mrb[0].mxu0
        %v1709 = vadd.f32 %v1439, %v1708
        %v1710 = vpop.f32.mrb[0].mxu0
        %v1711 = vadd.f32 %v1435, %v1710
        %v1712 = vpop.f32.mrb[0].mxu0
        %v1713 = vadd.f32 %v1439, %v1712
        %1714 = vmatprep.mubr.bf16.mxu0 %v1351
        %1715 = vmatmul.mubr.bf16.gmra.mrb[0].mxu0 %v1350
        %v1716 = vpop.f32.mrb[0].mxu0
        %v1717 = vadd.f32 %v1435, %v1716
        %v1718 = vpop.f32.mrb[0].mxu0
        %v1719 = vadd.f32 %v1439, %v1718
        %v1720 = vpop.f32.mrb[0].mxu0
        %v1721 = vadd.f32 %v1435, %v1720
        %v1722 = vpop.f32.mrb[0].mxu0
        %v1723 = vadd.f32 %v1439, %v1722
        %1724 = vmatprep.mubr.bf16.mxu0 %v1353
        %1725 = vmatmul.mubr.bf16.gmra.mrb[0].mxu0 %v1352
        %v1726 = vpop.f32.mrb[0].mxu0
        %v1727 = vadd.f32 %v1435, %v1726
        %v1728 = vpop.f32.mrb[0].mxu0
        %v1729 = vadd.f32 %v1439, %v1728
        %v1730 = vpop.f32.mrb[0].mxu0
        %v1731 = vadd.f32 %v1435, %v1730
        %v1732 = vpop.f32.mrb[0].mxu0
        %v1733 = vadd.f32 %v1439, %v1732
        %1734 = vmatprep.mubr.bf16.mxu0 %v1355
        %1735 = vmatmul.mubr.bf16.gmra.mrb[0].mxu0 %v1354
        %v1736 = vpop.f32.mrb[0].mxu0
        %v1737 = vadd.f32 %v1435, %v1736
        %v1738 = vpop.f32.mrb[0].mxu0
        %v1739 = vadd.f32 %v1439, %v1738
        %v1740 = vpop.f32.mrb[0].mxu0
        %v1741 = vadd.f32 %v1435, %v1740
        %v1742 = vpop.f32.mrb[0].mxu0
        %v1743 = vadd.f32 %v1439, %v1742
        %1744 = vmatprep.mubr.bf16.mxu0 %v1357
        %1745 = vmatmul.mubr.bf16.gmra.mrb[0].mxu0 %v1356
        %v1746 = vpop.f32.mrb[0].mxu0
        %v1747 = vadd.f32 %v1435, %v1746
        %v1748 = vpop.f32.mrb[0].mxu0
        %v1749 = vadd.f32 %v1439, %v1748
        %v1750 = vpop.f32.mrb[0].mxu0
        %v1751 = vadd.f32 %v1435, %v1750
        %v1752 = vpop.f32.mrb[0].mxu0
        %v1753 = vadd.f32 %v1439, %v1752
        %1754 = vmatprep.mubr.bf16.mxu0 %v1359
        %1755 = vmatmul.mubr.bf16.gmra.mrb[0].mxu0 %v1358
        %v1756 = vpop.f32.mrb[0].mxu0
        %v1757 = vadd.f32 %v1435, %v1756
        %v1758 = vpop.f32.mrb[0].mxu0
        %v1759 = vadd.f32 %v1439, %v1758
        %v1760 = vpop.f32.mrb[0].mxu0
        %v1761 = vadd.f32 %v1435, %v1760
        %v1762 = vpop.f32.mrb[0].mxu0
        %v1763 = vadd.f32 %v1439, %v1762
        %1764 = vmatprep.mubr.bf16.mxu0 %v1361
        %1765 = vmatmul.mubr.bf16.gmra.mrb[0].mxu0 %v1360
        %v1766 = vpop.f32.mrb[0].mxu0
        %v1767 = vadd.f32 %v1435, %v1766
        %v1768 = vpop.f32.mrb[0].mxu0
        %v1769 = vadd.f32 %v1439, %v1768
        %v1770 = vpop.f32.mrb[0].mxu0
        %v1771 = vadd.f32 %v1435, %v1770
        %v1772 = vpop.f32.mrb[0].mxu0
        %v1773 = vadd.f32 %v1439, %v1772
        %1774 = vmatprep.mubr.bf16.mxu0 %v1363
        %1775 = vmatmul.mubr.bf16.gmra.mrb[0].mxu0 %v1362
        %v1776 = vpop.f32.mrb[0].mxu0
        %v1777 = vadd.f32 %v1435, %v1776
        %v1778 = vpop.f32.mrb[0].mxu0
        %v1779 = vadd.f32 %v1439, %v1778
        %v1780 = vpop.f32.mrb[0].mxu0
        %v1781 = vadd.f32 %v1435, %v1780
        %v1782 = vpop.f32.mrb[0].mxu0
        %v1783 = vadd.f32 %v1439, %v1782
        %1784 = vmatprep.mubr.bf16.mxu0 %v1365
        %1785 = vmatmul.mubr.bf16.gmra.mrb[0].mxu0 %v1364
        %v1786 = vpop.f32.mrb[0].mxu0
        %v1787 = vadd.f32 %v1435, %v1786
        %v1788 = vpop.f32.mrb[0].mxu0
        %v1789 = vadd.f32 %v1439, %v1788
        %v1790 = vpop.f32.mrb[0].mxu0
        %v1791 = vadd.f32 %v1435, %v1790
        %v1792 = vpop.f32.mrb[0].mxu0
        %v1793 = vadd.f32 %v1439, %v1792
        %1794 = vmatprep.mubr.bf16.mxu0 %v1367
        %1795 = vmatmul.mubr.bf16.gmra.mrb[0].mxu0 %v1366
        %v1796 = vpop.f32.mrb[0].mxu0
        %v1797 = vadd.f32 %v1435, %v1796
        %v1798 = vpop.f32.mrb[0].mxu0
        %v1799 = vadd.f32 %v1439, %v1798
        %v1800 = vpop.f32.mrb[0].mxu0
        %v1801 = vadd.f32 %v1435, %v1800
        %v1802 = vpop.f32.mrb[0].mxu0
        %v1803 = vadd.f32 %v1439, %v1802
        %1804 = vmatprep.mubr.bf16.mxu0 %v1369
        %1805 = vmatmul.mubr.bf16.gmra.mrb[0].mxu0 %v1368
        %v1806 = vpop.f32.mrb[0].mxu0
        %v1807 = vadd.f32 %v1435, %v1806
        %v1808 = vpop.f32.mrb[0].mxu0
        %v1809 = vadd.f32 %v1439, %v1808
        %v1810 = vpop.f32.mrb[0].mxu0
        %v1811 = vadd.f32 %v1435, %v1810
        %v1812 = vpop.f32.mrb[0].mxu0
        %v1813 = vadd.f32 %v1439, %v1812
        %1814 = vmatprep.mubr.bf16.mxu0 %v1371
        %1815 = vmatmul.mubr.bf16.gmra.mrb[0].mxu0 %v1370
        %v1816 = vpop.f32.mrb[0].mxu0
        %v1817 = vadd.f32 %v1435, %v1816
        %v1818 = vpop.f32.mrb[0].mxu0
        %v1819 = vadd.f32 %v1439, %v1818
        %v1820 = vpop.f32.mrb[0].mxu0
        %v1821 = vadd.f32 %v1435, %v1820
        %v1822 = vpop.f32.mrb[0].mxu0
        %v1823 = vadd.f32 %v1439, %v1822
        %1824 = vmatprep.mubr.bf16.mxu0 %v1373
        %1825 = vmatmul.mubr.bf16.gmra.mrb[0].mxu0 %v1372
        %v1826 = vpop.f32.mrb[0].mxu0
        %v1827 = vadd.f32 %v1435, %v1826
        %v1828 = vpop.f32.mrb[0].mxu0
        %v1829 = vadd.f32 %v1439, %v1828
        %v1830 = vpop.f32.mrb[0].mxu0
        %v1831 = vadd.f32 %v1435, %v1830
        %v1832 = vpop.f32.mrb[0].mxu0
        %v1833 = vadd.f32 %v1439, %v1832
        %1834 = vmatprep.mubr.bf16.mxu0 %v1375
        %1835 = vmatmul.mubr.bf16.gmra.mrb[0].mxu0 %v1374
        %v1836 = vpop.f32.mrb[0].mxu0
        %v1837 = vadd.f32 %v1435, %v1836
        %v1838 = vpop.f32.mrb[0].mxu0
        %v1839 = vadd.f32 %v1439, %v1838
        %v1840 = vpop.f32.mrb[0].mxu0
        %v1841 = vadd.f32 %v1435, %v1840
        %v1842 = vpop.f32.mrb[0].mxu0
        %v1843 = vadd.f32 %v1439, %v1842
        %1844 = vmatprep.mubr.bf16.mxu0 %v1377
        %1845 = vmatmul.mubr.bf16.gmra.mrb[0].mxu0 %v1376
        %v1846 = vpop.f32.mrb[0].mxu0
        %v1847 = vadd.f32 %v1435, %v1846
        %v1848 = vpop.f32.mrb[0].mxu0
        %v1849 = vadd.f32 %v1439, %v1848
        %v1850 = vpop.f32.mrb[0].mxu0
        %v1851 = vadd.f32 %v1435, %v1850
        %v1852 = vpop.f32.mrb[0].mxu0
        %v1853 = vadd.f32 %v1439, %v1852
        %1854 = vmatprep.mubr.bf16.mxu0 %v1379
        %1855 = vmatmul.mubr.bf16.gmra.mrb[0].mxu0 %v1378
        %v1856 = vpop.f32.mrb[0].mxu0
        %v1857 = vadd.f32 %v1435, %v1856
        %v1858 = vpop.f32.mrb[0].mxu0
        %v1859 = vadd.f32 %v1439, %v1858
        %v1860 = vpop.f32.mrb[0].mxu0
        %v1861 = vadd.f32 %v1435, %v1860
        %v1862 = vpop.f32.mrb[0].mxu0
        %v1863 = vadd.f32 %v1439, %v1862
        %1864 = vmatprep.mubr.bf16.mxu0 %v1381
        %1865 = vmatmul.mubr.bf16.gmra.mrb[0].mxu0 %v1380
        %v1866 = vpop.f32.mrb[0].mxu0
        %v1867 = vadd.f32 %v1435, %v1866
        %v1868 = vpop.f32.mrb[0].mxu0
        %v1869 = vadd.f32 %v1439, %v1868
        %v1870 = vpop.f32.mrb[0].mxu0
        %v1871 = vadd.f32 %v1435, %v1870
        %v1872 = vpop.f32.mrb[0].mxu0
        %v1873 = vadd.f32 %v1439, %v1872
        %1874 = vmatprep.mubr.bf16.mxu0 %v1383
        %1875 = vmatmul.mubr.bf16.gmra.mrb[0].mxu0 %v1382
        %v1876 = vpop.f32.mrb[0].mxu0
        %v1877 = vadd.f32 %v1435, %v1876
        %v1878 = vpop.f32.mrb[0].mxu0
        %v1879 = vadd.f32 %v1439, %v1878
        %v1880 = vpop.f32.mrb[0].mxu0
        %v1881 = vadd.f32 %v1435, %v1880
        %v1882 = vpop.f32.mrb[0].mxu0
        %v1883 = vadd.f32 %v1439, %v1882
        %1884 = vmatprep.mubr.bf16.mxu0 %v1385
        %1885 = vmatmul.mubr.bf16.gmra.mrb[0].mxu0 %v1384
        %v1886 = vpop.f32.mrb[0].mxu0
        %v1887 = vadd.f32 %v1435, %v1886
        %v1888 = vpop.f32.mrb[0].mxu0
        %v1889 = vadd.f32 %v1439, %v1888
        %v1890 = vpop.f32.mrb[0].mxu0
        %v1891 = vadd.f32 %v1435, %v1890
        %v1892 = vpop.f32.mrb[0].mxu0
        %v1893 = vadd.f32 %v1439, %v1892
        %1894 = vmatprep.mubr.bf16.mxu0 %v1387
        %1895 = vmatmul.mubr.bf16.gmra.mrb[0].mxu0 %v1386
        %v1896 = vpop.f32.mrb[0].mxu0
        %v1897 = vadd.f32 %v1435, %v1896
        %v1898 = vpop.f32.mrb[0].mxu0
        %v1899 = vadd.f32 %v1439, %v1898
        %v1900 = vpop.f32.mrb[0].mxu0
        %v1901 = vadd.f32 %v1435, %v1900
        %v1902 = vpop.f32.mrb[0].mxu0
        %v1903 = vadd.f32 %v1439, %v1902
        %1904 = vmatprep.mubr.bf16.mxu0 %v1389
        %1905 = vmatmul.mubr.bf16.gmra.mrb[0].mxu0 %v1388
        %v1906 = vpop.f32.mrb[0].mxu0
        %v1907 = vadd.f32 %v1435, %v1906
        %v1908 = vpop.f32.mrb[0].mxu0
        %v1909 = vadd.f32 %v1439, %v1908
        %v1910 = vpop.f32.mrb[0].mxu0
        %v1911 = vadd.f32 %v1435, %v1910
        %v1912 = vpop.f32.mrb[0].mxu0
        %v1913 = vadd.f32 %v1439, %v1912
        %1914 = vmatprep.mubr.bf16.mxu0 %v1391
        %1915 = vmatmul.mubr.bf16.gmra.mrb[0].mxu0 %v1390
        %v1916 = vpop.f32.mrb[0].mxu0
        %v1917 = vadd.f32 %v1435, %v1916
        %v1918 = vpop.f32.mrb[0].mxu0
        %v1919 = vadd.f32 %v1439, %v1918
        %v1920 = vpop.f32.mrb[0].mxu0
        %v1921 = vadd.f32 %v1435, %v1920
        %v1922 = vpop.f32.mrb[0].mxu0
        %v1923 = vadd.f32 %v1439, %v1922
        %1924 = vmatprep.mubr.bf16.mxu0 %v1393
        %1925 = vmatmul.mubr.bf16.gmra.mrb[0].mxu0 %v1392
        %v1926 = vpop.f32.mrb[0].mxu0
        %v1927 = vadd.f32 %v1435, %v1926
        %v1928 = vpop.f32.mrb[0].mxu0
        %v1929 = vadd.f32 %v1439, %v1928
        %v1930 = vpop.f32.mrb[0].mxu0
        %v1931 = vadd.f32 %v1435, %v1930
        %v1932 = vpop.f32.mrb[0].mxu0
        %v1933 = vadd.f32 %v1439, %v1932
        %1934 = vmatprep.mubr.bf16.mxu0 %v1395
        %1935 = vmatmul.mubr.bf16.gmra.mrb[0].mxu0 %v1394
        %v1936 = vpop.f32.mrb[0].mxu0
        %v1937 = vadd.f32 %v1435, %v1936
        %v1938 = vpop.f32.mrb[0].mxu0
        %v1939 = vadd.f32 %v1439, %v1938
        %v1940 = vpop.f32.mrb[0].mxu0
        %v1941 = vadd.f32 %v1435, %v1940
        %v1942 = vpop.f32.mrb[0].mxu0
        %v1943 = vadd.f32 %v1439, %v1942
        %1944 = vmatprep.mubr.bf16.mxu0 %v1397
        %1945 = vmatmul.mubr.bf16.gmra.mrb[0].mxu0 %v1396
        %v1946 = vpop.f32.mrb[0].mxu0
        %v1947 = vadd.f32 %v1435, %v1946
        %v1948 = vpop.f32.mrb[0].mxu0
        %v1949 = vadd.f32 %v1439, %v1948
        %v1950 = vpop.f32.mrb[0].mxu0
        %v1951 = vadd.f32 %v1435, %v1950
        %v1952 = vpop.f32.mrb[0].mxu0
        %v1953 = vadd.f32 %v1439, %v1952
        %1954 = vdwg.mxu0
        %v1955 = vmul.f32 %v1637, 0.2
        %v1956 = vmul.f32 %v1639, 0.2
        %v1957 = vmul.f32 %v1641, 0.2
        %v1958 = vmul.f32 %v1643, 0.2
        %v1959 = vmul.f32 %v1647, 0.2
        %v1960 = vmul.f32 %v1649, 0.2
        %v1961 = vmul.f32 %v1651, 0.2
        %v1962 = vmul.f32 %v1653, 0.2
        %v1963 = vmul.f32 %v1657, 0.2
        %v1964 = vmul.f32 %v1659, 0.2
        %v1965 = vmul.f32 %v1661, 0.2
        %v1966 = vmul.f32 %v1663, 0.2
        %v1967 = vmul.f32 %v1667, 0.2
        %v1968 = vmul.f32 %v1669, 0.2
        %v1969 = vmul.f32 %v1671, 0.2
        %v1970 = vmul.f32 %v1673, 0.2
        %v1971 = vmul.f32 %v1677, 0.2
        %v1972 = vmul.f32 %v1679, 0.2
        %v1973 = vmul.f32 %v1681, 0.2
        %v1974 = vmul.f32 %v1683, 0.2
        %v1975 = vmul.f32 %v1687, 0.2
        %v1976 = vmul.f32 %v1689, 0.2
        %v1977 = vmul.f32 %v1691, 0.2
        %v1978 = vmul.f32 %v1693, 0.2
        %v1979 = vmul.f32 %v1697, 0.2
        %v1980 = vmul.f32 %v1699, 0.2
        %v1981 = vmul.f32 %v1701, 0.2
        %v1982 = vmul.f32 %v1703, 0.2
        %v1983 = vmul.f32 %v1707, 0.2
        %v1984 = vmul.f32 %v1709, 0.2
        %v1985 = vmul.f32 %v1711, 0.2
        %v1986 = vmul.f32 %v1713, 0.2
        %v1987 = vmul.f32 %v1717, 0.2
        %v1988 = vmul.f32 %v1719, 0.2
        %v1989 = vmul.f32 %v1721, 0.2
        %v1990 = vmul.f32 %v1723, 0.2
        %v1991 = vmul.f32 %v1727, 0.2
        %v1992 = vmul.f32 %v1729, 0.2
        %v1993 = vmul.f32 %v1731, 0.2
        %v1994 = vmul.f32 %v1733, 0.2
        %v1995 = vmul.f32 %v1737, 0.2
        %v1996 = vmul.f32 %v1739, 0.2
        %v1997 = vmul.f32 %v1741, 0.2
        %v1998 = vmul.f32 %v1743, 0.2
        %v1999 = vmul.f32 %v1747, 0.2
        %v2000 = vmul.f32 %v1749, 0.2
        %v2001 = vmul.f32 %v1751, 0.2
        %v2002 = vmul.f32 %v1753, 0.2
        %v2003 = vmul.f32 %v1757, 0.2
        %v2004 = vmul.f32 %v1759, 0.2
        %v2005 = vmul.f32 %v1761, 0.2
        %v2006 = vmul.f32 %v1763, 0.2
        %v2007 = vmul.f32 %v1767, 0.2
        %v2008 = vmul.f32 %v1769, 0.2
        %v2009 = vmul.f32 %v1771, 0.2
        %v2010 = vmul.f32 %v1773, 0.2
        %v2011 = vmul.f32 %v1777, 0.2
        %v2012 = vmul.f32 %v1779, 0.2
        %v2013 = vmul.f32 %v1781, 0.2
        %v2014 = vmul.f32 %v1783, 0.2
        %v2015 = vmul.f32 %v1787, 0.2
        %v2016 = vmul.f32 %v1789, 0.2
        %v2017 = vmul.f32 %v1791, 0.2
        %v2018 = vmul.f32 %v1793, 0.2
        %v2019 = vmul.f32 %v1797, 0.2
        %v2020 = vmul.f32 %v1799, 0.2
        %v2021 = vmul.f32 %v1801, 0.2
        %v2022 = vmul.f32 %v1803, 0.2
        %v2023 = vmul.f32 %v1807, 0.2
        %v2024 = vmul.f32 %v1809, 0.2
        %v2025 = vmul.f32 %v1811, 0.2
        %v2026 = vmul.f32 %v1813, 0.2
        %v2027 = vmul.f32 %v1817, 0.2
        %v2028 = vmul.f32 %v1819, 0.2
        %v2029 = vmul.f32 %v1821, 0.2
        %v2030 = vmul.f32 %v1823, 0.2
        %v2031 = vmul.f32 %v1827, 0.2
        %v2032 = vmul.f32 %v1829, 0.2
        %v2033 = vmul.f32 %v1831, 0.2
        %v2034 = vmul.f32 %v1833, 0.2
        %v2035 = vmul.f32 %v1837, 0.2
        %v2036 = vmul.f32 %v1839, 0.2
        %v2037 = vmul.f32 %v1841, 0.2
        %v2038 = vmul.f32 %v1843, 0.2
        %v2039 = vmul.f32 %v1847, 0.2
        %v2040 = vmul.f32 %v1849, 0.2
        %v2041 = vmul.f32 %v1851, 0.2
        %v2042 = vmul.f32 %v1853, 0.2
        %v2043 = vmul.f32 %v1857, 0.2
        %v2044 = vmul.f32 %v1859, 0.2
        %v2045 = vmul.f32 %v1861, 0.2
        %v2046 = vmul.f32 %v1863, 0.2
        %v2047 = vmul.f32 %v1867, 0.2
        %v2048 = vmul.f32 %v1869, 0.2
        %v2049 = vmul.f32 %v1871, 0.2
        %v2050 = vmul.f32 %v1873, 0.2
        %v2051 = vmul.f32 %v1877, 0.2
        %v2052 = vmul.f32 %v1879, 0.2
        %v2053 = vmul.f32 %v1881, 0.2
        %v2054 = vmul.f32 %v1883, 0.2
        %v2055 = vmul.f32 %v1887, 0.2
        %v2056 = vmul.f32 %v1889, 0.2
        %v2057 = vmul.f32 %v1891, 0.2
        %v2058 = vmul.f32 %v1893, 0.2
        %v2059 = vmul.f32 %v1897, 0.2
        %v2060 = vmul.f32 %v1899, 0.2
        %v2061 = vmul.f32 %v1901, 0.2
        %v2062 = vmul.f32 %v1903, 0.2
        %v2063 = vmul.f32 %v1907, 0.2
        %v2064 = vmul.f32 %v1909, 0.2
        %v2065 = vmul.f32 %v1911, 0.2
        %v2066 = vmul.f32 %v1913, 0.2
        %v2067 = vmul.f32 %v1917, 0.2
        %v2068 = vmul.f32 %v1919, 0.2
        %v2069 = vmul.f32 %v1921, 0.2
        %v2070 = vmul.f32 %v1923, 0.2
        %v2071 = vmul.f32 %v1927, 0.2
        %v2072 = vmul.f32 %v1929, 0.2
        %v2073 = vmul.f32 %v1931, 0.2
        %v2074 = vmul.f32 %v1933, 0.2
        %v2075 = vmul.f32 %v1937, 0.2
        %v2076 = vmul.f32 %v1939, 0.2
        %v2077 = vmul.f32 %v1941, 0.2
        %v2078 = vmul.f32 %v1943, 0.2
        %v2079 = vmul.f32 %v1947, 0.2
        %v2080 = vmul.f32 %v1949, 0.2
        %v2081 = vmul.f32 %v1951, 0.2
        %v2082 = vmul.f32 %v1953, 0.2
        %v2083 = vmax.f32 %v1637, %v1955
        %v2084 = vmax.f32 %v1639, %v1956
        %v2085 = vmax.f32 %v1641, %v1957
        %v2086 = vmax.f32 %v1643, %v1958
        %v2087 = vmax.f32 %v1647, %v1959
        %v2088 = vmax.f32 %v1649, %v1960
        %v2089 = vmax.f32 %v1651, %v1961
        %v2090 = vmax.f32 %v1653, %v1962
        %v2091 = vmax.f32 %v1657, %v1963
        %v2092 = vmax.f32 %v1659, %v1964
        %v2093 = vmax.f32 %v1661, %v1965
        %v2094 = vmax.f32 %v1663, %v1966
        %v2095 = vmax.f32 %v1667, %v1967
        %v2096 = vmax.f32 %v1669, %v1968
        %v2097 = vmax.f32 %v1671, %v1969
        %v2098 = vmax.f32 %v1673, %v1970
        %v2099 = vmax.f32 %v1677, %v1971
        %v2100 = vmax.f32 %v1679, %v1972
        %v2101 = vmax.f32 %v1681, %v1973
        %v2102 = vmax.f32 %v1683, %v1974
        %v2103 = vmax.f32 %v1687, %v1975
        %v2104 = vmax.f32 %v1689, %v1976
        %v2105 = vmax.f32 %v1691, %v1977
        %v2106 = vmax.f32 %v1693, %v1978
        %v2107 = vmax.f32 %v1697, %v1979
        %v2108 = vmax.f32 %v1699, %v1980
        %v2109 = vmax.f32 %v1701, %v1981
        %v2110 = vmax.f32 %v1703, %v1982
        %v2111 = vmax.f32 %v1707, %v1983
        %v2112 = vmax.f32 %v1709, %v1984
        %v2113 = vmax.f32 %v1711, %v1985
        %v2114 = vmax.f32 %v1713, %v1986
        %v2115 = vmax.f32 %v1717, %v1987
        %v2116 = vmax.f32 %v1719, %v1988
        %v2117 = vmax.f32 %v1721, %v1989
        %v2118 = vmax.f32 %v1723, %v1990
        %v2119 = vmax.f32 %v1727, %v1991
        %v2120 = vmax.f32 %v1729, %v1992
        %v2121 = vmax.f32 %v1731, %v1993
        %v2122 = vmax.f32 %v1733, %v1994
        %v2123 = vmax.f32 %v1737, %v1995
        %v2124 = vmax.f32 %v1739, %v1996
        %v2125 = vmax.f32 %v1741, %v1997
        %v2126 = vmax.f32 %v1743, %v1998
        %v2127 = vmax.f32 %v1747, %v1999
        %v2128 = vmax.f32 %v1749, %v2000
        %v2129 = vmax.f32 %v1751, %v2001
        %v2130 = vmax.f32 %v1753, %v2002
        %v2131 = vmax.f32 %v1757, %v2003
        %v2132 = vmax.f32 %v1759, %v2004
        %v2133 = vmax.f32 %v1761, %v2005
        %v2134 = vmax.f32 %v1763, %v2006
        %v2135 = vmax.f32 %v1767, %v2007
        %v2136 = vmax.f32 %v1769, %v2008
        %v2137 = vmax.f32 %v1771, %v2009
        %v2138 = vmax.f32 %v1773, %v2010
        %v2139 = vmax.f32 %v1777, %v2011
        %v2140 = vmax.f32 %v1779, %v2012
        %v2141 = vmax.f32 %v1781, %v2013
        %v2142 = vmax.f32 %v1783, %v2014
        %v2143 = vmax.f32 %v1787, %v2015
        %v2144 = vmax.f32 %v1789, %v2016
        %v2145 = vmax.f32 %v1791, %v2017
        %v2146 = vmax.f32 %v1793, %v2018
        %v2147 = vmax.f32 %v1797, %v2019
        %v2148 = vmax.f32 %v1799, %v2020
        %v2149 = vmax.f32 %v1801, %v2021
        %v2150 = vmax.f32 %v1803, %v2022
        %v2151 = vmax.f32 %v1807, %v2023
        %v2152 = vmax.f32 %v1809, %v2024
        %v2153 = vmax.f32 %v1811, %v2025
        %v2154 = vmax.f32 %v1813, %v2026
        %v2155 = vmax.f32 %v1817, %v2027
        %v2156 = vmax.f32 %v1819, %v2028
        %v2157 = vmax.f32 %v1821, %v2029
        %v2158 = vmax.f32 %v1823, %v2030
        %v2159 = vmax.f32 %v1827, %v2031
        %v2160 = vmax.f32 %v1829, %v2032
        %v2161 = vmax.f32 %v1831, %v2033
        %v2162 = vmax.f32 %v1833, %v2034
        %v2163 = vmax.f32 %v1837, %v2035
        %v2164 = vmax.f32 %v1839, %v2036
        %v2165 = vmax.f32 %v1841, %v2037
        %v2166 = vmax.f32 %v1843, %v2038
        %v2167 = vmax.f32 %v1847, %v2039
        %v2168 = vmax.f32 %v1849, %v2040
        %v2169 = vmax.f32 %v1851, %v2041
        %v2170 = vmax.f32 %v1853, %v2042
        %v2171 = vmax.f32 %v1857, %v2043
        %v2172 = vmax.f32 %v1859, %v2044
        %v2173 = vmax.f32 %v1861, %v2045
        %v2174 = vmax.f32 %v1863, %v2046
        %v2175 = vmax.f32 %v1867, %v2047
        %v2176 = vmax.f32 %v1869, %v2048
        %v2177 = vmax.f32 %v1871, %v2049
        %v2178 = vmax.f32 %v1873, %v2050
        %v2179 = vmax.f32 %v1877, %v2051
        %v2180 = vmax.f32 %v1879, %v2052
        %v2181 = vmax.f32 %v1881, %v2053
        %v2182 = vmax.f32 %v1883, %v2054
        %v2183 = vmax.f32 %v1887, %v2055
        %v2184 = vmax.f32 %v1889, %v2056
        %v2185 = vmax.f32 %v1891, %v2057
        %v2186 = vmax.f32 %v1893, %v2058
        %v2187 = vmax.f32 %v1897, %v2059
        %v2188 = vmax.f32 %v1899, %v2060
        %v2189 = vmax.f32 %v1901, %v2061
        %v2190 = vmax.f32 %v1903, %v2062
        %v2191 = vmax.f32 %v1907, %v2063
        %v2192 = vmax.f32 %v1909, %v2064
        %v2193 = vmax.f32 %v1911, %v2065
        %v2194 = vmax.f32 %v1913, %v2066
        %v2195 = vmax.f32 %v1917, %v2067
        %v2196 = vmax.f32 %v1919, %v2068
        %v2197 = vmax.f32 %v1921, %v2069
        %v2198 = vmax.f32 %v1923, %v2070
        %v2199 = vmax.f32 %v1927, %v2071
        %v2200 = vmax.f32 %v1929, %v2072
        %v2201 = vmax.f32 %v1931, %v2073
        %v2202 = vmax.f32 %v1933, %v2074
        %v2203 = vmax.f32 %v1937, %v2075
        %v2204 = vmax.f32 %v1939, %v2076
        %v2205 = vmax.f32 %v1941, %v2077
        %v2206 = vmax.f32 %v1943, %v2078
        %v2207 = vmax.f32 %v1947, %v2079
        %v2208 = vmax.f32 %v1949, %v2080
        %v2209 = vmax.f32 %v1951, %v2081
        %v2210 = vmax.f32 %v1953, %v2082
        %v2211 = vld [vmem:[%s5] sm:$0x3]
        %v2213 = vlaneseq
        %v2214 = vshrl.u32 %v2213, 7
        %v2215 = vsub.s32 0, %v2214
        %v2216 = vrot.slane %v2211, %v2215
        %v2217 = vlaneseq
        %v2218 = vshrl.u32 %v2217, 7
        %v2219 = vsub.s32 1, %v2218
        %v2220 = vrot.slane %v2211, %v2219
        %v2223 = vmul.f32 %v2083, %v2216
        %v2224 = vmul.f32 %v2084, %v2220
        %v2225 = vmul.f32 %v2085, %v2216
        %v2226 = vmul.f32 %v2086, %v2220
        %v2227 = vmul.f32 %v2087, %v2216
        %v2228 = vmul.f32 %v2088, %v2220
        %v2229 = vmul.f32 %v2089, %v2216
        %v2230 = vmul.f32 %v2090, %v2220
        %v2231 = vmul.f32 %v2091, %v2216
        %v2232 = vmul.f32 %v2092, %v2220
        %v2233 = vmul.f32 %v2093, %v2216
        %v2234 = vmul.f32 %v2094, %v2220
        %v2235 = vmul.f32 %v2095, %v2216
        %v2236 = vmul.f32 %v2096, %v2220
        %v2237 = vmul.f32 %v2097, %v2216
        %v2238 = vmul.f32 %v2098, %v2220
        %v2239 = vmul.f32 %v2099, %v2216
        %v2240 = vmul.f32 %v2100, %v2220
        %v2241 = vmul.f32 %v2101, %v2216
        %v2242 = vmul.f32 %v2102, %v2220
        %v2243 = vmul.f32 %v2103, %v2216
        %v2244 = vmul.f32 %v2104, %v2220
        %v2245 = vmul.f32 %v2105, %v2216
        %v2246 = vmul.f32 %v2106, %v2220
        %v2247 = vmul.f32 %v2107, %v2216
        %v2248 = vmul.f32 %v2108, %v2220
        %v2249 = vmul.f32 %v2109, %v2216
        %v2250 = vmul.f32 %v2110, %v2220
        %v2251 = vmul.f32 %v2111, %v2216
        %v2252 = vmul.f32 %v2112, %v2220
        %v2253 = vmul.f32 %v2113, %v2216
        %v2254 = vmul.f32 %v2114, %v2220
        %v2255 = vmul.f32 %v2115, %v2216
        %v2256 = vmul.f32 %v2116, %v2220
        %v2257 = vmul.f32 %v2117, %v2216
        %v2258 = vmul.f32 %v2118, %v2220
        %v2259 = vmul.f32 %v2119, %v2216
        %v2260 = vmul.f32 %v2120, %v2220
        %v2261 = vmul.f32 %v2121, %v2216
        %v2262 = vmul.f32 %v2122, %v2220
        %v2263 = vmul.f32 %v2123, %v2216
        %v2264 = vmul.f32 %v2124, %v2220
        %v2265 = vmul.f32 %v2125, %v2216
        %v2266 = vmul.f32 %v2126, %v2220
        %v2267 = vmul.f32 %v2127, %v2216
        %v2268 = vmul.f32 %v2128, %v2220
        %v2269 = vmul.f32 %v2129, %v2216
        %v2270 = vmul.f32 %v2130, %v2220
        %v2271 = vmul.f32 %v2131, %v2216
        %v2272 = vmul.f32 %v2132, %v2220
        %v2273 = vmul.f32 %v2133, %v2216
        %v2274 = vmul.f32 %v2134, %v2220
        %v2275 = vmul.f32 %v2135, %v2216
        %v2276 = vmul.f32 %v2136, %v2220
        %v2277 = vmul.f32 %v2137, %v2216
        %v2278 = vmul.f32 %v2138, %v2220
        %v2279 = vmul.f32 %v2139, %v2216
        %v2280 = vmul.f32 %v2140, %v2220
        %v2281 = vmul.f32 %v2141, %v2216
        %v2282 = vmul.f32 %v2142, %v2220
        %v2283 = vmul.f32 %v2143, %v2216
        %v2284 = vmul.f32 %v2144, %v2220
        %v2285 = vmul.f32 %v2145, %v2216
        %v2286 = vmul.f32 %v2146, %v2220
        %v2287 = vmul.f32 %v2147, %v2216
        %v2288 = vmul.f32 %v2148, %v2220
        %v2289 = vmul.f32 %v2149, %v2216
        %v2290 = vmul.f32 %v2150, %v2220
        %v2291 = vmul.f32 %v2151, %v2216
        %v2292 = vmul.f32 %v2152, %v2220
        %v2293 = vmul.f32 %v2153, %v2216
        %v2294 = vmul.f32 %v2154, %v2220
        %v2295 = vmul.f32 %v2155, %v2216
        %v2296 = vmul.f32 %v2156, %v2220
        %v2297 = vmul.f32 %v2157, %v2216
        %v2298 = vmul.f32 %v2158, %v2220
        %v2299 = vmul.f32 %v2159, %v2216
        %v2300 = vmul.f32 %v2160, %v2220
        %v2301 = vmul.f32 %v2161, %v2216
        %v2302 = vmul.f32 %v2162, %v2220
        %v2303 = vmul.f32 %v2163, %v2216
        %v2304 = vmul.f32 %v2164, %v2220
        %v2305 = vmul.f32 %v2165, %v2216
        %v2306 = vmul.f32 %v2166, %v2220
        %v2307 = vmul.f32 %v2167, %v2216
        %v2308 = vmul.f32 %v2168, %v2220
        %v2309 = vmul.f32 %v2169, %v2216
        %v2310 = vmul.f32 %v2170, %v2220
        %v2311 = vmul.f32 %v2171, %v2216
        %v2312 = vmul.f32 %v2172, %v2220
        %v2313 = vmul.f32 %v2173, %v2216
        %v2314 = vmul.f32 %v2174, %v2220
        %v2315 = vmul.f32 %v2175, %v2216
        %v2316 = vmul.f32 %v2176, %v2220
        %v2317 = vmul.f32 %v2177, %v2216
        %v2318 = vmul.f32 %v2178, %v2220
        %v2319 = vmul.f32 %v2179, %v2216
        %v2320 = vmul.f32 %v2180, %v2220
        %v2321 = vmul.f32 %v2181, %v2216
        %v2322 = vmul.f32 %v2182, %v2220
        %v2323 = vmul.f32 %v2183, %v2216
        %v2324 = vmul.f32 %v2184, %v2220
        %v2325 = vmul.f32 %v2185, %v2216
        %v2326 = vmul.f32 %v2186, %v2220
        %v2327 = vmul.f32 %v2187, %v2216
        %v2328 = vmul.f32 %v2188, %v2220
        %v2329 = vmul.f32 %v2189, %v2216
        %v2330 = vmul.f32 %v2190, %v2220
        %v2331 = vmul.f32 %v2191, %v2216
        %v2332 = vmul.f32 %v2192, %v2220
        %v2333 = vmul.f32 %v2193, %v2216
        %v2334 = vmul.f32 %v2194, %v2220
        %v2335 = vmul.f32 %v2195, %v2216
        %v2336 = vmul.f32 %v2196, %v2220
        %v2337 = vmul.f32 %v2197, %v2216
        %v2338 = vmul.f32 %v2198, %v2220
        %v2339 = vmul.f32 %v2199, %v2216
        %v2340 = vmul.f32 %v2200, %v2220
        %v2341 = vmul.f32 %v2201, %v2216
        %v2342 = vmul.f32 %v2202, %v2220
        %v2343 = vmul.f32 %v2203, %v2216
        %v2344 = vmul.f32 %v2204, %v2220
        %v2345 = vmul.f32 %v2205, %v2216
        %v2346 = vmul.f32 %v2206, %v2220
        %v2347 = vmul.f32 %v2207, %v2216
        %v2348 = vmul.f32 %v2208, %v2220
        %v2349 = vmul.f32 %v2209, %v2216
        %v2350 = vmul.f32 %v2210, %v2220
        %v2351 = vadd.f32 %v2223, %v2224
        %2352 = vadd.xlane.f32.xlu0 %v2351
        %v2353 = vpop.xlane.xlu0 %2352
        %v2354 = vadd.f32 %v2225, %v2226
        %2355 = vadd.xlane.f32.xlu0 %v2354
        %v2356 = vpop.xlane.xlu0 %2355
        %v2357 = vadd.f32 %v2227, %v2228
        %2358 = vadd.xlane.f32.xlu0 %v2357
        %v2359 = vpop.xlane.xlu0 %2358
        %v2360 = vadd.f32 %v2229, %v2230
        %2361 = vadd.xlane.f32.xlu0 %v2360
        %v2362 = vpop.xlane.xlu0 %2361
        %v2363 = vadd.f32 %v2231, %v2232
        %2364 = vadd.xlane.f32.xlu0 %v2363
        %v2365 = vpop.xlane.xlu0 %2364
        %v2366 = vadd.f32 %v2233, %v2234
        %2367 = vadd.xlane.f32.xlu0 %v2366
        %v2368 = vpop.xlane.xlu0 %2367
        %v2369 = vadd.f32 %v2235, %v2236
        %2370 = vadd.xlane.f32.xlu0 %v2369
        %v2371 = vpop.xlane.xlu0 %2370
        %v2372 = vadd.f32 %v2237, %v2238
        %2373 = vadd.xlane.f32.xlu0 %v2372
        %v2374 = vpop.xlane.xlu0 %2373
        %v2375 = vadd.f32 %v2239, %v2240
        %2376 = vadd.xlane.f32.xlu0 %v2375
        %v2377 = vpop.xlane.xlu0 %2376
        %v2378 = vadd.f32 %v2241, %v2242
        %2379 = vadd.xlane.f32.xlu0 %v2378
        %v2380 = vpop.xlane.xlu0 %2379
        %v2381 = vadd.f32 %v2243, %v2244
        %2382 = vadd.xlane.f32.xlu0 %v2381
        %v2383 = vpop.xlane.xlu0 %2382
        %v2384 = vadd.f32 %v2245, %v2246
        %2385 = vadd.xlane.f32.xlu0 %v2384
        %v2386 = vpop.xlane.xlu0 %2385
        %v2387 = vadd.f32 %v2247, %v2248
        %2388 = vadd.xlane.f32.xlu0 %v2387
        %v2389 = vpop.xlane.xlu0 %2388
        %v2390 = vadd.f32 %v2249, %v2250
        %2391 = vadd.xlane.f32.xlu0 %v2390
        %v2392 = vpop.xlane.xlu0 %2391
        %v2393 = vadd.f32 %v2251, %v2252
        %2394 = vadd.xlane.f32.xlu0 %v2393
        %v2395 = vpop.xlane.xlu0 %2394
        %v2396 = vadd.f32 %v2253, %v2254
        %2397 = vadd.xlane.f32.xlu0 %v2396
        %v2398 = vpop.xlane.xlu0 %2397
        %v2399 = vadd.f32 %v2255, %v2256
        %2400 = vadd.xlane.f32.xlu0 %v2399
        %v2401 = vpop.xlane.xlu0 %2400
        %v2402 = vadd.f32 %v2257, %v2258
        %2403 = vadd.xlane.f32.xlu0 %v2402
        %v2404 = vpop.xlane.xlu0 %2403
        %v2405 = vadd.f32 %v2259, %v2260
        %2406 = vadd.xlane.f32.xlu0 %v2405
        %v2407 = vpop.xlane.xlu0 %2406
        %v2408 = vadd.f32 %v2261, %v2262
        %2409 = vadd.xlane.f32.xlu0 %v2408
        %v2410 = vpop.xlane.xlu0 %2409
        %v2411 = vadd.f32 %v2263, %v2264
        %2412 = vadd.xlane.f32.xlu0 %v2411
        %v2413 = vpop.xlane.xlu0 %2412
        %v2414 = vadd.f32 %v2265, %v2266
        %2415 = vadd.xlane.f32.xlu0 %v2414
        %v2416 = vpop.xlane.xlu0 %2415
        %v2417 = vadd.f32 %v2267, %v2268
        %2418 = vadd.xlane.f32.xlu0 %v2417
        %v2419 = vpop.xlane.xlu0 %2418
        %v2420 = vadd.f32 %v2269, %v2270
        %2421 = vadd.xlane.f32.xlu0 %v2420
        %v2422 = vpop.xlane.xlu0 %2421
        %v2423 = vadd.f32 %v2271, %v2272
        %2424 = vadd.xlane.f32.xlu0 %v2423
        %v2425 = vpop.xlane.xlu0 %2424
        %v2426 = vadd.f32 %v2273, %v2274
        %2427 = vadd.xlane.f32.xlu0 %v2426
        %v2428 = vpop.xlane.xlu0 %2427
        %v2429 = vadd.f32 %v2275, %v2276
        %2430 = vadd.xlane.f32.xlu0 %v2429
        %v2431 = vpop.xlane.xlu0 %2430
        %v2432 = vadd.f32 %v2277, %v2278
        %2433 = vadd.xlane.f32.xlu0 %v2432
        %v2434 = vpop.xlane.xlu0 %2433
        %v2435 = vadd.f32 %v2279, %v2280
        %2436 = vadd.xlane.f32.xlu0 %v2435
        %v2437 = vpop.xlane.xlu0 %2436
        %v2438 = vadd.f32 %v2281, %v2282
        %2439 = vadd.xlane.f32.xlu0 %v2438
        %v2440 = vpop.xlane.xlu0 %2439
        %v2441 = vadd.f32 %v2283, %v2284
        %2442 = vadd.xlane.f32.xlu0 %v2441
        %v2443 = vpop.xlane.xlu0 %2442
        %v2444 = vadd.f32 %v2285, %v2286
        %2445 = vadd.xlane.f32.xlu0 %v2444
        %v2446 = vpop.xlane.xlu0 %2445
        %v2447 = vadd.f32 %v2287, %v2288
        %2448 = vadd.xlane.f32.xlu0 %v2447
        %v2449 = vpop.xlane.xlu0 %2448
        %v2450 = vadd.f32 %v2289, %v2290
        %2451 = vadd.xlane.f32.xlu0 %v2450
        %v2452 = vpop.xlane.xlu0 %2451
        %v2453 = vadd.f32 %v2291, %v2292
        %2454 = vadd.xlane.f32.xlu0 %v2453
        %v2455 = vpop.xlane.xlu0 %2454
        %v2456 = vadd.f32 %v2293, %v2294
        %2457 = vadd.xlane.f32.xlu0 %v2456
        %v2458 = vpop.xlane.xlu0 %2457
        %v2459 = vadd.f32 %v2295, %v2296
        %2460 = vadd.xlane.f32.xlu0 %v2459
        %v2461 = vpop.xlane.xlu0 %2460
        %v2462 = vadd.f32 %v2297, %v2298
        %2463 = vadd.xlane.f32.xlu0 %v2462
        %v2464 = vpop.xlane.xlu0 %2463
        %v2465 = vadd.f32 %v2299, %v2300
        %2466 = vadd.xlane.f32.xlu0 %v2465
        %v2467 = vpop.xlane.xlu0 %2466
        %v2468 = vadd.f32 %v2301, %v2302
        %2469 = vadd.xlane.f32.xlu0 %v2468
        %v2470 = vpop.xlane.xlu0 %2469
        %v2471 = vadd.f32 %v2303, %v2304
        %2472 = vadd.xlane.f32.xlu0 %v2471
        %v2473 = vpop.xlane.xlu0 %2472
        %v2474 = vadd.f32 %v2305, %v2306
        %2475 = vadd.xlane.f32.xlu0 %v2474
        %v2476 = vpop.xlane.xlu0 %2475
        %v2477 = vadd.f32 %v2307, %v2308
        %2478 = vadd.xlane.f32.xlu0 %v2477
        %v2479 = vpop.xlane.xlu0 %2478
        %v2480 = vadd.f32 %v2309, %v2310
        %2481 = vadd.xlane.f32.xlu0 %v2480
        %v2482 = vpop.xlane.xlu0 %2481
        %v2483 = vadd.f32 %v2311, %v2312
        %2484 = vadd.xlane.f32.xlu0 %v2483
        %v2485 = vpop.xlane.xlu0 %2484
        %v2486 = vadd.f32 %v2313, %v2314
        %2487 = vadd.xlane.f32.xlu0 %v2486
        %v2488 = vpop.xlane.xlu0 %2487
        %v2489 = vadd.f32 %v2315, %v2316
        %2490 = vadd.xlane.f32.xlu0 %v2489
        %v2491 = vpop.xlane.xlu0 %2490
        %v2492 = vadd.f32 %v2317, %v2318
        %2493 = vadd.xlane.f32.xlu0 %v2492
        %v2494 = vpop.xlane.xlu0 %2493
        %v2495 = vadd.f32 %v2319, %v2320
        %2496 = vadd.xlane.f32.xlu0 %v2495
        %v2497 = vpop.xlane.xlu0 %2496
        %v2498 = vadd.f32 %v2321, %v2322
        %2499 = vadd.xlane.f32.xlu0 %v2498
        %v2500 = vpop.xlane.xlu0 %2499
        %v2501 = vadd.f32 %v2323, %v2324
        %2502 = vadd.xlane.f32.xlu0 %v2501
        %v2503 = vpop.xlane.xlu0 %2502
        %v2504 = vadd.f32 %v2325, %v2326
        %2505 = vadd.xlane.f32.xlu0 %v2504
        %v2506 = vpop.xlane.xlu0 %2505
        %v2507 = vadd.f32 %v2327, %v2328
        %2508 = vadd.xlane.f32.xlu0 %v2507
        %v2509 = vpop.xlane.xlu0 %2508
        %v2510 = vadd.f32 %v2329, %v2330
        %2511 = vadd.xlane.f32.xlu0 %v2510
        %v2512 = vpop.xlane.xlu0 %2511
        %v2513 = vadd.f32 %v2331, %v2332
        %2514 = vadd.xlane.f32.xlu0 %v2513
        %v2515 = vpop.xlane.xlu0 %2514
        %v2516 = vadd.f32 %v2333, %v2334
        %2517 = vadd.xlane.f32.xlu0 %v2516
        %v2518 = vpop.xlane.xlu0 %2517
        %v2519 = vadd.f32 %v2335, %v2336
        %2520 = vadd.xlane.f32.xlu0 %v2519
        %v2521 = vpop.xlane.xlu0 %2520
        %v2522 = vadd.f32 %v2337, %v2338
        %2523 = vadd.xlane.f32.xlu0 %v2522
        %v2524 = vpop.xlane.xlu0 %2523
        %v2525 = vadd.f32 %v2339, %v2340
        %2526 = vadd.xlane.f32.xlu0 %v2525
        %v2527 = vpop.xlane.xlu0 %2526
        %v2528 = vadd.f32 %v2341, %v2342
        %2529 = vadd.xlane.f32.xlu0 %v2528
        %v2530 = vpop.xlane.xlu0 %2529
        %v2531 = vadd.f32 %v2343, %v2344
        %2532 = vadd.xlane.f32.xlu0 %v2531
        %v2533 = vpop.xlane.xlu0 %2532
        %v2534 = vadd.f32 %v2345, %v2346
        %2535 = vadd.xlane.f32.xlu0 %v2534
        %v2536 = vpop.xlane.xlu0 %2535
        %v2537 = vadd.f32 %v2347, %v2348
        %2538 = vadd.xlane.f32.xlu0 %v2537
        %v2539 = vpop.xlane.xlu0 %2538
        %v2540 = vadd.f32 %v2349, %v2350
        %2541 = vadd.xlane.f32.xlu0 %v2540
        %v2542 = vpop.xlane.xlu0 %2541
        %s2543 = sld [smem:[#allocation2]]
        %v2544 = vstv %s2543
        %v2545 = vadd.f32 %v2353, %v2544
        %v2546 = vadd.f32 %v2356, %v2544
        %v2547 = vadd.f32 %v2359, %v2544
        %v2548 = vadd.f32 %v2362, %v2544
        %v2549 = vadd.f32 %v2365, %v2544
        %v2550 = vadd.f32 %v2368, %v2544
        %v2551 = vadd.f32 %v2371, %v2544
        %v2552 = vadd.f32 %v2374, %v2544
        %v2553 = vadd.f32 %v2377, %v2544
        %v2554 = vadd.f32 %v2380, %v2544
        %v2555 = vadd.f32 %v2383, %v2544
        %v2556 = vadd.f32 %v2386, %v2544
        %v2557 = vadd.f32 %v2389, %v2544
        %v2558 = vadd.f32 %v2392, %v2544
        %v2559 = vadd.f32 %v2395, %v2544
        %v2560 = vadd.f32 %v2398, %v2544
        %v2561 = vadd.f32 %v2401, %v2544
        %v2562 = vadd.f32 %v2404, %v2544
        %v2563 = vadd.f32 %v2407, %v2544
        %v2564 = vadd.f32 %v2410, %v2544
        %v2565 = vadd.f32 %v2413, %v2544
        %v2566 = vadd.f32 %v2416, %v2544
        %v2567 = vadd.f32 %v2419, %v2544
        %v2568 = vadd.f32 %v2422, %v2544
        %v2569 = vadd.f32 %v2425, %v2544
        %v2570 = vadd.f32 %v2428, %v2544
        %v2571 = vadd.f32 %v2431, %v2544
        %v2572 = vadd.f32 %v2434, %v2544
        %v2573 = vadd.f32 %v2437, %v2544
        %v2574 = vadd.f32 %v2440, %v2544
        %v2575 = vadd.f32 %v2443, %v2544
        %v2576 = vadd.f32 %v2446, %v2544
        %v2577 = vadd.f32 %v2449, %v2544
        %v2578 = vadd.f32 %v2452, %v2544
        %v2579 = vadd.f32 %v2455, %v2544
        %v2580 = vadd.f32 %v2458, %v2544
        %v2581 = vadd.f32 %v2461, %v2544
        %v2582 = vadd.f32 %v2464, %v2544
        %v2583 = vadd.f32 %v2467, %v2544
        %v2584 = vadd.f32 %v2470, %v2544
        %v2585 = vadd.f32 %v2473, %v2544
        %v2586 = vadd.f32 %v2476, %v2544
        %v2587 = vadd.f32 %v2479, %v2544
        %v2588 = vadd.f32 %v2482, %v2544
        %v2589 = vadd.f32 %v2485, %v2544
        %v2590 = vadd.f32 %v2488, %v2544
        %v2591 = vadd.f32 %v2491, %v2544
        %v2592 = vadd.f32 %v2494, %v2544
        %v2593 = vadd.f32 %v2497, %v2544
        %v2594 = vadd.f32 %v2500, %v2544
        %v2595 = vadd.f32 %v2503, %v2544
        %v2596 = vadd.f32 %v2506, %v2544
        %v2597 = vadd.f32 %v2509, %v2544
        %v2598 = vadd.f32 %v2512, %v2544
        %v2599 = vadd.f32 %v2515, %v2544
        %v2600 = vadd.f32 %v2518, %v2544
        %v2601 = vadd.f32 %v2521, %v2544
        %v2602 = vadd.f32 %v2524, %v2544
        %v2603 = vadd.f32 %v2527, %v2544
        %v2604 = vadd.f32 %v2530, %v2544
        %v2605 = vadd.f32 %v2533, %v2544
        %v2606 = vadd.f32 %v2536, %v2544
        %v2607 = vadd.f32 %v2539, %v2544
        %v2608 = vadd.f32 %v2542, %v2544
        %v2609 = vand.u32 2147483647, %v2545
        %v2610 = vand.u32 2147483647, %v2546
        %v2611 = vand.u32 2147483647, %v2547
        %v2612 = vand.u32 2147483647, %v2548
        %v2613 = vand.u32 2147483647, %v2549
        %v2614 = vand.u32 2147483647, %v2550
        %v2615 = vand.u32 2147483647, %v2551
        %v2616 = vand.u32 2147483647, %v2552
        %v2617 = vand.u32 2147483647, %v2553
        %v2618 = vand.u32 2147483647, %v2554
        %v2619 = vand.u32 2147483647, %v2555
        %v2620 = vand.u32 2147483647, %v2556
        %v2621 = vand.u32 2147483647, %v2557
        %v2622 = vand.u32 2147483647, %v2558
        %v2623 = vand.u32 2147483647, %v2559
        %v2624 = vand.u32 2147483647, %v2560
        %v2625 = vand.u32 2147483647, %v2561
        %v2626 = vand.u32 2147483647, %v2562
        %v2627 = vand.u32 2147483647, %v2563
        %v2628 = vand.u32 2147483647, %v2564
        %v2629 = vand.u32 2147483647, %v2565
        %v2630 = vand.u32 2147483647, %v2566
        %v2631 = vand.u32 2147483647, %v2567
        %v2632 = vand.u32 2147483647, %v2568
        %v2633 = vand.u32 2147483647, %v2569
        %v2634 = vand.u32 2147483647, %v2570
        %v2635 = vand.u32 2147483647, %v2571
        %v2636 = vand.u32 2147483647, %v2572
        %v2637 = vand.u32 2147483647, %v2573
        %v2638 = vand.u32 2147483647, %v2574
        %v2639 = vand.u32 2147483647, %v2575
        %v2640 = vand.u32 2147483647, %v2576
        %v2641 = vand.u32 2147483647, %v2577
        %v2642 = vand.u32 2147483647, %v2578
        %v2643 = vand.u32 2147483647, %v2579
        %v2644 = vand.u32 2147483647, %v2580
        %v2645 = vand.u32 2147483647, %v2581
        %v2646 = vand.u32 2147483647, %v2582
        %v2647 = vand.u32 2147483647, %v2583
        %v2648 = vand.u32 2147483647, %v2584
        %v2649 = vand.u32 2147483647, %v2585
        %v2650 = vand.u32 2147483647, %v2586
        %v2651 = vand.u32 2147483647, %v2587
        %v2652 = vand.u32 2147483647, %v2588
        %v2653 = vand.u32 2147483647, %v2589
        %v2654 = vand.u32 2147483647, %v2590
        %v2655 = vand.u32 2147483647, %v2591
        %v2656 = vand.u32 2147483647, %v2592
        %v2657 = vand.u32 2147483647, %v2593
        %v2658 = vand.u32 2147483647, %v2594
        %v2659 = vand.u32 2147483647, %v2595
        %v2660 = vand.u32 2147483647, %v2596
        %v2661 = vand.u32 2147483647, %v2597
        %v2662 = vand.u32 2147483647, %v2598
        %v2663 = vand.u32 2147483647, %v2599
        %v2664 = vand.u32 2147483647, %v2600
        %v2665 = vand.u32 2147483647, %v2601
        %v2666 = vand.u32 2147483647, %v2602
        %v2667 = vand.u32 2147483647, %v2603
        %v2668 = vand.u32 2147483647, %v2604
        %v2669 = vand.u32 2147483647, %v2605
        %v2670 = vand.u32 2147483647, %v2606
        %v2671 = vand.u32 2147483647, %v2607
        %v2672 = vand.u32 2147483647, %v2608
        %v2673 = vsub.f32 0.0, %v2609
        %v2674 = vsub.f32 0.0, %v2610
        %v2675 = vsub.f32 0.0, %v2611
        %v2676 = vsub.f32 0.0, %v2612
        %v2677 = vsub.f32 0.0, %v2613
        %v2678 = vsub.f32 0.0, %v2614
        %v2679 = vsub.f32 0.0, %v2615
        %v2680 = vsub.f32 0.0, %v2616
        %v2681 = vsub.f32 0.0, %v2617
        %v2682 = vsub.f32 0.0, %v2618
        %v2683 = vsub.f32 0.0, %v2619
        %v2684 = vsub.f32 0.0, %v2620
        %v2685 = vsub.f32 0.0, %v2621
        %v2686 = vsub.f32 0.0, %v2622
        %v2687 = vsub.f32 0.0, %v2623
        %v2688 = vsub.f32 0.0, %v2624
        %v2689 = vsub.f32 0.0, %v2625
        %v2690 = vsub.f32 0.0, %v2626
        %v2691 = vsub.f32 0.0, %v2627
        %v2692 = vsub.f32 0.0, %v2628
        %v2693 = vsub.f32 0.0, %v2629
        %v2694 = vsub.f32 0.0, %v2630
        %v2695 = vsub.f32 0.0, %v2631
        %v2696 = vsub.f32 0.0, %v2632
        %v2697 = vsub.f32 0.0, %v2633
        %v2698 = vsub.f32 0.0, %v2634
        %v2699 = vsub.f32 0.0, %v2635
        %v2700 = vsub.f32 0.0, %v2636
        %v2701 = vsub.f32 0.0, %v2637
        %v2702 = vsub.f32 0.0, %v2638
        %v2703 = vsub.f32 0.0, %v2639
        %v2704 = vsub.f32 0.0, %v2640
        %v2705 = vsub.f32 0.0, %v2641
        %v2706 = vsub.f32 0.0, %v2642
        %v2707 = vsub.f32 0.0, %v2643
        %v2708 = vsub.f32 0.0, %v2644
        %v2709 = vsub.f32 0.0, %v2645
        %v2710 = vsub.f32 0.0, %v2646
        %v2711 = vsub.f32 0.0, %v2647
        %v2712 = vsub.f32 0.0, %v2648
        %v2713 = vsub.f32 0.0, %v2649
        %v2714 = vsub.f32 0.0, %v2650
        %v2715 = vsub.f32 0.0, %v2651
        %v2716 = vsub.f32 0.0, %v2652
        %v2717 = vsub.f32 0.0, %v2653
        %v2718 = vsub.f32 0.0, %v2654
        %v2719 = vsub.f32 0.0, %v2655
        %v2720 = vsub.f32 0.0, %v2656
        %v2721 = vsub.f32 0.0, %v2657
        %v2722 = vsub.f32 0.0, %v2658
        %v2723 = vsub.f32 0.0, %v2659
        %v2724 = vsub.f32 0.0, %v2660
        %v2725 = vsub.f32 0.0, %v2661
        %v2726 = vsub.f32 0.0, %v2662
        %v2727 = vsub.f32 0.0, %v2663
        %v2728 = vsub.f32 0.0, %v2664
        %v2729 = vsub.f32 0.0, %v2665
        %v2730 = vsub.f32 0.0, %v2666
        %v2731 = vsub.f32 0.0, %v2667
        %v2732 = vsub.f32 0.0, %v2668
        %v2733 = vsub.f32 0.0, %v2669
        %v2734 = vsub.f32 0.0, %v2670
        %v2735 = vsub.f32 0.0, %v2671
        %v2736 = vsub.f32 0.0, %v2672
        %v2737 = vmul.f32 %v2673, 1.442695
        %v2738 = vpow.pop %v2737
        %v2739 = vmul.f32 %v2674, 1.442695
        %v2740 = vpow.pop %v2739
        %v2741 = vmul.f32 %v2675, 1.442695
        %v2742 = vpow.pop %v2741
        %v2743 = vmul.f32 %v2676, 1.442695
        %v2744 = vpow.pop %v2743
        %v2745 = vmul.f32 %v2677, 1.442695
        %v2746 = vpow.pop %v2745
        %v2747 = vmul.f32 %v2678, 1.442695
        %v2748 = vpow.pop %v2747
        %v2749 = vmul.f32 %v2679, 1.442695
        %v2750 = vpow.pop %v2749
        %v2751 = vmul.f32 %v2680, 1.442695
        %v2752 = vpow.pop %v2751
        %v2753 = vmul.f32 %v2681, 1.442695
        %v2754 = vpow.pop %v2753
        %v2755 = vmul.f32 %v2682, 1.442695
        %v2756 = vpow.pop %v2755
        %v2757 = vmul.f32 %v2683, 1.442695
        %v2758 = vpow.pop %v2757
        %v2759 = vmul.f32 %v2684, 1.442695
        %v2760 = vpow.pop %v2759
        %v2761 = vmul.f32 %v2685, 1.442695
        %v2762 = vpow.pop %v2761
        %v2763 = vmul.f32 %v2686, 1.442695
        %v2764 = vpow.pop %v2763
        %v2765 = vmul.f32 %v2687, 1.442695
        %v2766 = vpow.pop %v2765
        %v2767 = vmul.f32 %v2688, 1.442695
        %v2768 = vpow.pop %v2767
        %v2769 = vmul.f32 %v2689, 1.442695
        %v2770 = vpow.pop %v2769
        %v2771 = vmul.f32 %v2690, 1.442695
        %v2772 = vpow.pop %v2771
        %v2773 = vmul.f32 %v2691, 1.442695
        %v2774 = vpow.pop %v2773
        %v2775 = vmul.f32 %v2692, 1.442695
        %v2776 = vpow.pop %v2775
        %v2777 = vmul.f32 %v2693, 1.442695
        %v2778 = vpow.pop %v2777
        %v2779 = vmul.f32 %v2694, 1.442695
        %v2780 = vpow.pop %v2779
        %v2781 = vmul.f32 %v2695, 1.442695
        %v2782 = vpow.pop %v2781
        %v2783 = vmul.f32 %v2696, 1.442695
        %v2784 = vpow.pop %v2783
        %v2785 = vmul.f32 %v2697, 1.442695
        %v2786 = vpow.pop %v2785
        %v2787 = vmul.f32 %v2698, 1.442695
        %v2788 = vpow.pop %v2787
        %v2789 = vmul.f32 %v2699, 1.442695
        %v2790 = vpow.pop %v2789
        %v2791 = vmul.f32 %v2700, 1.442695
        %v2792 = vpow.pop %v2791
        %v2793 = vmul.f32 %v2701, 1.442695
        %v2794 = vpow.pop %v2793
        %v2795 = vmul.f32 %v2702, 1.442695
        %v2796 = vpow.pop %v2795
        %v2797 = vmul.f32 %v2703, 1.442695
        %v2798 = vpow.pop %v2797
        %v2799 = vmul.f32 %v2704, 1.442695
        %v2800 = vpow.pop %v2799
        %v2801 = vmul.f32 %v2705, 1.442695
        %v2802 = vpow.pop %v2801
        %v2803 = vmul.f32 %v2706, 1.442695
        %v2804 = vpow.pop %v2803
        %v2805 = vmul.f32 %v2707, 1.442695
        %v2806 = vpow.pop %v2805
        %v2807 = vmul.f32 %v2708, 1.442695
        %v2808 = vpow.pop %v2807
        %v2809 = vmul.f32 %v2709, 1.442695
        %v2810 = vpow.pop %v2809
        %v2811 = vmul.f32 %v2710, 1.442695
        %v2812 = vpow.pop %v2811
        %v2813 = vmul.f32 %v2711, 1.442695
        %v2814 = vpow.pop %v2813
        %v2815 = vmul.f32 %v2712, 1.442695
        %v2816 = vpow.pop %v2815
        %v2817 = vmul.f32 %v2713, 1.442695
        %v2818 = vpow.pop %v2817
        %v2819 = vmul.f32 %v2714, 1.442695
        %v2820 = vpow.pop %v2819
        %v2821 = vmul.f32 %v2715, 1.442695
        %v2822 = vpow.pop %v2821
        %v2823 = vmul.f32 %v2716, 1.442695
        %v2824 = vpow.pop %v2823
        %v2825 = vmul.f32 %v2717, 1.442695
        %v2826 = vpow.pop %v2825
        %v2827 = vmul.f32 %v2718, 1.442695
        %v2828 = vpow.pop %v2827
        %v2829 = vmul.f32 %v2719, 1.442695
        %v2830 = vpow.pop %v2829
        %v2831 = vmul.f32 %v2720, 1.442695
        %v2832 = vpow.pop %v2831
        %v2833 = vmul.f32 %v2721, 1.442695
        %v2834 = vpow.pop %v2833
        %v2835 = vmul.f32 %v2722, 1.442695
        %v2836 = vpow.pop %v2835
        %v2837 = vmul.f32 %v2723, 1.442695
        %v2838 = vpow.pop %v2837
        %v2839 = vmul.f32 %v2724, 1.442695
        %v2840 = vpow.pop %v2839
        %v2841 = vmul.f32 %v2725, 1.442695
        %v2842 = vpow.pop %v2841
        %v2843 = vmul.f32 %v2726, 1.442695
        %v2844 = vpow.pop %v2843
        %v2845 = vmul.f32 %v2727, 1.442695
        %v2846 = vpow.pop %v2845
        %v2847 = vmul.f32 %v2728, 1.442695
        %v2848 = vpow.pop %v2847
        %v2849 = vmul.f32 %v2729, 1.442695
        %v2850 = vpow.pop %v2849
        %v2851 = vmul.f32 %v2730, 1.442695
        %v2852 = vpow.pop %v2851
        %v2853 = vmul.f32 %v2731, 1.442695
        %v2854 = vpow.pop %v2853
        %v2855 = vmul.f32 %v2732, 1.442695
        %v2856 = vpow.pop %v2855
        %v2857 = vmul.f32 %v2733, 1.442695
        %v2858 = vpow.pop %v2857
        %v2859 = vmul.f32 %v2734, 1.442695
        %v2860 = vpow.pop %v2859
        %v2861 = vmul.f32 %v2735, 1.442695
        %v2862 = vpow.pop %v2861
        %v2863 = vmul.f32 %v2736, 1.442695
        %v2864 = vpow.pop %v2863
        %v2865 = vadd.f32 %v2738, 1.0
        %v2866 = vadd.f32 %v2740, 1.0
        %v2867 = vadd.f32 %v2742, 1.0
        %v2868 = vadd.f32 %v2744, 1.0
        %v2869 = vadd.f32 %v2746, 1.0
        %v2870 = vadd.f32 %v2748, 1.0
        %v2871 = vadd.f32 %v2750, 1.0
        %v2872 = vadd.f32 %v2752, 1.0
        %v2873 = vadd.f32 %v2754, 1.0
        %v2874 = vadd.f32 %v2756, 1.0
        %v2875 = vadd.f32 %v2758, 1.0
        %v2876 = vadd.f32 %v2760, 1.0
        %v2877 = vadd.f32 %v2762, 1.0
        %v2878 = vadd.f32 %v2764, 1.0
        %v2879 = vadd.f32 %v2766, 1.0
        %v2880 = vadd.f32 %v2768, 1.0
        %v2881 = vadd.f32 %v2770, 1.0
        %v2882 = vadd.f32 %v2772, 1.0
        %v2883 = vadd.f32 %v2774, 1.0
        %v2884 = vadd.f32 %v2776, 1.0
        %v2885 = vadd.f32 %v2778, 1.0
        %v2886 = vadd.f32 %v2780, 1.0
        %v2887 = vadd.f32 %v2782, 1.0
        %v2888 = vadd.f32 %v2784, 1.0
        %v2889 = vadd.f32 %v2786, 1.0
        %v2890 = vadd.f32 %v2788, 1.0
        %v2891 = vadd.f32 %v2790, 1.0
        %v2892 = vadd.f32 %v2792, 1.0
        %v2893 = vadd.f32 %v2794, 1.0
        %v2894 = vadd.f32 %v2796, 1.0
        %v2895 = vadd.f32 %v2798, 1.0
        %v2896 = vadd.f32 %v2800, 1.0
        %v2897 = vadd.f32 %v2802, 1.0
        %v2898 = vadd.f32 %v2804, 1.0
        %v2899 = vadd.f32 %v2806, 1.0
        %v2900 = vadd.f32 %v2808, 1.0
        %v2901 = vadd.f32 %v2810, 1.0
        %v2902 = vadd.f32 %v2812, 1.0
        %v2903 = vadd.f32 %v2814, 1.0
        %v2904 = vadd.f32 %v2816, 1.0
        %v2905 = vadd.f32 %v2818, 1.0
        %v2906 = vadd.f32 %v2820, 1.0
        %v2907 = vadd.f32 %v2822, 1.0
        %v2908 = vadd.f32 %v2824, 1.0
        %v2909 = vadd.f32 %v2826, 1.0
        %v2910 = vadd.f32 %v2828, 1.0
        %v2911 = vadd.f32 %v2830, 1.0
        %v2912 = vadd.f32 %v2832, 1.0
        %v2913 = vadd.f32 %v2834, 1.0
        %v2914 = vadd.f32 %v2836, 1.0
        %v2915 = vadd.f32 %v2838, 1.0
        %v2916 = vadd.f32 %v2840, 1.0
        %v2917 = vadd.f32 %v2842, 1.0
        %v2918 = vadd.f32 %v2844, 1.0
        %v2919 = vadd.f32 %v2846, 1.0
        %v2920 = vadd.f32 %v2848, 1.0
        %v2921 = vadd.f32 %v2850, 1.0
        %v2922 = vadd.f32 %v2852, 1.0
        %v2923 = vadd.f32 %v2854, 1.0
        %v2924 = vadd.f32 %v2856, 1.0
        %v2925 = vadd.f32 %v2858, 1.0
        %v2926 = vadd.f32 %v2860, 1.0
        %v2927 = vadd.f32 %v2862, 1.0
        %v2928 = vadd.f32 %v2864, 1.0
        %v2929 = vrcp.pop %v2865
        %v2930 = vrcp.pop %v2866
        %v2931 = vrcp.pop %v2867
        %v2932 = vrcp.pop %v2868
        %v2933 = vrcp.pop %v2869
        %v2934 = vrcp.pop %v2870
        %v2935 = vrcp.pop %v2871
        %v2936 = vrcp.pop %v2872
        %v2937 = vrcp.pop %v2873
        %v2938 = vrcp.pop %v2874
        %v2939 = vrcp.pop %v2875
        %v2940 = vrcp.pop %v2876
        %v2941 = vrcp.pop %v2877
        %v2942 = vrcp.pop %v2878
        %v2943 = vrcp.pop %v2879
        %v2944 = vrcp.pop %v2880
        %v2945 = vrcp.pop %v2881
        %v2946 = vrcp.pop %v2882
        %v2947 = vrcp.pop %v2883
        %v2948 = vrcp.pop %v2884
        %v2949 = vrcp.pop %v2885
        %v2950 = vrcp.pop %v2886
        %v2951 = vrcp.pop %v2887
        %v2952 = vrcp.pop %v2888
        %v2953 = vrcp.pop %v2889
        %v2954 = vrcp.pop %v2890
        %v2955 = vrcp.pop %v2891
        %v2956 = vrcp.pop %v2892
        %v2957 = vrcp.pop %v2893
        %v2958 = vrcp.pop %v2894
        %v2959 = vrcp.pop %v2895
        %v2960 = vrcp.pop %v2896
        %v2961 = vrcp.pop %v2897
        %v2962 = vrcp.pop %v2898
        %v2963 = vrcp.pop %v2899
        %v2964 = vrcp.pop %v2900
        %v2965 = vrcp.pop %v2901
        %v2966 = vrcp.pop %v2902
        %v2967 = vrcp.pop %v2903
        %v2968 = vrcp.pop %v2904
        %v2969 = vrcp.pop %v2905
        %v2970 = vrcp.pop %v2906
        %v2971 = vrcp.pop %v2907
        %v2972 = vrcp.pop %v2908
        %v2973 = vrcp.pop %v2909
        %v2974 = vrcp.pop %v2910
        %v2975 = vrcp.pop %v2911
        %v2976 = vrcp.pop %v2912
        %v2977 = vrcp.pop %v2913
        %v2978 = vrcp.pop %v2914
        %v2979 = vrcp.pop %v2915
        %v2980 = vrcp.pop %v2916
        %v2981 = vrcp.pop %v2917
        %v2982 = vrcp.pop %v2918
        %v2983 = vrcp.pop %v2919
        %v2984 = vrcp.pop %v2920
        %v2985 = vrcp.pop %v2921
        %v2986 = vrcp.pop %v2922
        %v2987 = vrcp.pop %v2923
        %v2988 = vrcp.pop %v2924
        %v2989 = vrcp.pop %v2925
        %v2990 = vrcp.pop %v2926
        %v2991 = vrcp.pop %v2927
        %v2992 = vrcp.pop %v2928
        %vm2993 = vcmp.ge.f32.partialorder %v2545, 0.0
        %vm2994 = vcmp.ge.f32.partialorder %v2546, 0.0
        %vm2995 = vcmp.ge.f32.partialorder %v2547, 0.0
        %vm2996 = vcmp.ge.f32.partialorder %v2548, 0.0
        %vm2997 = vcmp.ge.f32.partialorder %v2549, 0.0
        %vm2998 = vcmp.ge.f32.partialorder %v2550, 0.0
        %vm2999 = vcmp.ge.f32.partialorder %v2551, 0.0
        %vm3000 = vcmp.ge.f32.partialorder %v2552, 0.0
        %vm3001 = vcmp.ge.f32.partialorder %v2553, 0.0
        %vm3002 = vcmp.ge.f32.partialorder %v2554, 0.0
        %vm3003 = vcmp.ge.f32.partialorder %v2555, 0.0
        %vm3004 = vcmp.ge.f32.partialorder %v2556, 0.0
        %vm3005 = vcmp.ge.f32.partialorder %v2557, 0.0
        %vm3006 = vcmp.ge.f32.partialorder %v2558, 0.0
        %vm3007 = vcmp.ge.f32.partialorder %v2559, 0.0
        %vm3008 = vcmp.ge.f32.partialorder %v2560, 0.0
        %vm3009 = vcmp.ge.f32.partialorder %v2561, 0.0
        %vm3010 = vcmp.ge.f32.partialorder %v2562, 0.0
        %vm3011 = vcmp.ge.f32.partialorder %v2563, 0.0
        %vm3012 = vcmp.ge.f32.partialorder %v2564, 0.0
        %vm3013 = vcmp.ge.f32.partialorder %v2565, 0.0
        %vm3014 = vcmp.ge.f32.partialorder %v2566, 0.0
        %vm3015 = vcmp.ge.f32.partialorder %v2567, 0.0
        %vm3016 = vcmp.ge.f32.partialorder %v2568, 0.0
        %vm3017 = vcmp.ge.f32.partialorder %v2569, 0.0
        %vm3018 = vcmp.ge.f32.partialorder %v2570, 0.0
        %vm3019 = vcmp.ge.f32.partialorder %v2571, 0.0
        %vm3020 = vcmp.ge.f32.partialorder %v2572, 0.0
        %vm3021 = vcmp.ge.f32.partialorder %v2573, 0.0
        %vm3022 = vcmp.ge.f32.partialorder %v2574, 0.0
        %vm3023 = vcmp.ge.f32.partialorder %v2575, 0.0
        %vm3024 = vcmp.ge.f32.partialorder %v2576, 0.0
        %vm3025 = vcmp.ge.f32.partialorder %v2577, 0.0
        %vm3026 = vcmp.ge.f32.partialorder %v2578, 0.0
        %vm3027 = vcmp.ge.f32.partialorder %v2579, 0.0
        %vm3028 = vcmp.ge.f32.partialorder %v2580, 0.0
        %vm3029 = vcmp.ge.f32.partialorder %v2581, 0.0
        %vm3030 = vcmp.ge.f32.partialorder %v2582, 0.0
        %vm3031 = vcmp.ge.f32.partialorder %v2583, 0.0
        %vm3032 = vcmp.ge.f32.partialorder %v2584, 0.0
        %vm3033 = vcmp.ge.f32.partialorder %v2585, 0.0
        %vm3034 = vcmp.ge.f32.partialorder %v2586, 0.0
        %vm3035 = vcmp.ge.f32.partialorder %v2587, 0.0
        %vm3036 = vcmp.ge.f32.partialorder %v2588, 0.0
        %vm3037 = vcmp.ge.f32.partialorder %v2589, 0.0
        %vm3038 = vcmp.ge.f32.partialorder %v2590, 0.0
        %vm3039 = vcmp.ge.f32.partialorder %v2591, 0.0
        %vm3040 = vcmp.ge.f32.partialorder %v2592, 0.0
        %vm3041 = vcmp.ge.f32.partialorder %v2593, 0.0
        %vm3042 = vcmp.ge.f32.partialorder %v2594, 0.0
        %vm3043 = vcmp.ge.f32.partialorder %v2595, 0.0
        %vm3044 = vcmp.ge.f32.partialorder %v2596, 0.0
        %vm3045 = vcmp.ge.f32.partialorder %v2597, 0.0
        %vm3046 = vcmp.ge.f32.partialorder %v2598, 0.0
        %vm3047 = vcmp.ge.f32.partialorder %v2599, 0.0
        %vm3048 = vcmp.ge.f32.partialorder %v2600, 0.0
        %vm3049 = vcmp.ge.f32.partialorder %v2601, 0.0
        %vm3050 = vcmp.ge.f32.partialorder %v2602, 0.0
        %vm3051 = vcmp.ge.f32.partialorder %v2603, 0.0
        %vm3052 = vcmp.ge.f32.partialorder %v2604, 0.0
        %vm3053 = vcmp.ge.f32.partialorder %v2605, 0.0
        %vm3054 = vcmp.ge.f32.partialorder %v2606, 0.0
        %vm3055 = vcmp.ge.f32.partialorder %v2607, 0.0
        %vm3056 = vcmp.ge.f32.partialorder %v2608, 0.0
        %v3057 = vmul.f32 %v2738, %v2929
        %v3058 = vmul.f32 %v2740, %v2930
        %v3059 = vmul.f32 %v2742, %v2931
        %v3060 = vmul.f32 %v2744, %v2932
        %v3061 = vmul.f32 %v2746, %v2933
        %v3062 = vmul.f32 %v2748, %v2934
        %v3063 = vmul.f32 %v2750, %v2935
        %v3064 = vmul.f32 %v2752, %v2936
        %v3065 = vmul.f32 %v2754, %v2937
        %v3066 = vmul.f32 %v2756, %v2938
        %v3067 = vmul.f32 %v2758, %v2939
        %v3068 = vmul.f32 %v2760, %v2940
        %v3069 = vmul.f32 %v2762, %v2941
        %v3070 = vmul.f32 %v2764, %v2942
        %v3071 = vmul.f32 %v2766, %v2943
        %v3072 = vmul.f32 %v2768, %v2944
        %v3073 = vmul.f32 %v2770, %v2945
        %v3074 = vmul.f32 %v2772, %v2946
        %v3075 = vmul.f32 %v2774, %v2947
        %v3076 = vmul.f32 %v2776, %v2948
        %v3077 = vmul.f32 %v2778, %v2949
        %v3078 = vmul.f32 %v2780, %v2950
        %v3079 = vmul.f32 %v2782, %v2951
        %v3080 = vmul.f32 %v2784, %v2952
        %v3081 = vmul.f32 %v2786, %v2953
        %v3082 = vmul.f32 %v2788, %v2954
        %v3083 = vmul.f32 %v2790, %v2955
        %v3084 = vmul.f32 %v2792, %v2956
        %v3085 = vmul.f32 %v2794, %v2957
        %v3086 = vmul.f32 %v2796, %v2958
        %v3087 = vmul.f32 %v2798, %v2959
        %v3088 = vmul.f32 %v2800, %v2960
        %v3089 = vmul.f32 %v2802, %v2961
        %v3090 = vmul.f32 %v2804, %v2962
        %v3091 = vmul.f32 %v2806, %v2963
        %v3092 = vmul.f32 %v2808, %v2964
        %v3093 = vmul.f32 %v2810, %v2965
        %v3094 = vmul.f32 %v2812, %v2966
        %v3095 = vmul.f32 %v2814, %v2967
        %v3096 = vmul.f32 %v2816, %v2968
        %v3097 = vmul.f32 %v2818, %v2969
        %v3098 = vmul.f32 %v2820, %v2970
        %v3099 = vmul.f32 %v2822, %v2971
        %v3100 = vmul.f32 %v2824, %v2972
        %v3101 = vmul.f32 %v2826, %v2973
        %v3102 = vmul.f32 %v2828, %v2974
        %v3103 = vmul.f32 %v2830, %v2975
        %v3104 = vmul.f32 %v2832, %v2976
        %v3105 = vmul.f32 %v2834, %v2977
        %v3106 = vmul.f32 %v2836, %v2978
        %v3107 = vmul.f32 %v2838, %v2979
        %v3108 = vmul.f32 %v2840, %v2980
        %v3109 = vmul.f32 %v2842, %v2981
        %v3110 = vmul.f32 %v2844, %v2982
        %v3111 = vmul.f32 %v2846, %v2983
        %v3112 = vmul.f32 %v2848, %v2984
        %v3113 = vmul.f32 %v2850, %v2985
        %v3114 = vmul.f32 %v2852, %v2986
        %v3115 = vmul.f32 %v2854, %v2987
        %v3116 = vmul.f32 %v2856, %v2988
        %v3117 = vmul.f32 %v2858, %v2989
        %v3118 = vmul.f32 %v2860, %v2990
        %v3119 = vmul.f32 %v2862, %v2991
        %v3120 = vmul.f32 %v2864, %v2992
        %v3121 = vsel %vm2993, %v2929, %v3057
        %v3122 = vsel %vm2994, %v2930, %v3058
        %v3123 = vsel %vm2995, %v2931, %v3059
        %v3124 = vsel %vm2996, %v2932, %v3060
        %v3125 = vsel %vm2997, %v2933, %v3061
        %v3126 = vsel %vm2998, %v2934, %v3062
        %v3127 = vsel %vm2999, %v2935, %v3063
        %v3128 = vsel %vm3000, %v2936, %v3064
        %v3129 = vsel %vm3001, %v2937, %v3065
        %v3130 = vsel %vm3002, %v2938, %v3066
        %v3131 = vsel %vm3003, %v2939, %v3067
        %v3132 = vsel %vm3004, %v2940, %v3068
        %v3133 = vsel %vm3005, %v2941, %v3069
        %v3134 = vsel %vm3006, %v2942, %v3070
        %v3135 = vsel %vm3007, %v2943, %v3071
        %v3136 = vsel %vm3008, %v2944, %v3072
        %v3137 = vsel %vm3009, %v2945, %v3073
        %v3138 = vsel %vm3010, %v2946, %v3074
        %v3139 = vsel %vm3011, %v2947, %v3075
        %v3140 = vsel %vm3012, %v2948, %v3076
        %v3141 = vsel %vm3013, %v2949, %v3077
        %v3142 = vsel %vm3014, %v2950, %v3078
        %v3143 = vsel %vm3015, %v2951, %v3079
        %v3144 = vsel %vm3016, %v2952, %v3080
        %v3145 = vsel %vm3017, %v2953, %v3081
        %v3146 = vsel %vm3018, %v2954, %v3082
        %v3147 = vsel %vm3019, %v2955, %v3083
        %v3148 = vsel %vm3020, %v2956, %v3084
        %v3149 = vsel %vm3021, %v2957, %v3085
        %v3150 = vsel %vm3022, %v2958, %v3086
        %v3151 = vsel %vm3023, %v2959, %v3087
        %v3152 = vsel %vm3024, %v2960, %v3088
        %v3153 = vsel %vm3025, %v2961, %v3089
        %v3154 = vsel %vm3026, %v2962, %v3090
        %v3155 = vsel %vm3027, %v2963, %v3091
        %v3156 = vsel %vm3028, %v2964, %v3092
        %v3157 = vsel %vm3029, %v2965, %v3093
        %v3158 = vsel %vm3030, %v2966, %v3094
        %v3159 = vsel %vm3031, %v2967, %v3095
        %v3160 = vsel %vm3032, %v2968, %v3096
        %v3161 = vsel %vm3033, %v2969, %v3097
        %v3162 = vsel %vm3034, %v2970, %v3098
        %v3163 = vsel %vm3035, %v2971, %v3099
        %v3164 = vsel %vm3036, %v2972, %v3100
        %v3165 = vsel %vm3037, %v2973, %v3101
        %v3166 = vsel %vm3038, %v2974, %v3102
        %v3167 = vsel %vm3039, %v2975, %v3103
        %v3168 = vsel %vm3040, %v2976, %v3104
        %v3169 = vsel %vm3041, %v2977, %v3105
        %v3170 = vsel %vm3042, %v2978, %v3106
        %v3171 = vsel %vm3043, %v2979, %v3107
        %v3172 = vsel %vm3044, %v2980, %v3108
        %v3173 = vsel %vm3045, %v2981, %v3109
        %v3174 = vsel %vm3046, %v2982, %v3110
        %v3175 = vsel %vm3047, %v2983, %v3111
        %v3176 = vsel %vm3048, %v2984, %v3112
        %v3177 = vsel %vm3049, %v2985, %v3113
        %v3178 = vsel %vm3050, %v2986, %v3114
        %v3179 = vsel %vm3051, %v2987, %v3115
        %v3180 = vsel %vm3052, %v2988, %v3116
        %v3181 = vsel %vm3053, %v2989, %v3117
        %v3182 = vsel %vm3054, %v2990, %v3118
        %v3183 = vsel %vm3055, %v2991, %v3119
        %v3184 = vsel %vm3056, %v2992, %v3120
        %3185 = vxpose.xlu0.b32.start [1/16] %v3121, 128
        %3186 = vxpose.xlu0.b32.cont [2/16] %v3122, 128
        %3187 = vxpose.xlu0.b32.cont [3/16] %v3123, 128
        %3188 = vxpose.xlu0.b32.cont [4/16] %v3124, 128
        %3189 = vxpose.xlu0.b32.cont [5/16] %v3125, 128
        %3190 = vxpose.xlu0.b32.cont [6/16] %v3126, 128
        %3191 = vxpose.xlu0.b32.cont [7/16] %v3127, 128
        %3192 = vxpose.xlu0.b32.cont [8/16] %v3128, 128
        %3193 = vxpose.xlu0.b32.cont [9/16] %v3129, 128
        %3194 = vxpose.xlu0.b32.cont [10/16] %v3130, 128
        %3195 = vxpose.xlu0.b32.cont [11/16] %v3131, 128
        %3196 = vxpose.xlu0.b32.cont [12/16] %v3132, 128
        %3197 = vxpose.xlu0.b32.cont [13/16] %v3133, 128
        %3198 = vxpose.xlu0.b32.cont [14/16] %v3134, 128
        %3199 = vxpose.xlu0.b32.cont [15/16] %v3135, 128
        %3200 = vxpose.xlu0.b32.end [16/16] %v3136, 128
        %v3201 = vpop.trf.xlu0
        %v3202 = vpop.trf.xlu0
        %v3203 = vpop.trf.xlu0
        %v3204 = vpop.trf.xlu0
        %v3205 = vpop.trf.xlu0
        %v3206 = vpop.trf.xlu0
        %v3207 = vpop.trf.xlu0
        %v3208 = vpop.trf.xlu0
        %v3209 = vpop.trf.xlu0
        %v3210 = vpop.trf.xlu0
        %v3211 = vpop.trf.xlu0
        %v3212 = vpop.trf.xlu0
        %v3213 = vpop.trf.xlu0
        %v3214 = vpop.trf.xlu0
        %v3215 = vpop.trf.xlu0
        %v3216 = vpop.trf.xlu0
        %3217 = vxpose.xlu0.b32.start [1/16] %v3137, 128
        %3218 = vxpose.xlu0.b32.cont [2/16] %v3138, 128
        %3219 = vxpose.xlu0.b32.cont [3/16] %v3139, 128
        %3220 = vxpose.xlu0.b32.cont [4/16] %v3140, 128
        %3221 = vxpose.xlu0.b32.cont [5/16] %v3141, 128
        %3222 = vxpose.xlu0.b32.cont [6/16] %v3142, 128
        %3223 = vxpose.xlu0.b32.cont [7/16] %v3143, 128
        %3224 = vxpose.xlu0.b32.cont [8/16] %v3144, 128
        %3225 = vxpose.xlu0.b32.cont [9/16] %v3145, 128
        %3226 = vxpose.xlu0.b32.cont [10/16] %v3146, 128
        %3227 = vxpose.xlu0.b32.cont [11/16] %v3147, 128
        %3228 = vxpose.xlu0.b32.cont [12/16] %v3148, 128
        %3229 = vxpose.xlu0.b32.cont [13/16] %v3149, 128
        %3230 = vxpose.xlu0.b32.cont [14/16] %v3150, 128
        %3231 = vxpose.xlu0.b32.cont [15/16] %v3151, 128
        %3232 = vxpose.xlu0.b32.end [16/16] %v3152, 128
        %v3233 = vpop.trf.xlu0
        %v3234 = vpop.trf.xlu0
        %v3235 = vpop.trf.xlu0
        %v3236 = vpop.trf.xlu0
        %v3237 = vpop.trf.xlu0
        %v3238 = vpop.trf.xlu0
        %v3239 = vpop.trf.xlu0
        %v3240 = vpop.trf.xlu0
        %v3241 = vpop.trf.xlu0
        %v3242 = vpop.trf.xlu0
        %v3243 = vpop.trf.xlu0
        %v3244 = vpop.trf.xlu0
        %v3245 = vpop.trf.xlu0
        %v3246 = vpop.trf.xlu0
        %v3247 = vpop.trf.xlu0
        %v3248 = vpop.trf.xlu0
        %3249 = vxpose.xlu0.b32.start [1/16] %v3153, 128
        %3250 = vxpose.xlu0.b32.cont [2/16] %v3154, 128
        %3251 = vxpose.xlu0.b32.cont [3/16] %v3155, 128
        %3252 = vxpose.xlu0.b32.cont [4/16] %v3156, 128
        %3253 = vxpose.xlu0.b32.cont [5/16] %v3157, 128
        %3254 = vxpose.xlu0.b32.cont [6/16] %v3158, 128
        %3255 = vxpose.xlu0.b32.cont [7/16] %v3159, 128
        %3256 = vxpose.xlu0.b32.cont [8/16] %v3160, 128
        %3257 = vxpose.xlu0.b32.cont [9/16] %v3161, 128
        %3258 = vxpose.xlu0.b32.cont [10/16] %v3162, 128
        %3259 = vxpose.xlu0.b32.cont [11/16] %v3163, 128
        %3260 = vxpose.xlu0.b32.cont [12/16] %v3164, 128
        %3261 = vxpose.xlu0.b32.cont [13/16] %v3165, 128
        %3262 = vxpose.xlu0.b32.cont [14/16] %v3166, 128
        %3263 = vxpose.xlu0.b32.cont [15/16] %v3167, 128
        %3264 = vxpose.xlu0.b32.end [16/16] %v3168, 128
        %v3265 = vpop.trf.xlu0
        %v3266 = vpop.trf.xlu0
        %v3267 = vpop.trf.xlu0
        %v3268 = vpop.trf.xlu0
        %v3269 = vpop.trf.xlu0
        %v3270 = vpop.trf.xlu0
        %v3271 = vpop.trf.xlu0
        %v3272 = vpop.trf.xlu0
        %v3273 = vpop.trf.xlu0
        %v3274 = vpop.trf.xlu0
        %v3275 = vpop.trf.xlu0
        %v3276 = vpop.trf.xlu0
        %v3277 = vpop.trf.xlu0
        %v3278 = vpop.trf.xlu0
        %v3279 = vpop.trf.xlu0
        %v3280 = vpop.trf.xlu0
        %3281 = vxpose.xlu0.b32.start [1/16] %v3169, 128
        %3282 = vxpose.xlu0.b32.cont [2/16] %v3170, 128
        %3283 = vxpose.xlu0.b32.cont [3/16] %v3171, 128
        %3284 = vxpose.xlu0.b32.cont [4/16] %v3172, 128
        %3285 = vxpose.xlu0.b32.cont [5/16] %v3173, 128
        %3286 = vxpose.xlu0.b32.cont [6/16] %v3174, 128
        %3287 = vxpose.xlu0.b32.cont [7/16] %v3175, 128
        %3288 = vxpose.xlu0.b32.cont [8/16] %v3176, 128
        %3289 = vxpose.xlu0.b32.cont [9/16] %v3177, 128
        %3290 = vxpose.xlu0.b32.cont [10/16] %v3178, 128
        %3291 = vxpose.xlu0.b32.cont [11/16] %v3179, 128
        %3292 = vxpose.xlu0.b32.cont [12/16] %v3180, 128
        %3293 = vxpose.xlu0.b32.cont [13/16] %v3181, 128
        %3294 = vxpose.xlu0.b32.cont [14/16] %v3182, 128
        %3295 = vxpose.xlu0.b32.cont [15/16] %v3183, 128
        %3296 = vxpose.xlu0.b32.end [16/16] %v3184, 128
        %v3297 = vpop.trf.xlu0
        %v3298 = vpop.trf.xlu0
        %v3299 = vpop.trf.xlu0
        %v3300 = vpop.trf.xlu0
        %v3301 = vpop.trf.xlu0
        %v3302 = vpop.trf.xlu0
        %v3303 = vpop.trf.xlu0
        %v3304 = vpop.trf.xlu0
        %v3305 = vpop.trf.xlu0
        %v3306 = vpop.trf.xlu0
        %v3307 = vpop.trf.xlu0
        %v3308 = vpop.trf.xlu0
        %v3309 = vpop.trf.xlu0
        %v3310 = vpop.trf.xlu0
        %v3311 = vpop.trf.xlu0
        %v3312 = vpop.trf.xlu0
        %v3317 = vcombine.low %v3201, %v3233
        %v3318 = vcombine.low %v3265, %v3297
        %v3320 = vunpack.c.l.s4 1966171168
        %v3321 = vunpack.c.0.s8 %v3320
        %v3322 = vlaneseq
        %v3323 = vshrl.u32 %v3322, 7
        %v3324 = vsub.s32 %v3321, %v3323
        %v3325 = vrot.slane %v3317, %v3324
        %v3327 = vunpack.c.l.s4 1966171168
        %v3328 = vunpack.c.0.s8 %v3327
        %v3329 = vlaneseq
        %v3330 = vshrl.u32 %v3329, 7
        %v3331 = vsub.s32 %v3328, %v3330
        %v3332 = vrot.slane %v3318, %v3331
        %v3333 = vcombine.low %v3325, %v3332
        %v3335 = vunpack.c.l.s4 1966171168
        %v3336 = vunpack.c.0.s8 %v3335
        %v3337 = vlaneseq
        %v3338 = vshrl.u32 %v3337, 7
        %v3339 = vsub.s32 %v3336, %v3338
        %v3340 = vrot.slane %v3333, %v3339
        %v3342 = vlaneseq
        %vm3343 = vcmp.ge.s32.totalorder %v3342, 0
        %vm3344 = vcmp.lt.s32.totalorder %v3342, 512
        %vm3345 = vmand %vm3343, %vm3344
        %3346 = vst.msk [vmem:[%s327] sm:$0xf] %vm3345, %v3340
        %s3347 = sand.u32 %s186, 1
        %s3348 = scalar_lea.sflag [#allocation5], %s3347
        %s3349 = sand.u32 %s186, 1
        %s3350 = smul.addr %s3349, 4
        %s3351 = scalar_lea.vmem [#allocation9], %s3350
        // Predicated region
        $region61: #{tpu_custom_call.1} parent=47 // pred_check
          %p3352 = pneg %p196
        $region62: #{tpu_custom_call.1} parent=47 // pred_check_branch
          %3354 = sbr.rel (%p3352) target = $region64
        $region63: #{tpu_custom_call.1} parent=47 // pred_region
          %s3356 = ssub.s32 64, 64
          %3357 = vsyncadd %s3348, %s3356
          %s3358 = smul.addr %s26, 4
          %s3359 = smul.addr %s3358, 16
          %s3360 = scalar_lea.hbm %s7, %s3359
          %s3362 = sshll.u32 %s3351, 4
          %s3363 = int_to_ptr.vmem [resolvable:$true] %s3362
          %3365 = dma.vmem_to_hbm [thread:$0]  %s3363, 64, %s3360, %s3348
        $region64: #{tpu_custom_call.1} parent=47 // pred_fallthru
          _
      $region48: #{tpu_custom_call.1} parent=5 // pred_fallthru
        _
      %p3366 = scmp.le.s32.totalorder 2, %s21
      // Predicated region
      $region65: #{tpu_custom_call.1} parent=5 // pred_check
        %p3367 = pneg %p3366
      $region66: #{tpu_custom_call.1} parent=5 // pred_check_branch
        %3369 = sbr.rel (%p3367) target = $region68
      $region67: #{tpu_custom_call.1} parent=5 // pred_region
        %s3370 = ssub.s32 %s21, 2
        // Predicated region
        $region69: #{tpu_custom_call.1} parent=67 // pred_check
          %p3371 = pneg %p202
        $region70: #{tpu_custom_call.1} parent=67 // pred_check_branch
          %3373 = sbr.rel (%p3371) target = $region72
        $region71: #{tpu_custom_call.1} parent=67 // pred_region
          %s3374 = sand.u32 %s187, 1
          %s3375 = scalar_lea.sflag [#allocation5], %s3374
          %s3376 = sand.u32 %s187, 1
          %s3377 = smul.addr %s3376, 4
          %s3378 = scalar_lea.vmem [#allocation9], %s3377
          %3379 = dma.done %s3375, 64
        $region72: #{tpu_custom_call.1} parent=67 // pred_fallthru
          _
      $region68: #{tpu_custom_call.1} parent=5 // pred_fallthru
        _
    $region6: #{tpu_custom_call.1} parent=1 // loop_footer
      %s25 = sadd.s32 1, %s21
    $region7: #{tpu_custom_call.1} parent=1 // loop_footer_branch
      %20 = sbr.rel target = $region3
    $region8: #{tpu_custom_call.1} parent=1 // loop_exit
      _
    %3380 = vsyncpa [#allocation4], 1
    %s3381 = scalar_lea.sflag [#allocation4], 1
    %3382 = vsyncpa %s3381, 1
    %3383 = vsyncpa [#allocation7], 1
    %3384 = vsyncpa [#allocation5], 1
    %s3385 = scalar_lea.sflag [#allocation5], 1
    %3386 = vsyncpa %s3385, 1

</llo_original>
